<compile_context>
chip_gen: v6e
topology: v6e:2x2x1
jax: 0.10.0
libtpu: 0.0.40
codegen_flags: <defaults>
</compile_context>

<pallas_src>
import functools

import jax
import jax.numpy as jnp
from jax.experimental import pallas as pl
from jax.experimental.pallas import tpu as pltpu

NEG_SLOPE = 0.2
NEG_INF = -1e30     # mask value for non-edges
MAX_FLOOR = -1e29   # row-max clamp: fully-masked (zero in-degree) rows -> denom ~ 0


def _gat_kernel(feat_ref, elt_ref, er_ref, bias_ref, adjt_ref, out_ref,
                *, num_heads, out_feats):
    # feat_ref: (N, H*F)  bf16 projected features (all heads), grid-invariant
    # elt_ref:  (H, N)    f32 source-side attention scalar, grid-invariant
    # er_ref:   (TN, H)   f32 destination-side attention scalar for this dst tile
    # bias_ref: (1, H*F)  f32 output bias, grid-invariant
    # adjt_ref: (TN, N)   int8 adjacency, (dst, src) layout: !=0 iff edge u -> v
    # out_ref:  (TN, H*F) f32 lane-dense output slab for this dst tile
    H, F = num_heads, out_feats

    # One int8 -> f32 upcast of the adjacency tile, shared by every head.
    adj_mask = adjt_ref[...].astype(jnp.float32) > 0.0          # (TN, N)
    feat = feat_ref[...]                                         # (N, H*F) bf16
    bias = bias_ref[...]                                         # (1, H*F) f32

    # TODO(synk): for large H switch this static unroll to lax.fori_loop.
    for h in range(H):
        sl = slice(h * F, (h + 1) * F)

        # e[v, u] = leaky_relu(el[u] + er[v]); no transpose / lane reduction,
        # both scalars are precomputed in the right layout.
        e = er_ref[:, h:h + 1] + elt_ref[h:h + 1, :]             # (TN, N)
        e = jnp.maximum(e, NEG_SLOPE * e)                        # leaky_relu (slope < 1)
        e = jnp.where(adj_mask, e, NEG_INF)

        # edge-softmax over incoming edges (lane-axis reduce).  Masked entries
        # underflow to exactly 0 after exp; MAX_FLOOR keeps zero in-degree rows
        # at denom ~ 0 (output == bias for such rows).
        m = jnp.maximum(jnp.max(e, axis=-1, keepdims=True), MAX_FLOOR)
        p = jnp.exp(e - m)                                       # (TN, N)
        denom = jnp.maximum(jnp.sum(p, axis=-1, keepdims=True), 1e-12)
        inv = pl.reciprocal(denom, approx=True)                  # EUP slot (otherwise idle)
        inv = inv * (2.0 - denom * inv)                          # Newton step -> f32 accuracy

        # rst[v] = sum_u a[v, u] * feat_src[u]; bf16 MXU operands, f32 accumulation,
        # normalisation applied to the small (TN, F) result, not the (TN, N) matrix.
        out_h = jnp.dot(p.astype(jnp.bfloat16), feat[:, sl],
                        preferred_element_type=jnp.float32) * inv
        out_ref[:, sl] = out_h + bias[:, sl]


def _vmem_limit_bytes(n_pad, tn, hf):
    # resident (single-buffered): bf16 feat slab + el_t (sublane-padded) + bias
    resident = n_pad * hf * 2 + 8 * n_pad * 4 + 8 * hf * 4
    # streamed, double-buffered: int8 adj tile + er tile (lane-padded) + out tile
    streamed = 2 * (tn * n_pad + tn * 128 * 4 + tn * hf * 4)
    # e / p / mask temporaries
    temps = 4 * tn * n_pad * 4
    est = resident + streamed + temps
    # TODO(synk): for very large graphs (est > ~48 MiB) add a src-axis tile with an
    # online-softmax loop so intermediates are (TN, TS) instead of (TN, N).
    return min(max(2 * est, 32 * 1024 * 1024), 48 * 1024 * 1024)


def gat_conv(x, fc_w, attn_l, attn_r, bias, adj_t, *, block_dst=128):
    """GATConv forward (DGL semantics, module defaults).

    x:      (N, Din)   node features
    fc_w:   (H*F, Din) torch nn.Linear weight (out_features, in_features)
    attn_l: (1, H, F)  source-side attention vector
    attn_r: (1, H, F)  destination-side attention vector
    bias:   (H*F,)     output bias
    adj_t:  (N, N)     adjacency in (dst, src) layout: adj_t[v, u] != 0 iff edge
                       u -> v.  Build it once upstream; the per-call path does
                       no N^2 transpose.
    block_dst: destination-node tile (128 on v5e/v7x; 256 is worth trying on v6e).
    returns (N, H, F)
    """
    N, Din = x.shape
    _, H, F = attn_l.shape
    HF = H * F
    assert fc_w.shape == (HF, Din)
    assert adj_t.shape == (N, N)

    # ---- hoisted out of the grid: projection + attention scalars (plain XLA) ----
    feat = x @ jnp.transpose(fc_w)                               # (N, H*F), once per call
    feat3 = feat.reshape(N, H, F)
    el_t = jnp.transpose(jnp.sum(feat3 * attn_l, axis=-1))       # (H, N) src-side scalar
    er = jnp.sum(feat3 * attn_r, axis=-1)                        # (N, H) dst-side scalar
    feat_bf = feat.astype(jnp.bfloat16)                          # bf16 MXU operand, half HBM/VMEM
    adj_i8 = (adj_t != 0).astype(jnp.int8)                       # 4x smaller adjacency stream
    bias2 = bias.reshape(1, HF).astype(jnp.float32)

    # ---- pad dst/src dimension to a multiple of the dst tile (no tn=N fallback) ----
    tn = block_dst
    n_pad = ((N + tn - 1) // tn) * tn
    if n_pad != N:
        pad = n_pad - N
        feat_bf = jnp.pad(feat_bf, ((0, pad), (0, 0)))
        el_t = jnp.pad(el_t, ((0, 0), (0, pad)))
        er = jnp.pad(er, ((0, pad), (0, 0)))
        adj_i8 = jnp.pad(adj_i8, ((0, pad), (0, pad)))           # padded rows/cols: no edges
    grid = (n_pad // tn,)

    kernel = functools.partial(_gat_kernel, num_heads=H, out_feats=F)

    cost = pl.CostEstimate(
        flops=int(2 * n_pad * n_pad * HF + 6 * H * n_pad * n_pad),
        transcendentals=int(H * n_pad * n_pad),
        bytes_accessed=int(n_pad * n_pad              # int8 adjacency
                           + n_pad * HF * 2           # bf16 features
                           + n_pad * HF * 4           # f32 output
                           + 2 * n_pad * H * 4),      # el_t / er
    )

    out = pl.pallas_call(
        kernel,
        out_shape=jax.ShapeDtypeStruct((n_pad, HF), jnp.float32),
        grid_spec=pltpu.PrefetchScalarGridSpec(
            num_scalar_prefetch=0,
            grid=grid,
            in_specs=[
                # Grid-invariant inputs: fetched once, single-buffered.
                pl.BlockSpec((n_pad, HF), lambda j: (0, 0),
                             pipeline_mode=pl.Buffered(1)),
                pl.BlockSpec((H, n_pad), lambda j: (0, 0),
                             pipeline_mode=pl.Buffered(1)),
                # Per-dst-tile streams (double-buffered against compute).
                pl.BlockSpec((tn, H), lambda j: (j, 0)),
                pl.BlockSpec((1, HF), lambda j: (0, 0),
                             pipeline_mode=pl.Buffered(1)),
                pl.BlockSpec((tn, n_pad), lambda j: (j, 0)),
            ],
            out_specs=pl.BlockSpec((tn, HF), lambda j: (j, 0)),
        ),
        compiler_params=pltpu.CompilerParams(
            dimension_semantics=("parallel",),
            vmem_limit_bytes=_vmem_limit_bytes(n_pad, tn, HF)),
        cost_estimate=cost,
    )(feat_bf, el_t, er, bias2, adj_i8)

    return out[:N].reshape(N, H, F)


def gat_conv_reference(x, fc_w, attn_l, attn_r, bias, adj):
    """Pure-JAX f32 reference mirroring the DGL GATConv forward semantics.

    adj here is in the original (src, dst) layout: adj[u, v] = 1 iff edge u -> v.
    """
    _, H, F = attn_l.shape
    feat = (x @ fc_w.T).reshape(-1, H, F)                        # (N, H, F)
    el = jnp.sum(feat * attn_l, axis=-1)                         # (N, H)
    er = jnp.sum(feat * attn_r, axis=-1)                         # (N, H)
    e = el[:, None, :] + er[None, :, :]                          # (src u, dst v, H)
    e = jnp.where(e >= 0, e, NEG_SLOPE * e)
    mask = adj[:, :, None] > 0
    e = jnp.where(mask, e, NEG_INF)
    m = jnp.max(e, axis=0, keepdims=True)
    p = jnp.exp(e - m) * adj[:, :, None]
    a = p / jnp.sum(p, axis=0, keepdims=True)
    out = jnp.einsum('uvh,uhf->vhf', a, feat)                    # (N, H, F)
    return out + bias.reshape(1, H, F)


if __name__ == "__main__":
    # Small but lane-friendly shapes: H*F = 128 (lane-dense output slab),
    # N = 256 with a 128-row dst tile -> grid of 2 (both TCs busy on v7x).
    N = 256
    IN_FEATS = 64
    OUT_FEATS = 32
    NUM_HEADS = 4

    key = jax.random.PRNGKey(0)
    k_x, k_w, k_al, k_ar, k_adj = jax.random.split(key, 5)

    # Node features.
    x = jax.random.normal(k_x, (N, IN_FEATS), dtype=jnp.float32)

    # Parameters (deterministic synthetic init; xavier-normal-like std).
    gain = jnp.sqrt(2.0)  # calculate_gain('relu')
    std_fc = gain * jnp.sqrt(2.0 / (IN_FEATS + NUM_HEADS * OUT_FEATS))
    fc_w = std_fc * jax.random.normal(
        k_w, (NUM_HEADS * OUT_FEATS, IN_FEATS), dtype=jnp.float32)  # torch (out, in)
    std_attn = gain * jnp.sqrt(2.0 / (1 + NUM_HEADS * OUT_FEATS))
    attn_l = std_attn * jax.random.normal(
        k_al, (1, NUM_HEADS, OUT_FEATS), dtype=jnp.float32)
    attn_r = std_attn * jax.random.normal(
        k_ar, (1, NUM_HEADS, OUT_FEATS), dtype=jnp.float32)
    bias = jnp.zeros((NUM_HEADS * OUT_FEATS,), dtype=jnp.float32)   # torch init: 0

    # Dense adjacency mask adj[u, v] = 1 iff edge u -> v; add self-loops so no
    # node has zero in-degree (DGL would raise otherwise).  The kernel itself
    # guards zero in-degree rows (they produce bias, whereas the f32 reference
    # would produce NaN for them).
    adj = (jax.random.uniform(k_adj, (N, N)) < 0.05).astype(jnp.float32)
    adj = jnp.maximum(adj, jnp.eye(N, dtype=jnp.float32))
    # (dst, src) layout built ONCE outside the per-call path (static graph).
    adj_t = jnp.transpose(adj)

    # TODO(synk): feat_drop/attn_drop with nonzero rates, residual connection,
    # activation and get_attention=True are not implemented; module defaults
    # (0.0 / False / None / False) leave forward semantics unchanged.

    out = gat_conv(x, fc_w, attn_l, attn_r, bias, adj_t)
    out = jax.block_until_ready(out)

    ref = gat_conv_reference(x, fc_w, attn_l, attn_r, bias, adj)
    assert out.shape == (N, NUM_HEADS, OUT_FEATS)
    # bf16 MXU operands (f32 accumulation) -> slightly looser tolerance than pure f32.
    assert jnp.allclose(out, ref, atol=2e-2, rtol=2e-2), "mismatch vs reference"

    print("KERNEL_OK")
</pallas_src>

<mosaic_0001>
module attributes {stable_mosaic.version = 11 : i64} {
  func.func @_gat_kernel(%arg0: i32, %arg1: memref<256x128xbf16, #tpu.memory_space<vmem>>, %arg2: memref<4x256xf32, #tpu.memory_space<vmem>>, %arg3: memref<128x4xf32, #tpu.memory_space<vmem>>, %arg4: memref<1x128xf32, #tpu.memory_space<vmem>>, %arg5: memref<128x256xi8, #tpu.memory_space<vmem>>, %arg6: memref<128x128xf32, #tpu.memory_space<vmem>>) attributes {dimension_semantics = [#tpu.dimension_semantics<parallel>], iteration_bounds = array<i64: 2>, scalar_prefetch = 0 : i64, scratch_operands = 0 : i64, tpu.core_type = #tpu.core_type<tc>, window_params = [{pipeline_mode = #tpu.pipeline_mode<synchronous>, transform_indices = @transform_0, window_bounds = array<i64: 256, 128>}, {pipeline_mode = #tpu.pipeline_mode<synchronous>, transform_indices = @transform_1, window_bounds = array<i64: 4, 256>}, {transform_indices = @transform_2, window_bounds = array<i64: 128, 4>}, {pipeline_mode = #tpu.pipeline_mode<synchronous>, transform_indices = @transform_3, window_bounds = array<i64: 1, 128>}, {transform_indices = @transform_4, window_bounds = array<i64: 128, 256>}, {transform_indices = @transform_5, window_bounds = array<i64: 128, 128>}]} {
    %c0 = arith.constant 0 : index
    %c0_0 = arith.constant 0 : index
    %0 = vector.load %arg5[%c0, %c0_0] : memref<128x256xi8, #tpu.memory_space<vmem>>, vector<128x256xi8>
    %1 = arith.sitofp %0 : vector<128x256xi8> to vector<128x256xf32>
    %cst = arith.constant 0.000000e+00 : f32
    %2 = vector.broadcast %cst : f32 to vector<128x256xf32>
    %3 = arith.cmpf ogt, %1, %2 : vector<128x256xf32>
    %c0_1 = arith.constant 0 : index
    %c0_2 = arith.constant 0 : index
    %4 = vector.load %arg1[%c0_1, %c0_2] : memref<256x128xbf16, #tpu.memory_space<vmem>>, vector<256x128xbf16>
    %c0_3 = arith.constant 0 : index
    %c0_4 = arith.constant 0 : index
    %5 = vector.load %arg4[%c0_3, %c0_4] : memref<1x128xf32, #tpu.memory_space<vmem>>, vector<1x128xf32>
    %c0_5 = arith.constant 0 : index
    %c0_6 = arith.constant 0 : index
    %6 = vector.load %arg3[%c0_5, %c0_6] : memref<128x4xf32, #tpu.memory_space<vmem>>, vector<128x1xf32>
    %c0_7 = arith.constant 0 : index
    %c0_8 = arith.constant 0 : index
    %7 = vector.load %arg2[%c0_7, %c0_8] : memref<4x256xf32, #tpu.memory_space<vmem>>, vector<1x256xf32>
    %8 = vector.broadcast %6 : vector<128x1xf32> to vector<128x256xf32>
    %9 = vector.broadcast %7 : vector<1x256xf32> to vector<128x256xf32>
    %10 = arith.addf %8, %9 : vector<128x256xf32>
    %cst_9 = arith.constant 2.000000e-01 : f32
    %11 = vector.broadcast %cst_9 : f32 to vector<128x256xf32>
    %12 = arith.mulf %11, %10 : vector<128x256xf32>
    %13 = arith.maximumf %10, %12 : vector<128x256xf32>
    %cst_10 = arith.constant -1.000000e+30 : f32
    %14 = vector.broadcast %cst_10 : f32 to vector<128x256xf32>
    %15 = arith.select %3, %13, %14 : vector<128x256xi1>, vector<128x256xf32>
    %cst_11 = arith.constant dense<0xFF800000> : vector<128xf32>
    %16 = vector.multi_reduction <maximumf>, %15, %cst_11 [1] : vector<128x256xf32> to vector<128xf32>
    %17 = vector.shape_cast %16 : vector<128xf32> to vector<128x1xf32>
    %cst_12 = arith.constant -1.000000e+29 : f32
    %18 = vector.broadcast %cst_12 : f32 to vector<128x1xf32>
    %19 = arith.maximumf %17, %18 : vector<128x1xf32>
    %20 = vector.broadcast %19 : vector<128x1xf32> to vector<128x256xf32>
    %21 = arith.subf %15, %20 : vector<128x256xf32>
    %22 = math.exp %21 : vector<128x256xf32>
    %cst_13 = arith.constant dense<0.000000e+00> : vector<128xf32>
    %23 = vector.multi_reduction <add>, %22, %cst_13 [1] : vector<128x256xf32> to vector<128xf32>
    %24 = vector.shape_cast %23 : vector<128xf32> to vector<128x1xf32>
    %cst_14 = arith.constant 9.99999996E-13 : f32
    %25 = vector.broadcast %cst_14 : f32 to vector<128x1xf32>
    %26 = arith.maximumf %24, %25 : vector<128x1xf32>
    %27 = tpu.reciprocal %26 {approx = true} : vector<128x1xf32> -> vector<128x1xf32>
    %28 = arith.mulf %26, %27 : vector<128x1xf32>
    %cst_15 = arith.constant 2.000000e+00 : f32
    %29 = vector.broadcast %cst_15 : f32 to vector<128x1xf32>
    %30 = arith.subf %29, %28 : vector<128x1xf32>
    %31 = arith.mulf %27, %30 : vector<128x1xf32>
    %32 = arith.truncf %22 : vector<128x256xf32> to vector<128x256xbf16>
    %33 = vector.extract_strided_slice %4 {offsets = [0, 0], sizes = [256, 32], strides = [1, 1]} : vector<256x128xbf16> to vector<256x32xbf16>
    %cst_16 = arith.constant dense<0.000000e+00> : vector<128x32xf32>
    %34 = tpu.matmul %32, %33, %cst_16 {dimension_numbers = #tpu.dot_dimension_numbers<[1], [0], [0], [1], [0, 0, 1, 1], [], []>} : vector<128x256xbf16>, vector<256x32xbf16>, vector<128x32xf32> -> vector<128x32xf32>
    %35 = vector.broadcast %31 : vector<128x1xf32> to vector<128x32xf32>
    %36 = arith.mulf %34, %35 : vector<128x32xf32>
    %37 = vector.extract_strided_slice %5 {offsets = [0, 0], sizes = [1, 32], strides = [1, 1]} : vector<1x128xf32> to vector<1x32xf32>
    %38 = vector.broadcast %37 : vector<1x32xf32> to vector<128x32xf32>
    %39 = arith.addf %36, %38 : vector<128x32xf32>
    %c0_17 = arith.constant 0 : index
    %c0_18 = arith.constant 0 : index
    %40 = vector.load %arg6[%c0_17, %c0_18] : memref<128x128xf32, #tpu.memory_space<vmem>>, vector<128x32xf32>
    tpu.vector_store %arg6[%c0_17, %c0_18], %39 {strides = array<i32>} : memref<128x128xf32, #tpu.memory_space<vmem>>, vector<128x32xf32>,
    %c0_19 = arith.constant 0 : index
    %c1 = arith.constant 1 : index
    %41 = vector.load %arg3[%c0_19, %c1] : memref<128x4xf32, #tpu.memory_space<vmem>>, vector<128x1xf32>
    %c1_20 = arith.constant 1 : index
    %c0_21 = arith.constant 0 : index
    %42 = vector.load %arg2[%c1_20, %c0_21] : memref<4x256xf32, #tpu.memory_space<vmem>>, vector<1x256xf32>
    %43 = vector.broadcast %41 : vector<128x1xf32> to vector<128x256xf32>
    %44 = vector.broadcast %42 : vector<1x256xf32> to vector<128x256xf32>
    %45 = arith.addf %43, %44 : vector<128x256xf32>
    %cst_22 = arith.constant 2.000000e-01 : f32
    %46 = vector.broadcast %cst_22 : f32 to vector<128x256xf32>
    %47 = arith.mulf %46, %45 : vector<128x256xf32>
    %48 = arith.maximumf %45, %47 : vector<128x256xf32>
    %cst_23 = arith.constant -1.000000e+30 : f32
    %49 = vector.broadcast %cst_23 : f32 to vector<128x256xf32>
    %50 = arith.select %3, %48, %49 : vector<128x256xi1>, vector<128x256xf32>
    %cst_24 = arith.constant dense<0xFF800000> : vector<128xf32>
    %51 = vector.multi_reduction <maximumf>, %50, %cst_24 [1] : vector<128x256xf32> to vector<128xf32>
    %52 = vector.shape_cast %51 : vector<128xf32> to vector<128x1xf32>
    %cst_25 = arith.constant -1.000000e+29 : f32
    %53 = vector.broadcast %cst_25 : f32 to vector<128x1xf32>
    %54 = arith.maximumf %52, %53 : vector<128x1xf32>
    %55 = vector.broadcast %54 : vector<128x1xf32> to vector<128x256xf32>
    %56 = arith.subf %50, %55 : vector<128x256xf32>
    %57 = math.exp %56 : vector<128x256xf32>
    %cst_26 = arith.constant dense<0.000000e+00> : vector<128xf32>
    %58 = vector.multi_reduction <add>, %57, %cst_26 [1] : vector<128x256xf32> to vector<128xf32>
    %59 = vector.shape_cast %58 : vector<128xf32> to vector<128x1xf32>
    %cst_27 = arith.constant 9.99999996E-13 : f32
    %60 = vector.broadcast %cst_27 : f32 to vector<128x1xf32>
    %61 = arith.maximumf %59, %60 : vector<128x1xf32>
    %62 = tpu.reciprocal %61 {approx = true} : vector<128x1xf32> -> vector<128x1xf32>
    %63 = arith.mulf %61, %62 : vector<128x1xf32>
    %cst_28 = arith.constant 2.000000e+00 : f32
    %64 = vector.broadcast %cst_28 : f32 to vector<128x1xf32>
    %65 = arith.subf %64, %63 : vector<128x1xf32>
    %66 = arith.mulf %62, %65 : vector<128x1xf32>
    %67 = arith.truncf %57 : vector<128x256xf32> to vector<128x256xbf16>
    %68 = vector.extract_strided_slice %4 {offsets = [0, 32], sizes = [256, 32], strides = [1, 1]} : vector<256x128xbf16> to vector<256x32xbf16>
    %cst_29 = arith.constant dense<0.000000e+00> : vector<128x32xf32>
    %69 = tpu.matmul %67, %68, %cst_29 {dimension_numbers = #tpu.dot_dimension_numbers<[1], [0], [0], [1], [0, 0, 1, 1], [], []>} : vector<128x256xbf16>, vector<256x32xbf16>, vector<128x32xf32> -> vector<128x32xf32>
    %70 = vector.broadcast %66 : vector<128x1xf32> to vector<128x32xf32>
    %71 = arith.mulf %69, %70 : vector<128x32xf32>
    %72 = vector.extract_strided_slice %5 {offsets = [0, 32], sizes = [1, 32], strides = [1, 1]} : vector<1x128xf32> to vector<1x32xf32>
    %73 = vector.broadcast %72 : vector<1x32xf32> to vector<128x32xf32>
    %74 = arith.addf %71, %73 : vector<128x32xf32>
    %c0_30 = arith.constant 0 : index
    %c32 = arith.constant 32 : index
    %75 = vector.load %arg6[%c0_30, %c32] : memref<128x128xf32, #tpu.memory_space<vmem>>, vector<128x32xf32>
    tpu.vector_store %arg6[%c0_30, %c32], %74 {strides = array<i32>} : memref<128x128xf32, #tpu.memory_space<vmem>>, vector<128x32xf32>,
    %c0_31 = arith.constant 0 : index
    %c2 = arith.constant 2 : index
    %76 = vector.load %arg3[%c0_31, %c2] : memref<128x4xf32, #tpu.memory_space<vmem>>, vector<128x1xf32>
    %c2_32 = arith.constant 2 : index
    %c0_33 = arith.constant 0 : index
    %77 = vector.load %arg2[%c2_32, %c0_33] : memref<4x256xf32, #tpu.memory_space<vmem>>, vector<1x256xf32>
    %78 = vector.broadcast %76 : vector<128x1xf32> to vector<128x256xf32>
    %79 = vector.broadcast %77 : vector<1x256xf32> to vector<128x256xf32>
    %80 = arith.addf %78, %79 : vector<128x256xf32>
    %cst_34 = arith.constant 2.000000e-01 : f32
    %81 = vector.broadcast %cst_34 : f32 to vector<128x256xf32>
    %82 = arith.mulf %81, %80 : vector<128x256xf32>
    %83 = arith.maximumf %80, %82 : vector<128x256xf32>
    %cst_35 = arith.constant -1.000000e+30 : f32
    %84 = vector.broadcast %cst_35 : f32 to vector<128x256xf32>
    %85 = arith.select %3, %83, %84 : vector<128x256xi1>, vector<128x256xf32>
    %cst_36 = arith.constant dense<0xFF800000> : vector<128xf32>
    %86 = vector.multi_reduction <maximumf>, %85, %cst_36 [1] : vector<128x256xf32> to vector<128xf32>
    %87 = vector.shape_cast %86 : vector<128xf32> to vector<128x1xf32>
    %cst_37 = arith.constant -1.000000e+29 : f32
    %88 = vector.broadcast %cst_37 : f32 to vector<128x1xf32>
    %89 = arith.maximumf %87, %88 : vector<128x1xf32>
    %90 = vector.broadcast %89 : vector<128x1xf32> to vector<128x256xf32>
    %91 = arith.subf %85, %90 : vector<128x256xf32>
    %92 = math.exp %91 : vector<128x256xf32>
    %cst_38 = arith.constant dense<0.000000e+00> : vector<128xf32>
    %93 = vector.multi_reduction <add>, %92, %cst_38 [1] : vector<128x256xf32> to vector<128xf32>
    %94 = vector.shape_cast %93 : vector<128xf32> to vector<128x1xf32>
    %cst_39 = arith.constant 9.99999996E-13 : f32
    %95 = vector.broadcast %cst_39 : f32 to vector<128x1xf32>
    %96 = arith.maximumf %94, %95 : vector<128x1xf32>
    %97 = tpu.reciprocal %96 {approx = true} : vector<128x1xf32> -> vector<128x1xf32>
    %98 = arith.mulf %96, %97 : vector<128x1xf32>
    %cst_40 = arith.constant 2.000000e+00 : f32
    %99 = vector.broadcast %cst_40 : f32 to vector<128x1xf32>
    %100 = arith.subf %99, %98 : vector<128x1xf32>
    %101 = arith.mulf %97, %100 : vector<128x1xf32>
    %102 = arith.truncf %92 : vector<128x256xf32> to vector<128x256xbf16>
    %103 = vector.extract_strided_slice %4 {offsets = [0, 64], sizes = [256, 32], strides = [1, 1]} : vector<256x128xbf16> to vector<256x32xbf16>
    %cst_41 = arith.constant dense<0.000000e+00> : vector<128x32xf32>
    %104 = tpu.matmul %102, %103, %cst_41 {dimension_numbers = #tpu.dot_dimension_numbers<[1], [0], [0], [1], [0, 0, 1, 1], [], []>} : vector<128x256xbf16>, vector<256x32xbf16>, vector<128x32xf32> -> vector<128x32xf32>
    %105 = vector.broadcast %101 : vector<128x1xf32> to vector<128x32xf32>
    %106 = arith.mulf %104, %105 : vector<128x32xf32>
    %107 = vector.extract_strided_slice %5 {offsets = [0, 64], sizes = [1, 32], strides = [1, 1]} : vector<1x128xf32> to vector<1x32xf32>
    %108 = vector.broadcast %107 : vector<1x32xf32> to vector<128x32xf32>
    %109 = arith.addf %106, %108 : vector<128x32xf32>
    %c0_42 = arith.constant 0 : index
    %c64 = arith.constant 64 : index
    %110 = vector.load %arg6[%c0_42, %c64] : memref<128x128xf32, #tpu.memory_space<vmem>>, vector<128x32xf32>
    tpu.vector_store %arg6[%c0_42, %c64], %109 {strides = array<i32>} : memref<128x128xf32, #tpu.memory_space<vmem>>, vector<128x32xf32>,
    %c0_43 = arith.constant 0 : index
    %c3 = arith.constant 3 : index
    %111 = vector.load %arg3[%c0_43, %c3] : memref<128x4xf32, #tpu.memory_space<vmem>>, vector<128x1xf32>
    %c3_44 = arith.constant 3 : index
    %c0_45 = arith.constant 0 : index
    %112 = vector.load %arg2[%c3_44, %c0_45] : memref<4x256xf32, #tpu.memory_space<vmem>>, vector<1x256xf32>
    %113 = vector.broadcast %111 : vector<128x1xf32> to vector<128x256xf32>
    %114 = vector.broadcast %112 : vector<1x256xf32> to vector<128x256xf32>
    %115 = arith.addf %113, %114 : vector<128x256xf32>
    %cst_46 = arith.constant 2.000000e-01 : f32
    %116 = vector.broadcast %cst_46 : f32 to vector<128x256xf32>
    %117 = arith.mulf %116, %115 : vector<128x256xf32>
    %118 = arith.maximumf %115, %117 : vector<128x256xf32>
    %cst_47 = arith.constant -1.000000e+30 : f32
    %119 = vector.broadcast %cst_47 : f32 to vector<128x256xf32>
    %120 = arith.select %3, %118, %119 : vector<128x256xi1>, vector<128x256xf32>
    %cst_48 = arith.constant dense<0xFF800000> : vector<128xf32>
    %121 = vector.multi_reduction <maximumf>, %120, %cst_48 [1] : vector<128x256xf32> to vector<128xf32>
    %122 = vector.shape_cast %121 : vector<128xf32> to vector<128x1xf32>
    %cst_49 = arith.constant -1.000000e+29 : f32
    %123 = vector.broadcast %cst_49 : f32 to vector<128x1xf32>
    %124 = arith.maximumf %122, %123 : vector<128x1xf32>
    %125 = vector.broadcast %124 : vector<128x1xf32> to vector<128x256xf32>
    %126 = arith.subf %120, %125 : vector<128x256xf32>
    %127 = math.exp %126 : vector<128x256xf32>
    %cst_50 = arith.constant dense<0.000000e+00> : vector<128xf32>
    %128 = vector.multi_reduction <add>, %127, %cst_50 [1] : vector<128x256xf32> to vector<128xf32>
    %129 = vector.shape_cast %128 : vector<128xf32> to vector<128x1xf32>
    %cst_51 = arith.constant 9.99999996E-13 : f32
    %130 = vector.broadcast %cst_51 : f32 to vector<128x1xf32>
    %131 = arith.maximumf %129, %130 : vector<128x1xf32>
    %132 = tpu.reciprocal %131 {approx = true} : vector<128x1xf32> -> vector<128x1xf32>
    %133 = arith.mulf %131, %132 : vector<128x1xf32>
    %cst_52 = arith.constant 2.000000e+00 : f32
    %134 = vector.broadcast %cst_52 : f32 to vector<128x1xf32>
    %135 = arith.subf %134, %133 : vector<128x1xf32>
    %136 = arith.mulf %132, %135 : vector<128x1xf32>
    %137 = arith.truncf %127 : vector<128x256xf32> to vector<128x256xbf16>
    %138 = vector.extract_strided_slice %4 {offsets = [0, 96], sizes = [256, 32], strides = [1, 1]} : vector<256x128xbf16> to vector<256x32xbf16>
    %cst_53 = arith.constant dense<0.000000e+00> : vector<128x32xf32>
    %139 = tpu.matmul %137, %138, %cst_53 {dimension_numbers = #tpu.dot_dimension_numbers<[1], [0], [0], [1], [0, 0, 1, 1], [], []>} : vector<128x256xbf16>, vector<256x32xbf16>, vector<128x32xf32> -> vector<128x32xf32>
    %140 = vector.broadcast %136 : vector<128x1xf32> to vector<128x32xf32>
    %141 = arith.mulf %139, %140 : vector<128x32xf32>
    %142 = vector.extract_strided_slice %5 {offsets = [0, 96], sizes = [1, 32], strides = [1, 1]} : vector<1x128xf32> to vector<1x32xf32>
    %143 = vector.broadcast %142 : vector<1x32xf32> to vector<128x32xf32>
    %144 = arith.addf %141, %143 : vector<128x32xf32>
    %c0_54 = arith.constant 0 : index
    %c96 = arith.constant 96 : index
    %145 = vector.load %arg6[%c0_54, %c96] : memref<128x128xf32, #tpu.memory_space<vmem>>, vector<128x32xf32>
    tpu.vector_store %arg6[%c0_54, %c96], %144 {strides = array<i32>} : memref<128x128xf32, #tpu.memory_space<vmem>>, vector<128x32xf32>,
    return
  }
  func.func @transform_0(%arg0: i32) -> (i32, i32) {
    %c0_i32 = arith.constant 0 : i32
    %c0_i32_0 = arith.constant 0 : i32
    %c0_i32_1 = arith.constant 0 : i32
    return %c0_i32, %c0_i32_0 : i32, i32
  }
  func.func @transform_1(%arg0: i32) -> (i32, i32) {
    %c0_i32 = arith.constant 0 : i32
    %c0_i32_0 = arith.constant 0 : i32
    %c0_i32_1 = arith.constant 0 : i32
    return %c0_i32, %c0_i32_0 : i32, i32
  }
  func.func @transform_2(%arg0: i32) -> (i32, i32) {
    %c0_i32 = arith.constant 0 : i32
    %c0_i32_0 = arith.constant 0 : i32
    return %arg0, %c0_i32 : i32, i32
  }
  func.func @transform_3(%arg0: i32) -> (i32, i32) {
    %c0_i32 = arith.constant 0 : i32
    %c0_i32_0 = arith.constant 0 : i32
    %c0_i32_1 = arith.constant 0 : i32
    return %c0_i32, %c0_i32_0 : i32, i32
  }
  func.func @transform_4(%arg0: i32) -> (i32, i32) {
    %c0_i32 = arith.constant 0 : i32
    %c0_i32_0 = arith.constant 0 : i32
    return %arg0, %c0_i32 : i32, i32
  }
  func.func @transform_5(%arg0: i32) -> (i32, i32) {
    %c0_i32 = arith.constant 0 : i32
    %c0_i32_0 = arith.constant 0 : i32
    return %arg0, %c0_i32 : i32, i32
  }
}

</mosaic_0001>

<llo_original>
// kernel: tpu_custom_call.1
$region0: #{tpu_custom_call.1}
  #allocation0 [shape = 'u32[]', space=smem, size = 0x4, offset = 0x4, fixed_abs, tag = 'smem constant byte address 0x4 - core index']
  #allocation1 [shape = 'u32[144,128]{1,0:T(1,128)}', space=vmem, size = 0x12000, scoped, tag = 'internal scratch']
  %s0 = inlined_call_operand.vmem [shape: bf16[256,128], index: 0, kind: input, shape index: {}]
  %s1 = inlined_call_operand.vmem [shape: f32[4,256], index: 1, kind: input, shape index: {}]
  %s2 = inlined_call_operand.vmem [shape: f32[256,4], index: 2, kind: input, shape index: {}]
  %s3 = inlined_call_operand.vmem [shape: f32[1,128], index: 3, kind: input, shape index: {}]
  %s4 = inlined_call_operand.vmem [shape: s8[256,256], index: 4, kind: input, shape index: {}]
  %s5 = inlined_call_operand.hbm [shape: f32[256,128], index: 5, kind: output, shape index: {}]
  %s6 = sld [smem:[#allocation0]]
  $region53: #{tpu_custom_call.1} parent=0
    _
  %s8 = ssub.s32 1, %s6
  %s9 = scalar_select 0, %s8, %s6
  $region1: #{tpu_custom_call.1} parent=0
    #allocation2 [shape = 'u8[131072]{0}', space=vmem, size = 0x20000, scoped, tag = 'output window, operand 0']
    #allocation3 [shape = 's32[2]{0}', space=sflag, size = 0x8, scoped, tag = 'scoped memory for tpu_custom_call.1']
    %10 = vsyncpa [#allocation3], 0
    %s11 = scalar_lea.sflag [#allocation3], 1
    %12 = vsyncpa %s11, 0
    loop: start=0, step=1, limit=4
    $region2: #{tpu_custom_call.1} parent=1 // loop_pre_header
      _
    $region3: #{tpu_custom_call.1} parent=1 // loop_header
      %s14 = sphi 0, %s18
      %p15 = scmp.ge.s32.totalorder %s14, 4
      %s22 = sphi 0, %s22
      %s24 = sphi 0, %s22
      %s25 = sphi 0, %s24
      %s39 = sphi 0, %s25
      %s43 = sphi 0, %s43
      %s45 = sphi 0, %s43
      %s46 = sphi 0, %s45
      %s60 = sphi 0, %s46
      %s66 = sphi 0, %s68
      %s69 = sphi 0, %s66
      %s70 = sphi 0, %s69
      %s86 = sphi 0, %s70
      %s90 = sphi 0, %s90
      %s92 = sphi 0, %s90
      %s93 = sphi 0, %s92
      %s107 = sphi 0, %s93
      %s113 = sphi 0, %s115
      %s116 = sphi 0, %s113
      %s117 = sphi 0, %s116
      %s133 = sphi 0, %s117
      %s139 = sphi 0, %s141
      %s142 = sphi 0, %s139
      %s143 = sphi 0, %s142
      %s159 = sphi 0, %s143
    $region4: #{tpu_custom_call.1} parent=1 // loop_header_branch
      %17 = sbr.rel (%p15) target = $region8
    $region5: #{tpu_custom_call.1} parent=1 // loop_body
      %s19 = ssub.s32 %s14, 1
      %s20 = ssub.s32 %s14, 2
      %s21 = sadd.s32 %s14, 1
      %s23 = sadd.s32 %s22, 1
      %p26 = scmp.eq.s32.totalorder %s14, 1
      %p27 = scmp.ne.s32.totalorder %s22, %s24
      %p28 = scmp.eq.s32.totalorder %s14, 0
      %p29 = por %p27, %p28
      %p30 = scmp.ne.s32.totalorder %s22, %s24
      %p31 = scmp.eq.s32.totalorder %s19, 1
      %p32 = por %p30, %p31
      %p33 = scmp.ne.s32.totalorder %s24, %s25
      %p34 = scmp.eq.s32.totalorder %s19, 0
      %p35 = por %p33, %p34
      %p36 = scmp.ne.s32.totalorder %s24, %s25
      %p37 = scmp.eq.s32.totalorder %s20, 1
      %p38 = por %p36, %p37
      %p40 = scmp.ne.s32.totalorder %s25, %s39
      %p41 = scmp.eq.s32.totalorder %s20, 0
      %p42 = por %p40, %p41
      %s44 = sadd.s32 %s43, 1
      %p47 = scmp.eq.s32.totalorder %s14, 1
      %p48 = scmp.ne.s32.totalorder %s43, %s45
      %p49 = scmp.eq.s32.totalorder %s14, 0
      %p50 = por %p48, %p49
      %p51 = scmp.ne.s32.totalorder %s43, %s45
      %p52 = scmp.eq.s32.totalorder %s19, 1
      %p53 = por %p51, %p52
      %p54 = scmp.ne.s32.totalorder %s45, %s46
      %p55 = scmp.eq.s32.totalorder %s19, 0
      %p56 = por %p54, %p55
      %p57 = scmp.ne.s32.totalorder %s45, %s46
      %p58 = scmp.eq.s32.totalorder %s20, 1
      %p59 = por %p57, %p58
      %p61 = scmp.ne.s32.totalorder %s46, %s60
      %p62 = scmp.eq.s32.totalorder %s20, 0
      %p63 = por %p61, %p62
      %s64 = ssub.s32 %s14, %s21
      %p65 = scmp.eq.s32.totalorder %s64, 0
      %s67 = sadd.s32 %s66, 1
      %s68 = scalar_select %p65, %s66, %s67
      %p71 = pneg %p65
      %p72 = scmp.eq.s32.totalorder %s14, 1
      %p73 = por %p71, %p72
      %p74 = scmp.ne.s32.totalorder %s66, %s69
      %p75 = scmp.eq.s32.totalorder %s14, 0
      %p76 = por %p74, %p75
      %p77 = scmp.ne.s32.totalorder %s66, %s69
      %p78 = scmp.eq.s32.totalorder %s19, 1
      %p79 = por %p77, %p78
      %p80 = scmp.ne.s32.totalorder %s69, %s70
      %p81 = scmp.eq.s32.totalorder %s19, 0
      %p82 = por %p80, %p81
      %p83 = scmp.ne.s32.totalorder %s69, %s70
      %p84 = scmp.eq.s32.totalorder %s20, 1
      %p85 = por %p83, %p84
      %p87 = scmp.ne.s32.totalorder %s70, %s86
      %p88 = scmp.eq.s32.totalorder %s20, 0
      %p89 = por %p87, %p88
      %s91 = sadd.s32 %s90, 1
      %p94 = scmp.eq.s32.totalorder %s14, 1
      %p95 = scmp.ne.s32.totalorder %s90, %s92
      %p96 = scmp.eq.s32.totalorder %s14, 0
      %p97 = por %p95, %p96
      %p98 = scmp.ne.s32.totalorder %s90, %s92
      %p99 = scmp.eq.s32.totalorder %s19, 1
      %p100 = por %p98, %p99
      %p101 = scmp.ne.s32.totalorder %s92, %s93
      %p102 = scmp.eq.s32.totalorder %s19, 0
      %p103 = por %p101, %p102
      %p104 = scmp.ne.s32.totalorder %s92, %s93
      %p105 = scmp.eq.s32.totalorder %s20, 1
      %p106 = por %p104, %p105
      %p108 = scmp.ne.s32.totalorder %s93, %s107
      %p109 = scmp.eq.s32.totalorder %s20, 0
      %p110 = por %p108, %p109
      %s111 = ssub.s32 %s14, %s21
      %p112 = scmp.eq.s32.totalorder %s111, 0
      %s114 = sadd.s32 %s113, 1
      %s115 = scalar_select %p112, %s113, %s114
      %p118 = pneg %p112
      %p119 = scmp.eq.s32.totalorder %s14, 1
      %p120 = por %p118, %p119
      %p121 = scmp.ne.s32.totalorder %s113, %s116
      %p122 = scmp.eq.s32.totalorder %s14, 0
      %p123 = por %p121, %p122
      %p124 = scmp.ne.s32.totalorder %s113, %s116
      %p125 = scmp.eq.s32.totalorder %s19, 1
      %p126 = por %p124, %p125
      %p127 = scmp.ne.s32.totalorder %s116, %s117
      %p128 = scmp.eq.s32.totalorder %s19, 0
      %p129 = por %p127, %p128
      %p130 = scmp.ne.s32.totalorder %s116, %s117
      %p131 = scmp.eq.s32.totalorder %s20, 1
      %p132 = por %p130, %p131
      %p134 = scmp.ne.s32.totalorder %s117, %s133
      %p135 = scmp.eq.s32.totalorder %s20, 0
      %p136 = por %p134, %p135
      %s137 = ssub.s32 %s14, %s21
      %p138 = scmp.eq.s32.totalorder %s137, 0
      %s140 = sadd.s32 %s139, 1
      %s141 = scalar_select %p138, %s139, %s140
      %p144 = pneg %p138
      %p145 = scmp.eq.s32.totalorder %s14, 1
      %p146 = por %p144, %p145
      %p147 = scmp.ne.s32.totalorder %s139, %s142
      %p148 = scmp.eq.s32.totalorder %s14, 0
      %p149 = por %p147, %p148
      %p150 = scmp.ne.s32.totalorder %s139, %s142
      %p151 = scmp.eq.s32.totalorder %s19, 1
      %p152 = por %p150, %p151
      %p153 = scmp.ne.s32.totalorder %s142, %s143
      %p154 = scmp.eq.s32.totalorder %s19, 0
      %p155 = por %p153, %p154
      %p156 = scmp.ne.s32.totalorder %s142, %s143
      %p157 = scmp.eq.s32.totalorder %s20, 1
      %p158 = por %p156, %p157
      %p160 = scmp.ne.s32.totalorder %s143, %s159
      %p161 = scmp.eq.s32.totalorder %s20, 0
      %p162 = por %p160, %p161
      %p163 = scmp.le.s32.totalorder 1, %s14
      %p164 = scmp.lt.s32.totalorder %s14, 3
      %p165 = pnand %p163, %p164
      %p166 = pneg %p165
      // Predicated region
      $region9: #{tpu_custom_call.1} parent=5 // pred_check
        _
      $region10: #{tpu_custom_call.1} parent=5 // pred_check_branch
        %168 = sbr.rel (%p165) target = $region12
      $region11: #{tpu_custom_call.1} parent=5 // pred_region
        %s169 = ssub.s32 %s14, 1
        // Predicated region
        $region13: #{tpu_custom_call.1} parent=11 // pred_check
          %p170 = pneg %p35
        $region14: #{tpu_custom_call.1} parent=11 // pred_check_branch
          %172 = sbr.rel (%p170) target = $region16
        $region15: #{tpu_custom_call.1} parent=11 // pred_region
          _
        $region16: #{tpu_custom_call.1} parent=11 // pred_fallthru
          _
        // Predicated region
        $region17: #{tpu_custom_call.1} parent=11 // pred_check
          %p173 = pneg %p56
        $region18: #{tpu_custom_call.1} parent=11 // pred_check_branch
          %175 = sbr.rel (%p173) target = $region20
        $region19: #{tpu_custom_call.1} parent=11 // pred_region
          _
        $region20: #{tpu_custom_call.1} parent=11 // pred_fallthru
          _
        // Predicated region
        $region21: #{tpu_custom_call.1} parent=11 // pred_check
          %p176 = pneg %p103
        $region22: #{tpu_custom_call.1} parent=11 // pred_check_branch
          %178 = sbr.rel (%p176) target = $region24
        $region23: #{tpu_custom_call.1} parent=11 // pred_region
          _
        $region24: #{tpu_custom_call.1} parent=11 // pred_fallthru
          _
      $region12: #{tpu_custom_call.1} parent=5 // pred_fallthru
        _
      %p179 = scmp.lt.s32.totalorder %s14, 2
      // Predicated region
      $region25: #{tpu_custom_call.1} parent=5 // pred_check
        %p180 = pneg %p179
      $region26: #{tpu_custom_call.1} parent=5 // pred_check_branch
        %182 = sbr.rel (%p180) target = $region28
      $region27: #{tpu_custom_call.1} parent=5 // pred_region
        // Predicated region
        $region29: #{tpu_custom_call.1} parent=27 // pred_check
          %p183 = pneg %p76
        $region30: #{tpu_custom_call.1} parent=27 // pred_check_branch
          %185 = sbr.rel (%p183) target = $region32
        $region31: #{tpu_custom_call.1} parent=27 // pred_region
          %s186 = smul.u32 16, %s14
          %p187 = scmp.lt.s32.totalorder %s186, 31
          %s188 = scalar_select %p187, %s186, 31
          %s189 = smul.addr %s188, 8
          %s190 = scalar_lea.vmem %s2, %s189
          %s191 = smul.u32 16, %s14
        $region32: #{tpu_custom_call.1} parent=27 // pred_fallthru
          _
        // Predicated region
        $region33: #{tpu_custom_call.1} parent=27 // pred_check
          %p192 = pneg %p123
        $region34: #{tpu_custom_call.1} parent=27 // pred_check_branch
          %194 = sbr.rel (%p192) target = $region36
        $region35: #{tpu_custom_call.1} parent=27 // pred_region
          %s195 = smul.u32 4, %s14
          %p196 = scmp.lt.s32.totalorder %s195, 7
          %s197 = scalar_select %p196, %s195, 7
          %s198 = smul.addr %s197, 2
          %s199 = smul.addr %s198, 8
          %s200 = scalar_lea.vmem %s4, %s199
          %s201 = smul.u32 4, %s14
        $region36: #{tpu_custom_call.1} parent=27 // pred_fallthru
          _
      $region28: #{tpu_custom_call.1} parent=5 // pred_fallthru
        _
      %p202 = scmp.le.s32.totalorder 1, %s14
      %p203 = scmp.lt.s32.totalorder %s14, 3
      %p204 = pnand %p202, %p203
      %p205 = pneg %p204
      // Predicated region
      $region37: #{tpu_custom_call.1} parent=5 // pred_check
        _
      $region38: #{tpu_custom_call.1} parent=5 // pred_check_branch
        %207 = sbr.rel (%p204) target = $region40
      $region39: #{tpu_custom_call.1} parent=5 // pred_region
        %s208 = ssub.s32 %s14, 1
        %p209 = pneg %p35
        %p210 = pneg %p32
        %p211 = pneg %p56
        %p212 = pneg %p53
        %s213 = smul.u32 16, %s19
        %p214 = scmp.lt.s32.totalorder %s213, 31
        %s215 = scalar_select %p214, %s213, 31
        %s216 = smul.addr %s215, 8
        %s217 = scalar_lea.vmem %s2, %s216
        %p218 = pneg %p82
        %p219 = pneg %p79
        %p220 = pneg %p103
        %p221 = pneg %p100
        %s222 = smul.u32 4, %s19
        %p223 = scmp.lt.s32.totalorder %s222, 7
        %s224 = scalar_select %p223, %s222, 7
        %s225 = smul.addr %s224, 2
        %s226 = smul.addr %s225, 8
        %s227 = scalar_lea.vmem %s4, %s226
        %p228 = pneg %p129
        %p229 = pneg %p126
        %p230 = pneg %p155
        %p231 = pneg %p152
        %s232 = sand.u32 %s142, 1
        %s233 = scalar_lea.sflag [#allocation3], %s232
        %s234 = sand.u32 %s142, 1
        %s235 = smul.addr %s234, 128
        %s236 = scalar_lea.vmem [#allocation2], %s235
        %s237 = smul.u32 16, %s19
        %p238 = scmp.lt.s32.totalorder %s237, 31
        %s239 = scalar_select %p238, %s237, 31
        %s240 = smul.addr %s239, 8
        %s241 = scalar_lea.vmem %s2, %s240
        %s242 = smul.u32 16, %s19
        %s243 = smul.u32 4, %s19
        %p244 = scmp.lt.s32.totalorder %s243, 7
        %s245 = scalar_select %p244, %s243, 7
        %s246 = smul.addr %s245, 2
        %s247 = smul.addr %s246, 8
        %s248 = scalar_lea.vmem %s4, %s247
        %s249 = smul.u32 4, %s19
        %s250 = smul.u32 16, %s19
        %v252 = vld [vmem:[%s248] sm:$0xff]
        %v253 = vld [vmem:[%s248 + $0x8] sm:$0xff]
        %v254 = vld [vmem:[%s248 + $0x10] sm:$0xff]
        %v255 = vld [vmem:[%s248 + $0x18] sm:$0xff]
        %v256 = vld [vmem:[%s248 + $0x20] sm:$0xff]
        %v257 = vld [vmem:[%s248 + $0x28] sm:$0xff]
        %v258 = vld [vmem:[%s248 + $0x30] sm:$0xff]
        %v259 = vld [vmem:[%s248 + $0x38] sm:$0xff]
        %v260 = vunpack.c.0.s8 %v252
        %v261 = vunpack.c.0.s8 %v253
        %v262 = vunpack.c.1.s8 %v252
        %v263 = vunpack.c.1.s8 %v253
        %v264 = vunpack.c.2.s8 %v252
        %v265 = vunpack.c.2.s8 %v253
        %v266 = vunpack.c.3.s8 %v252
        %v267 = vunpack.c.3.s8 %v253
        %v268 = vunpack.c.0.s8 %v254
        %v269 = vunpack.c.0.s8 %v255
        %v270 = vunpack.c.1.s8 %v254
        %v271 = vunpack.c.1.s8 %v255
        %v272 = vunpack.c.2.s8 %v254
        %v273 = vunpack.c.2.s8 %v255
        %v274 = vunpack.c.3.s8 %v254
        %v275 = vunpack.c.3.s8 %v255
        %v276 = vunpack.c.0.s8 %v256
        %v277 = vunpack.c.0.s8 %v257
        %v278 = vunpack.c.1.s8 %v256
        %v279 = vunpack.c.1.s8 %v257
        %v280 = vunpack.c.2.s8 %v256
        %v281 = vunpack.c.2.s8 %v257
        %v282 = vunpack.c.3.s8 %v256
        %v283 = vunpack.c.3.s8 %v257
        %v284 = vunpack.c.0.s8 %v258
        %v285 = vunpack.c.0.s8 %v259
        %v286 = vunpack.c.1.s8 %v258
        %v287 = vunpack.c.1.s8 %v259
        %v288 = vunpack.c.2.s8 %v258
        %v289 = vunpack.c.2.s8 %v259
        %v290 = vunpack.c.3.s8 %v258
        %v291 = vunpack.c.3.s8 %v259
        %v292 = vcvt.s32.f32 %v260
        %v293 = vcvt.s32.f32 %v261
        %v294 = vcvt.s32.f32 %v262
        %v295 = vcvt.s32.f32 %v263
        %v296 = vcvt.s32.f32 %v264
        %v297 = vcvt.s32.f32 %v265
        %v298 = vcvt.s32.f32 %v266
        %v299 = vcvt.s32.f32 %v267
        %v300 = vcvt.s32.f32 %v268
        %v301 = vcvt.s32.f32 %v269
        %v302 = vcvt.s32.f32 %v270
        %v303 = vcvt.s32.f32 %v271
        %v304 = vcvt.s32.f32 %v272
        %v305 = vcvt.s32.f32 %v273
        %v306 = vcvt.s32.f32 %v274
        %v307 = vcvt.s32.f32 %v275
        %v308 = vcvt.s32.f32 %v276
        %v309 = vcvt.s32.f32 %v277
        %v310 = vcvt.s32.f32 %v278
        %v311 = vcvt.s32.f32 %v279
        %v312 = vcvt.s32.f32 %v280
        %v313 = vcvt.s32.f32 %v281
        %v314 = vcvt.s32.f32 %v282
        %v315 = vcvt.s32.f32 %v283
        %v316 = vcvt.s32.f32 %v284
        %v317 = vcvt.s32.f32 %v285
        %v318 = vcvt.s32.f32 %v286
        %v319 = vcvt.s32.f32 %v287
        %v320 = vcvt.s32.f32 %v288
        %v321 = vcvt.s32.f32 %v289
        %v322 = vcvt.s32.f32 %v290
        %v323 = vcvt.s32.f32 %v291
        %vm324 = vcmp.gt.f32.partialorder %v292, 0.0
        %vm325 = vcmp.gt.f32.partialorder %v293, 0.0
        %vm326 = vcmp.gt.f32.partialorder %v294, 0.0
        %vm327 = vcmp.gt.f32.partialorder %v295, 0.0
        %vm328 = vcmp.gt.f32.partialorder %v296, 0.0
        %vm329 = vcmp.gt.f32.partialorder %v297, 0.0
        %vm330 = vcmp.gt.f32.partialorder %v298, 0.0
        %vm331 = vcmp.gt.f32.partialorder %v299, 0.0
        %vm332 = vcmp.gt.f32.partialorder %v300, 0.0
        %vm333 = vcmp.gt.f32.partialorder %v301, 0.0
        %vm334 = vcmp.gt.f32.partialorder %v302, 0.0
        %vm335 = vcmp.gt.f32.partialorder %v303, 0.0
        %vm336 = vcmp.gt.f32.partialorder %v304, 0.0
        %vm337 = vcmp.gt.f32.partialorder %v305, 0.0
        %vm338 = vcmp.gt.f32.partialorder %v306, 0.0
        %vm339 = vcmp.gt.f32.partialorder %v307, 0.0
        %vm340 = vcmp.gt.f32.partialorder %v308, 0.0
        %vm341 = vcmp.gt.f32.partialorder %v309, 0.0
        %vm342 = vcmp.gt.f32.partialorder %v310, 0.0
        %vm343 = vcmp.gt.f32.partialorder %v311, 0.0
        %vm344 = vcmp.gt.f32.partialorder %v312, 0.0
        %vm345 = vcmp.gt.f32.partialorder %v313, 0.0
        %vm346 = vcmp.gt.f32.partialorder %v314, 0.0
        %vm347 = vcmp.gt.f32.partialorder %v315, 0.0
        %vm348 = vcmp.gt.f32.partialorder %v316, 0.0
        %vm349 = vcmp.gt.f32.partialorder %v317, 0.0
        %vm350 = vcmp.gt.f32.partialorder %v318, 0.0
        %vm351 = vcmp.gt.f32.partialorder %v319, 0.0
        %vm352 = vcmp.gt.f32.partialorder %v320, 0.0
        %vm353 = vcmp.gt.f32.partialorder %v321, 0.0
        %vm354 = vcmp.gt.f32.partialorder %v322, 0.0
        %vm355 = vcmp.gt.f32.partialorder %v323, 0.0
        %v356 = vld [vmem:[%s0] sm:$0xf]
        %v357 = vld [vmem:[%s0 + $0x4] sm:$0xf]
        %v358 = vld [vmem:[%s0 + $0x8] sm:$0xf]
        %v359 = vld [vmem:[%s0 + $0xc] sm:$0xf]
        %v360 = vld [vmem:[%s0 + $0x10] sm:$0xf]
        %v361 = vld [vmem:[%s0 + $0x14] sm:$0xf]
        %v362 = vld [vmem:[%s0 + $0x18] sm:$0xf]
        %v363 = vld [vmem:[%s0 + $0x1c] sm:$0xf]
        %v364 = vld [vmem:[%s0 + $0x20] sm:$0xf]
        %v365 = vld [vmem:[%s0 + $0x24] sm:$0xf]
        %v366 = vld [vmem:[%s0 + $0x28] sm:$0xf]
        %v367 = vld [vmem:[%s0 + $0x2c] sm:$0xf]
        %v368 = vld [vmem:[%s0 + $0x30] sm:$0xf]
        %v369 = vld [vmem:[%s0 + $0x34] sm:$0xf]
        %v370 = vld [vmem:[%s0 + $0x38] sm:$0xf]
        %v371 = vld [vmem:[%s0 + $0x3c] sm:$0xf]
        %v372 = vld [vmem:[%s0 + $0x40] sm:$0xf]
        %v373 = vld [vmem:[%s0 + $0x44] sm:$0xf]
        %v374 = vld [vmem:[%s0 + $0x48] sm:$0xf]
        %v375 = vld [vmem:[%s0 + $0x4c] sm:$0xf]
        %v376 = vld [vmem:[%s0 + $0x50] sm:$0xf]
        %v377 = vld [vmem:[%s0 + $0x54] sm:$0xf]
        %v378 = vld [vmem:[%s0 + $0x58] sm:$0xf]
        %v379 = vld [vmem:[%s0 + $0x5c] sm:$0xf]
        %v380 = vld [vmem:[%s0 + $0x60] sm:$0xf]
        %v381 = vld [vmem:[%s0 + $0x64] sm:$0xf]
        %v382 = vld [vmem:[%s0 + $0x68] sm:$0xf]
        %v383 = vld [vmem:[%s0 + $0x6c] sm:$0xf]
        %v384 = vld [vmem:[%s0 + $0x70] sm:$0xf]
        %v385 = vld [vmem:[%s0 + $0x74] sm:$0xf]
        %v386 = vld [vmem:[%s0 + $0x78] sm:$0xf]
        %v387 = vld [vmem:[%s0 + $0x7c] sm:$0xf]
        %v388 = vld [vmem:[%s3] sm:$0x1]
        %v389 = vld [vmem:[%s241] sm:$0xff]
        %v390 = vld [vmem:[%s241 + $0x8] sm:$0xff]
        %v391 = vld [vmem:[%s241 + $0x10] sm:$0xff]
        %v392 = vld [vmem:[%s241 + $0x18] sm:$0xff]
        %v393 = vld [vmem:[%s241 + $0x20] sm:$0xff]
        %v394 = vld [vmem:[%s241 + $0x28] sm:$0xff]
        %v395 = vld [vmem:[%s241 + $0x30] sm:$0xff]
        %v396 = vld [vmem:[%s241 + $0x38] sm:$0xff]
        %v397 = vld [vmem:[%s241 + $0x40] sm:$0xff]
        %v398 = vld [vmem:[%s241 + $0x48] sm:$0xff]
        %v399 = vld [vmem:[%s241 + $0x50] sm:$0xff]
        %v400 = vld [vmem:[%s241 + $0x58] sm:$0xff]
        %v401 = vld [vmem:[%s241 + $0x60] sm:$0xff]
        %v402 = vld [vmem:[%s241 + $0x68] sm:$0xff]
        %v403 = vld [vmem:[%s241 + $0x70] sm:$0xff]
        %v404 = vld [vmem:[%s241 + $0x78] sm:$0xff]
        %v405 = vld [vmem:[%s1] ss:$4 sm:$0x3]
        %407 = vset.pattern.permute.xlu0 0
        %408 = vperm.xlu0 %407, %v389
        %v409 = vpop.permute.xlu0 %408
        %412 = vset.pattern.permute.xlu0 0
        %413 = vperm.xlu0 %412, %v390
        %v414 = vpop.permute.xlu0 %413
        %417 = vset.pattern.permute.xlu0 0
        %418 = vperm.xlu0 %417, %v391
        %v419 = vpop.permute.xlu0 %418
        %422 = vset.pattern.permute.xlu0 0
        %423 = vperm.xlu0 %422, %v392
        %v424 = vpop.permute.xlu0 %423
        %427 = vset.pattern.permute.xlu0 0
        %428 = vperm.xlu0 %427, %v393
        %v429 = vpop.permute.xlu0 %428
        %432 = vset.pattern.permute.xlu0 0
        %433 = vperm.xlu0 %432, %v394
        %v434 = vpop.permute.xlu0 %433
        %437 = vset.pattern.permute.xlu0 0
        %438 = vperm.xlu0 %437, %v395
        %v439 = vpop.permute.xlu0 %438
        %442 = vset.pattern.permute.xlu0 0
        %443 = vperm.xlu0 %442, %v396
        %v444 = vpop.permute.xlu0 %443
        %447 = vset.pattern.permute.xlu0 0
        %448 = vperm.xlu0 %447, %v397
        %v449 = vpop.permute.xlu0 %448
        %452 = vset.pattern.permute.xlu0 0
        %453 = vperm.xlu0 %452, %v398
        %v454 = vpop.permute.xlu0 %453
        %457 = vset.pattern.permute.xlu0 0
        %458 = vperm.xlu0 %457, %v399
        %v459 = vpop.permute.xlu0 %458
        %462 = vset.pattern.permute.xlu0 0
        %463 = vperm.xlu0 %462, %v400
        %v464 = vpop.permute.xlu0 %463
        %467 = vset.pattern.permute.xlu0 0
        %468 = vperm.xlu0 %467, %v401
        %v469 = vpop.permute.xlu0 %468
        %472 = vset.pattern.permute.xlu0 0
        %473 = vperm.xlu0 %472, %v402
        %v474 = vpop.permute.xlu0 %473
        %477 = vset.pattern.permute.xlu0 0
        %478 = vperm.xlu0 %477, %v403
        %v479 = vpop.permute.xlu0 %478
        %482 = vset.pattern.permute.xlu0 0
        %483 = vperm.xlu0 %482, %v404
        %v484 = vpop.permute.xlu0 %483
        %v487 = vlaneseq
        %v488 = vshrl.u32 %v487, 7
        %v489 = vsub.s32 0, %v488
        %v490 = vrot.slane %v405, %v489
        %v491 = vlaneseq
        %v492 = vshrl.u32 %v491, 7
        %v493 = vsub.s32 1, %v492
        %v494 = vrot.slane %v405, %v493
        %v497 = vadd.f32 %v409, %v490
        %v498 = vadd.f32 %v409, %v494
        %v499 = vadd.f32 %v414, %v490
        %v500 = vadd.f32 %v414, %v494
        %v501 = vadd.f32 %v419, %v490
        %v502 = vadd.f32 %v419, %v494
        %v503 = vadd.f32 %v424, %v490
        %v504 = vadd.f32 %v424, %v494
        %v505 = vadd.f32 %v429, %v490
        %v506 = vadd.f32 %v429, %v494
        %v507 = vadd.f32 %v434, %v490
        %v508 = vadd.f32 %v434, %v494
        %v509 = vadd.f32 %v439, %v490
        %v510 = vadd.f32 %v439, %v494
        %v511 = vadd.f32 %v444, %v490
        %v512 = vadd.f32 %v444, %v494
        %v513 = vadd.f32 %v449, %v490
        %v514 = vadd.f32 %v449, %v494
        %v515 = vadd.f32 %v454, %v490
        %v516 = vadd.f32 %v454, %v494
        %v517 = vadd.f32 %v459, %v490
        %v518 = vadd.f32 %v459, %v494
        %v519 = vadd.f32 %v464, %v490
        %v520 = vadd.f32 %v464, %v494
        %v521 = vadd.f32 %v469, %v490
        %v522 = vadd.f32 %v469, %v494
        %v523 = vadd.f32 %v474, %v490
        %v524 = vadd.f32 %v474, %v494
        %v525 = vadd.f32 %v479, %v490
        %v526 = vadd.f32 %v479, %v494
        %v527 = vadd.f32 %v484, %v490
        %v528 = vadd.f32 %v484, %v494
        %v529 = vmul.f32 %v497, 0.2
        %v530 = vmul.f32 %v498, 0.2
        %v531 = vmul.f32 %v499, 0.2
        %v532 = vmul.f32 %v500, 0.2
        %v533 = vmul.f32 %v501, 0.2
        %v534 = vmul.f32 %v502, 0.2
        %v535 = vmul.f32 %v503, 0.2
        %v536 = vmul.f32 %v504, 0.2
        %v537 = vmul.f32 %v505, 0.2
        %v538 = vmul.f32 %v506, 0.2
        %v539 = vmul.f32 %v507, 0.2
        %v540 = vmul.f32 %v508, 0.2
        %v541 = vmul.f32 %v509, 0.2
        %v542 = vmul.f32 %v510, 0.2
        %v543 = vmul.f32 %v511, 0.2
        %v544 = vmul.f32 %v512, 0.2
        %v545 = vmul.f32 %v513, 0.2
        %v546 = vmul.f32 %v514, 0.2
        %v547 = vmul.f32 %v515, 0.2
        %v548 = vmul.f32 %v516, 0.2
        %v549 = vmul.f32 %v517, 0.2
        %v550 = vmul.f32 %v518, 0.2
        %v551 = vmul.f32 %v519, 0.2
        %v552 = vmul.f32 %v520, 0.2
        %v553 = vmul.f32 %v521, 0.2
        %v554 = vmul.f32 %v522, 0.2
        %v555 = vmul.f32 %v523, 0.2
        %v556 = vmul.f32 %v524, 0.2
        %v557 = vmul.f32 %v525, 0.2
        %v558 = vmul.f32 %v526, 0.2
        %v559 = vmul.f32 %v527, 0.2
        %v560 = vmul.f32 %v528, 0.2
        %v561 = vmax.f32 %v497, %v529
        %v562 = vmax.f32 %v498, %v530
        %v563 = vmax.f32 %v499, %v531
        %v564 = vmax.f32 %v500, %v532
        %v565 = vmax.f32 %v501, %v533
        %v566 = vmax.f32 %v502, %v534
        %v567 = vmax.f32 %v503, %v535
        %v568 = vmax.f32 %v504, %v536
        %v569 = vmax.f32 %v505, %v537
        %v570 = vmax.f32 %v506, %v538
        %v571 = vmax.f32 %v507, %v539
        %v572 = vmax.f32 %v508, %v540
        %v573 = vmax.f32 %v509, %v541
        %v574 = vmax.f32 %v510, %v542
        %v575 = vmax.f32 %v511, %v543
        %v576 = vmax.f32 %v512, %v544
        %v577 = vmax.f32 %v513, %v545
        %v578 = vmax.f32 %v514, %v546
        %v579 = vmax.f32 %v515, %v547
        %v580 = vmax.f32 %v516, %v548
        %v581 = vmax.f32 %v517, %v549
        %v582 = vmax.f32 %v518, %v550
        %v583 = vmax.f32 %v519, %v551
        %v584 = vmax.f32 %v520, %v552
        %v585 = vmax.f32 %v521, %v553
        %v586 = vmax.f32 %v522, %v554
        %v587 = vmax.f32 %v523, %v555
        %v588 = vmax.f32 %v524, %v556
        %v589 = vmax.f32 %v525, %v557
        %v590 = vmax.f32 %v526, %v558
        %v591 = vmax.f32 %v527, %v559
        %v592 = vmax.f32 %v528, %v560
        %v593 = vsel %vm324, %v561, -1e+30
        %v594 = vsel %vm325, %v562, -1e+30
        %v595 = vsel %vm326, %v563, -1e+30
        %v596 = vsel %vm327, %v564, -1e+30
        %v597 = vsel %vm328, %v565, -1e+30
        %v598 = vsel %vm329, %v566, -1e+30
        %v599 = vsel %vm330, %v567, -1e+30
        %v600 = vsel %vm331, %v568, -1e+30
        %v601 = vsel %vm332, %v569, -1e+30
        %v602 = vsel %vm333, %v570, -1e+30
        %v603 = vsel %vm334, %v571, -1e+30
        %v604 = vsel %vm335, %v572, -1e+30
        %v605 = vsel %vm336, %v573, -1e+30
        %v606 = vsel %vm337, %v574, -1e+30
        %v607 = vsel %vm338, %v575, -1e+30
        %v608 = vsel %vm339, %v576, -1e+30
        %v609 = vsel %vm340, %v577, -1e+30
        %v610 = vsel %vm341, %v578, -1e+30
        %v611 = vsel %vm342, %v579, -1e+30
        %v612 = vsel %vm343, %v580, -1e+30
        %v613 = vsel %vm344, %v581, -1e+30
        %v614 = vsel %vm345, %v582, -1e+30
        %v615 = vsel %vm346, %v583, -1e+30
        %v616 = vsel %vm347, %v584, -1e+30
        %v617 = vsel %vm348, %v585, -1e+30
        %v618 = vsel %vm349, %v586, -1e+30
        %v619 = vsel %vm350, %v587, -1e+30
        %v620 = vsel %vm351, %v588, -1e+30
        %v621 = vsel %vm352, %v589, -1e+30
        %v622 = vsel %vm353, %v590, -1e+30
        %v623 = vsel %vm354, %v591, -1e+30
        %v624 = vsel %vm355, %v592, -1e+30
        %v625 = vmax.f32 %v593, %v594
        %626 = vmax.xlane.f32.xlu0 %v625
        %v627 = vpop.xlane.xlu0 %626
        %v628 = vmax.f32 %v595, %v596
        %629 = vmax.xlane.f32.xlu0 %v628
        %v630 = vpop.xlane.xlu0 %629
        %v631 = vmax.f32 %v597, %v598
        %632 = vmax.xlane.f32.xlu0 %v631
        %v633 = vpop.xlane.xlu0 %632
        %v634 = vmax.f32 %v599, %v600
        %635 = vmax.xlane.f32.xlu0 %v634
        %v636 = vpop.xlane.xlu0 %635
        %v637 = vmax.f32 %v601, %v602
        %638 = vmax.xlane.f32.xlu0 %v637
        %v639 = vpop.xlane.xlu0 %638
        %v640 = vmax.f32 %v603, %v604
        %641 = vmax.xlane.f32.xlu0 %v640
        %v642 = vpop.xlane.xlu0 %641
        %v643 = vmax.f32 %v605, %v606
        %644 = vmax.xlane.f32.xlu0 %v643
        %v645 = vpop.xlane.xlu0 %644
        %v646 = vmax.f32 %v607, %v608
        %647 = vmax.xlane.f32.xlu0 %v646
        %v648 = vpop.xlane.xlu0 %647
        %v649 = vmax.f32 %v609, %v610
        %650 = vmax.xlane.f32.xlu0 %v649
        %v651 = vpop.xlane.xlu0 %650
        %v652 = vmax.f32 %v611, %v612
        %653 = vmax.xlane.f32.xlu0 %v652
        %v654 = vpop.xlane.xlu0 %653
        %v655 = vmax.f32 %v613, %v614
        %656 = vmax.xlane.f32.xlu0 %v655
        %v657 = vpop.xlane.xlu0 %656
        %v658 = vmax.f32 %v615, %v616
        %659 = vmax.xlane.f32.xlu0 %v658
        %v660 = vpop.xlane.xlu0 %659
        %v661 = vmax.f32 %v617, %v618
        %662 = vmax.xlane.f32.xlu0 %v661
        %v663 = vpop.xlane.xlu0 %662
        %v664 = vmax.f32 %v619, %v620
        %665 = vmax.xlane.f32.xlu0 %v664
        %v666 = vpop.xlane.xlu0 %665
        %v667 = vmax.f32 %v621, %v622
        %668 = vmax.xlane.f32.xlu0 %v667
        %v669 = vpop.xlane.xlu0 %668
        %v670 = vmax.f32 %v623, %v624
        %671 = vmax.xlane.f32.xlu0 %v670
        %v672 = vpop.xlane.xlu0 %671
        %v673 = vmax.f32 %v627, -1e+29
        %v674 = vmax.f32 %v630, -1e+29
        %v675 = vmax.f32 %v633, -1e+29
        %v676 = vmax.f32 %v636, -1e+29
        %v677 = vmax.f32 %v639, -1e+29
        %v678 = vmax.f32 %v642, -1e+29
        %v679 = vmax.f32 %v645, -1e+29
        %v680 = vmax.f32 %v648, -1e+29
        %v681 = vmax.f32 %v651, -1e+29
        %v682 = vmax.f32 %v654, -1e+29
        %v683 = vmax.f32 %v657, -1e+29
        %v684 = vmax.f32 %v660, -1e+29
        %v685 = vmax.f32 %v663, -1e+29
        %v686 = vmax.f32 %v666, -1e+29
        %v687 = vmax.f32 %v669, -1e+29
        %v688 = vmax.f32 %v672, -1e+29
        %v689 = vsub.f32 %v593, %v673
        %v690 = vsub.f32 %v594, %v673
        %v691 = vsub.f32 %v595, %v674
        %v692 = vsub.f32 %v596, %v674
        %v693 = vsub.f32 %v597, %v675
        %v694 = vsub.f32 %v598, %v675
        %v695 = vsub.f32 %v599, %v676
        %v696 = vsub.f32 %v600, %v676
        %v697 = vsub.f32 %v601, %v677
        %v698 = vsub.f32 %v602, %v677
        %v699 = vsub.f32 %v603, %v678
        %v700 = vsub.f32 %v604, %v678
        %v701 = vsub.f32 %v605, %v679
        %v702 = vsub.f32 %v606, %v679
        %v703 = vsub.f32 %v607, %v680
        %v704 = vsub.f32 %v608, %v680
        %v705 = vsub.f32 %v609, %v681
        %v706 = vsub.f32 %v610, %v681
        %v707 = vsub.f32 %v611, %v682
        %v708 = vsub.f32 %v612, %v682
        %v709 = vsub.f32 %v613, %v683
        %v710 = vsub.f32 %v614, %v683
        %v711 = vsub.f32 %v615, %v684
        %v712 = vsub.f32 %v616, %v684
        %v713 = vsub.f32 %v617, %v685
        %v714 = vsub.f32 %v618, %v685
        %v715 = vsub.f32 %v619, %v686
        %v716 = vsub.f32 %v620, %v686
        %v717 = vsub.f32 %v621, %v687
        %v718 = vsub.f32 %v622, %v687
        %v719 = vsub.f32 %v623, %v688
        %v720 = vsub.f32 %v624, %v688
        %v721 = vmul.f32 %v689, 1.442695
        %v722 = vpow.pop %v721
        %v723 = vmul.f32 %v690, 1.442695
        %v724 = vpow.pop %v723
        %v725 = vmul.f32 %v691, 1.442695
        %v726 = vpow.pop %v725
        %v727 = vmul.f32 %v692, 1.442695
        %v728 = vpow.pop %v727
        %v729 = vmul.f32 %v693, 1.442695
        %v730 = vpow.pop %v729
        %v731 = vmul.f32 %v694, 1.442695
        %v732 = vpow.pop %v731
        %v733 = vmul.f32 %v695, 1.442695
        %v734 = vpow.pop %v733
        %v735 = vmul.f32 %v696, 1.442695
        %v736 = vpow.pop %v735
        %v737 = vmul.f32 %v697, 1.442695
        %v738 = vpow.pop %v737
        %v739 = vmul.f32 %v698, 1.442695
        %v740 = vpow.pop %v739
        %v741 = vmul.f32 %v699, 1.442695
        %v742 = vpow.pop %v741
        %v743 = vmul.f32 %v700, 1.442695
        %v744 = vpow.pop %v743
        %v745 = vmul.f32 %v701, 1.442695
        %v746 = vpow.pop %v745
        %v747 = vmul.f32 %v702, 1.442695
        %v748 = vpow.pop %v747
        %v749 = vmul.f32 %v703, 1.442695
        %v750 = vpow.pop %v749
        %v751 = vmul.f32 %v704, 1.442695
        %v752 = vpow.pop %v751
        %v753 = vmul.f32 %v705, 1.442695
        %v754 = vpow.pop %v753
        %v755 = vmul.f32 %v706, 1.442695
        %v756 = vpow.pop %v755
        %v757 = vmul.f32 %v707, 1.442695
        %v758 = vpow.pop %v757
        %v759 = vmul.f32 %v708, 1.442695
        %v760 = vpow.pop %v759
        %v761 = vmul.f32 %v709, 1.442695
        %v762 = vpow.pop %v761
        %v763 = vmul.f32 %v710, 1.442695
        %v764 = vpow.pop %v763
        %v765 = vmul.f32 %v711, 1.442695
        %v766 = vpow.pop %v765
        %v767 = vmul.f32 %v712, 1.442695
        %v768 = vpow.pop %v767
        %v769 = vmul.f32 %v713, 1.442695
        %v770 = vpow.pop %v769
        %v771 = vmul.f32 %v714, 1.442695
        %v772 = vpow.pop %v771
        %v773 = vmul.f32 %v715, 1.442695
        %v774 = vpow.pop %v773
        %v775 = vmul.f32 %v716, 1.442695
        %v776 = vpow.pop %v775
        %v777 = vmul.f32 %v717, 1.442695
        %v778 = vpow.pop %v777
        %v779 = vmul.f32 %v718, 1.442695
        %v780 = vpow.pop %v779
        %v781 = vmul.f32 %v719, 1.442695
        %v782 = vpow.pop %v781
        %v783 = vmul.f32 %v720, 1.442695
        %v784 = vpow.pop %v783
        %v785 = vadd.f32 %v722, %v724
        %786 = vadd.xlane.f32.xlu0 %v785
        %v787 = vpop.xlane.xlu0 %786
        %v788 = vadd.f32 %v726, %v728
        %789 = vadd.xlane.f32.xlu0 %v788
        %v790 = vpop.xlane.xlu0 %789
        %v791 = vadd.f32 %v730, %v732
        %792 = vadd.xlane.f32.xlu0 %v791
        %v793 = vpop.xlane.xlu0 %792
        %v794 = vadd.f32 %v734, %v736
        %795 = vadd.xlane.f32.xlu0 %v794
        %v796 = vpop.xlane.xlu0 %795
        %v797 = vadd.f32 %v738, %v740
        %798 = vadd.xlane.f32.xlu0 %v797
        %v799 = vpop.xlane.xlu0 %798
        %v800 = vadd.f32 %v742, %v744
        %801 = vadd.xlane.f32.xlu0 %v800
        %v802 = vpop.xlane.xlu0 %801
        %v803 = vadd.f32 %v746, %v748
        %804 = vadd.xlane.f32.xlu0 %v803
        %v805 = vpop.xlane.xlu0 %804
        %v806 = vadd.f32 %v750, %v752
        %807 = vadd.xlane.f32.xlu0 %v806
        %v808 = vpop.xlane.xlu0 %807
        %v809 = vadd.f32 %v754, %v756
        %810 = vadd.xlane.f32.xlu0 %v809
        %v811 = vpop.xlane.xlu0 %810
        %v812 = vadd.f32 %v758, %v760
        %813 = vadd.xlane.f32.xlu0 %v812
        %v814 = vpop.xlane.xlu0 %813
        %v815 = vadd.f32 %v762, %v764
        %816 = vadd.xlane.f32.xlu0 %v815
        %v817 = vpop.xlane.xlu0 %816
        %v818 = vadd.f32 %v766, %v768
        %819 = vadd.xlane.f32.xlu0 %v818
        %v820 = vpop.xlane.xlu0 %819
        %v821 = vadd.f32 %v770, %v772
        %822 = vadd.xlane.f32.xlu0 %v821
        %v823 = vpop.xlane.xlu0 %822
        %v824 = vadd.f32 %v774, %v776
        %825 = vadd.xlane.f32.xlu0 %v824
        %v826 = vpop.xlane.xlu0 %825
        %v827 = vadd.f32 %v778, %v780
        %828 = vadd.xlane.f32.xlu0 %v827
        %v829 = vpop.xlane.xlu0 %828
        %v830 = vadd.f32 %v782, %v784
        %831 = vadd.xlane.f32.xlu0 %v830
        %v832 = vpop.xlane.xlu0 %831
        %v833 = vmax.f32 %v787, 1e-12
        %v834 = vmax.f32 %v790, 1e-12
        %v835 = vmax.f32 %v793, 1e-12
        %v836 = vmax.f32 %v796, 1e-12
        %v837 = vmax.f32 %v799, 1e-12
        %v838 = vmax.f32 %v802, 1e-12
        %v839 = vmax.f32 %v805, 1e-12
        %v840 = vmax.f32 %v808, 1e-12
        %v841 = vmax.f32 %v811, 1e-12
        %v842 = vmax.f32 %v814, 1e-12
        %v843 = vmax.f32 %v817, 1e-12
        %v844 = vmax.f32 %v820, 1e-12
        %v845 = vmax.f32 %v823, 1e-12
        %v846 = vmax.f32 %v826, 1e-12
        %v847 = vmax.f32 %v829, 1e-12
        %v848 = vmax.f32 %v832, 1e-12
        %v849 = vrcp.pop %v833
        %v850 = vrcp.pop %v834
        %v851 = vrcp.pop %v835
        %v852 = vrcp.pop %v836
        %v853 = vrcp.pop %v837
        %v854 = vrcp.pop %v838
        %v855 = vrcp.pop %v839
        %v856 = vrcp.pop %v840
        %v857 = vrcp.pop %v841
        %v858 = vrcp.pop %v842
        %v859 = vrcp.pop %v843
        %v860 = vrcp.pop %v844
        %v861 = vrcp.pop %v845
        %v862 = vrcp.pop %v846
        %v863 = vrcp.pop %v847
        %v864 = vrcp.pop %v848
        %v865 = vmul.f32 %v833, %v849
        %v866 = vmul.f32 %v834, %v850
        %v867 = vmul.f32 %v835, %v851
        %v868 = vmul.f32 %v836, %v852
        %v869 = vmul.f32 %v837, %v853
        %v870 = vmul.f32 %v838, %v854
        %v871 = vmul.f32 %v839, %v855
        %v872 = vmul.f32 %v840, %v856
        %v873 = vmul.f32 %v841, %v857
        %v874 = vmul.f32 %v842, %v858
        %v875 = vmul.f32 %v843, %v859
        %v876 = vmul.f32 %v844, %v860
        %v877 = vmul.f32 %v845, %v861
        %v878 = vmul.f32 %v846, %v862
        %v879 = vmul.f32 %v847, %v863
        %v880 = vmul.f32 %v848, %v864
        %v881 = vsub.f32 2.0, %v865
        %v882 = vsub.f32 2.0, %v866
        %v883 = vsub.f32 2.0, %v867
        %v884 = vsub.f32 2.0, %v868
        %v885 = vsub.f32 2.0, %v869
        %v886 = vsub.f32 2.0, %v870
        %v887 = vsub.f32 2.0, %v871
        %v888 = vsub.f32 2.0, %v872
        %v889 = vsub.f32 2.0, %v873
        %v890 = vsub.f32 2.0, %v874
        %v891 = vsub.f32 2.0, %v875
        %v892 = vsub.f32 2.0, %v876
        %v893 = vsub.f32 2.0, %v877
        %v894 = vsub.f32 2.0, %v878
        %v895 = vsub.f32 2.0, %v879
        %v896 = vsub.f32 2.0, %v880
        %v897 = vmul.f32 %v849, %v881
        %v898 = vmul.f32 %v850, %v882
        %v899 = vmul.f32 %v851, %v883
        %v900 = vmul.f32 %v852, %v884
        %v901 = vmul.f32 %v853, %v885
        %v902 = vmul.f32 %v854, %v886
        %v903 = vmul.f32 %v855, %v887
        %v904 = vmul.f32 %v856, %v888
        %v905 = vmul.f32 %v857, %v889
        %v906 = vmul.f32 %v858, %v890
        %v907 = vmul.f32 %v859, %v891
        %v908 = vmul.f32 %v860, %v892
        %v909 = vmul.f32 %v861, %v893
        %v910 = vmul.f32 %v862, %v894
        %v911 = vmul.f32 %v863, %v895
        %v912 = vmul.f32 %v864, %v896
        %v913 = vpack.c.bf16 %v726, %v722
        %v914 = vpack.c.bf16 %v728, %v724
        %v915 = vpack.c.bf16 %v734, %v730
        %v916 = vpack.c.bf16 %v736, %v732
        %v917 = vpack.c.bf16 %v742, %v738
        %v918 = vpack.c.bf16 %v744, %v740
        %v919 = vpack.c.bf16 %v750, %v746
        %v920 = vpack.c.bf16 %v752, %v748
        %v921 = vpack.c.bf16 %v758, %v754
        %v922 = vpack.c.bf16 %v760, %v756
        %v923 = vpack.c.bf16 %v766, %v762
        %v924 = vpack.c.bf16 %v768, %v764
        %v925 = vpack.c.bf16 %v774, %v770
        %v926 = vpack.c.bf16 %v776, %v772
        %v927 = vpack.c.bf16 %v782, %v778
        %v928 = vpack.c.bf16 %v784, %v780
        %v961 = vunpack.c.l.b16 %v356
        %v962 = vunpack.c.l.b16 %v357
        %v963 = vunpack.c.l.b16 %v358
        %v964 = vunpack.c.l.b16 %v359
        %v965 = vunpack.c.l.b16 %v360
        %v966 = vunpack.c.l.b16 %v361
        %v967 = vunpack.c.l.b16 %v362
        %v968 = vunpack.c.l.b16 %v363
        %v969 = vunpack.c.l.b16 %v364
        %v970 = vunpack.c.l.b16 %v365
        %v971 = vunpack.c.l.b16 %v366
        %v972 = vunpack.c.l.b16 %v367
        %v973 = vunpack.c.l.b16 %v368
        %v974 = vunpack.c.l.b16 %v369
        %v975 = vunpack.c.l.b16 %v370
        %v976 = vunpack.c.l.b16 %v371
        %v977 = vunpack.c.l.b16 %v372
        %v978 = vunpack.c.l.b16 %v373
        %v979 = vunpack.c.l.b16 %v374
        %v980 = vunpack.c.l.b16 %v375
        %v981 = vunpack.c.l.b16 %v376
        %v982 = vunpack.c.l.b16 %v377
        %v983 = vunpack.c.l.b16 %v378
        %v984 = vunpack.c.l.b16 %v379
        %v985 = vunpack.c.l.b16 %v380
        %v986 = vunpack.c.l.b16 %v381
        %v987 = vunpack.c.l.b16 %v382
        %v988 = vunpack.c.l.b16 %v383
        %v989 = vunpack.c.l.b16 %v384
        %v990 = vunpack.c.l.b16 %v385
        %v991 = vunpack.c.l.b16 %v386
        %v992 = vunpack.c.l.b16 %v387
        %v993 = vpack.c.b16 %v962, %v961
        %v994 = vpack.c.b16 %v964, %v963
        %v995 = vpack.c.b16 %v966, %v965
        %v996 = vpack.c.b16 %v968, %v967
        %v997 = vpack.c.b16 %v970, %v969
        %v998 = vpack.c.b16 %v972, %v971
        %v999 = vpack.c.b16 %v974, %v973
        %v1000 = vpack.c.b16 %v976, %v975
        %v1001 = vpack.c.b16 %v978, %v977
        %v1002 = vpack.c.b16 %v980, %v979
        %v1003 = vpack.c.b16 %v982, %v981
        %v1004 = vpack.c.b16 %v984, %v983
        %v1005 = vpack.c.b16 %v986, %v985
        %v1006 = vpack.c.b16 %v988, %v987
        %v1007 = vpack.c.b16 %v990, %v989
        %v1008 = vpack.c.b16 %v992, %v991
        %1025 = vmatprep.subr.bf16.mxu0 0
        %1026 = vmatpush1.bf16.msra.mxu0 %v1000
        %1027 = vmatprep.subr.bf16.mxu0 0
        %1028 = vmatpush1.bf16.msra.mxu0 %v999
        %1029 = vmatprep.subr.bf16.mxu0 0
        %1030 = vmatpush1.bf16.msra.mxu0 %v998
        %1031 = vmatprep.subr.bf16.mxu0 0
        %1032 = vmatpush1.bf16.msra.mxu0 %v997
        %1033 = vmatprep.subr.bf16.mxu0 0
        %1034 = vmatpush1.bf16.msra.mxu0 %v996
        %1035 = vmatprep.subr.bf16.mxu0 0
        %1036 = vmatpush1.bf16.msra.mxu0 %v995
        %1037 = vmatprep.subr.bf16.mxu0 0
        %1038 = vmatpush1.bf16.msra.mxu0 %v994
        %1039 = vmatprep.subr.bf16.mxu0 0
        %1040 = vmatpush1.bf16.msra.mxu0 %v993
        %1041 = vmatprep.subr.bf16.mxu0 0
        %1042 = vmatpush2.bf16.msra.mxu0 %v1008
        %1043 = vmatprep.subr.bf16.mxu0 0
        %1044 = vmatpush2.bf16.msra.mxu0 %v1007
        %1045 = vmatprep.subr.bf16.mxu0 0
        %1046 = vmatpush2.bf16.msra.mxu0 %v1006
        %1047 = vmatprep.subr.bf16.mxu0 0
        %1048 = vmatpush2.bf16.msra.mxu0 %v1005
        %1049 = vmatprep.subr.bf16.mxu0 0
        %1050 = vmatpush2.bf16.msra.mxu0 %v1004
        %1051 = vmatprep.subr.bf16.mxu0 0
        %1052 = vmatpush2.bf16.msra.mxu0 %v1003
        %1053 = vmatprep.subr.bf16.mxu0 0
        %1054 = vmatpush2.bf16.msra.mxu0 %v1002
        %1055 = vmatprep.subr.bf16.mxu0 0
        %1056 = vmatpush2.bf16.msra.mxu0 %v1001
        %1057 = vmatprep.mubr.bf16.mxu0 %v914
        %1058 = vmatmul.mubr.bf16.gmra.mxu0 %v913
        %v1059 = vpop.f32.mrf.mxu0
        %v1060 = vadd.f32 0.0, %v1059
        %v1061 = vpop.f32.mrf.mxu0
        %v1062 = vpop.f32.mrf.mxu0
        %v1063 = vadd.f32 0.0, %v1062
        %v1064 = vpop.f32.mrf.mxu0
        %1065 = vmatprep.mubr.bf16.mxu0 %v916
        %1066 = vmatmul.mubr.bf16.gmra.mxu0 %v915
        %v1067 = vpop.f32.mrf.mxu0
        %v1068 = vadd.f32 0.0, %v1067
        %v1069 = vpop.f32.mrf.mxu0
        %v1070 = vpop.f32.mrf.mxu0
        %v1071 = vadd.f32 0.0, %v1070
        %v1072 = vpop.f32.mrf.mxu0
        %1073 = vmatprep.mubr.bf16.mxu0 %v918
        %1074 = vmatmul.mubr.bf16.gmra.mxu0 %v917
        %v1075 = vpop.f32.mrf.mxu0
        %v1076 = vadd.f32 0.0, %v1075
        %v1077 = vpop.f32.mrf.mxu0
        %v1078 = vpop.f32.mrf.mxu0
        %v1079 = vadd.f32 0.0, %v1078
        %v1080 = vpop.f32.mrf.mxu0
        %1081 = vmatprep.mubr.bf16.mxu0 %v920
        %1082 = vmatmul.mubr.bf16.gmra.mxu0 %v919
        %v1083 = vpop.f32.mrf.mxu0
        %v1084 = vadd.f32 0.0, %v1083
        %v1085 = vpop.f32.mrf.mxu0
        %v1086 = vpop.f32.mrf.mxu0
        %v1087 = vadd.f32 0.0, %v1086
        %v1088 = vpop.f32.mrf.mxu0
        %1089 = vmatprep.mubr.bf16.mxu0 %v922
        %1090 = vmatmul.mubr.bf16.gmra.mxu0 %v921
        %v1091 = vpop.f32.mrf.mxu0
        %v1092 = vadd.f32 0.0, %v1091
        %v1093 = vpop.f32.mrf.mxu0
        %v1094 = vpop.f32.mrf.mxu0
        %v1095 = vadd.f32 0.0, %v1094
        %v1096 = vpop.f32.mrf.mxu0
        %1097 = vmatprep.mubr.bf16.mxu0 %v924
        %1098 = vmatmul.mubr.bf16.gmra.mxu0 %v923
        %v1099 = vpop.f32.mrf.mxu0
        %v1100 = vadd.f32 0.0, %v1099
        %v1101 = vpop.f32.mrf.mxu0
        %v1102 = vpop.f32.mrf.mxu0
        %v1103 = vadd.f32 0.0, %v1102
        %v1104 = vpop.f32.mrf.mxu0
        %1105 = vmatprep.mubr.bf16.mxu0 %v926
        %1106 = vmatmul.mubr.bf16.gmra.mxu0 %v925
        %v1107 = vpop.f32.mrf.mxu0
        %v1108 = vadd.f32 0.0, %v1107
        %v1109 = vpop.f32.mrf.mxu0
        %v1110 = vpop.f32.mrf.mxu0
        %v1111 = vadd.f32 0.0, %v1110
        %v1112 = vpop.f32.mrf.mxu0
        %1113 = vmatprep.mubr.bf16.mxu0 %v928
        %1114 = vmatmul.mubr.bf16.gmra.mxu0 %v927
        %v1115 = vpop.f32.mrf.mxu0
        %v1116 = vadd.f32 0.0, %v1115
        %v1117 = vpop.f32.mrf.mxu0
        %v1118 = vpop.f32.mrf.mxu0
        %v1119 = vadd.f32 0.0, %v1118
        %v1120 = vpop.f32.mrf.mxu0
        %1121 = vdwg.mxu0
        %v1122 = vmul.f32 %v1060, %v897
        %v1123 = vmul.f32 %v1063, %v898
        %v1124 = vmul.f32 %v1068, %v899
        %v1125 = vmul.f32 %v1071, %v900
        %v1126 = vmul.f32 %v1076, %v901
        %v1127 = vmul.f32 %v1079, %v902
        %v1128 = vmul.f32 %v1084, %v903
        %v1129 = vmul.f32 %v1087, %v904
        %v1130 = vmul.f32 %v1092, %v905
        %v1131 = vmul.f32 %v1095, %v906
        %v1132 = vmul.f32 %v1100, %v907
        %v1133 = vmul.f32 %v1103, %v908
        %v1134 = vmul.f32 %v1108, %v909
        %v1135 = vmul.f32 %v1111, %v910
        %v1136 = vmul.f32 %v1116, %v911
        %v1137 = vmul.f32 %v1119, %v912
        %v1139 = vlaneseq
        %v1140 = vshrl.u32 %v1139, 7
        %v1141 = vsub.s32 0, %v1140
        %v1142 = vrot.slane %v388, %v1141
        %v1144 = vadd.f32 %v1122, %v1142
        %v1145 = vadd.f32 %v1123, %v1142
        %v1146 = vadd.f32 %v1124, %v1142
        %v1147 = vadd.f32 %v1125, %v1142
        %v1148 = vadd.f32 %v1126, %v1142
        %v1149 = vadd.f32 %v1127, %v1142
        %v1150 = vadd.f32 %v1128, %v1142
        %v1151 = vadd.f32 %v1129, %v1142
        %v1152 = vadd.f32 %v1130, %v1142
        %v1153 = vadd.f32 %v1131, %v1142
        %v1154 = vadd.f32 %v1132, %v1142
        %v1155 = vadd.f32 %v1133, %v1142
        %v1156 = vadd.f32 %v1134, %v1142
        %v1157 = vadd.f32 %v1135, %v1142
        %v1158 = vadd.f32 %v1136, %v1142
        %v1159 = vadd.f32 %v1137, %v1142
        %vm1160 = vcmask 261120
        %1161 = vst.msk [vmem:[%s236] sm:$0xff] %vm1160, %v1144
        %1162 = vst.msk [vmem:[%s236 + $0x8] sm:$0xff] %vm1160, %v1145
        %1163 = vst.msk [vmem:[%s236 + $0x10] sm:$0xff] %vm1160, %v1146
        %1164 = vst.msk [vmem:[%s236 + $0x18] sm:$0xff] %vm1160, %v1147
        %1165 = vst.msk [vmem:[%s236 + $0x20] sm:$0xff] %vm1160, %v1148
        %1166 = vst.msk [vmem:[%s236 + $0x28] sm:$0xff] %vm1160, %v1149
        %1167 = vst.msk [vmem:[%s236 + $0x30] sm:$0xff] %vm1160, %v1150
        %1168 = vst.msk [vmem:[%s236 + $0x38] sm:$0xff] %vm1160, %v1151
        %1169 = vst.msk [vmem:[%s236 + $0x40] sm:$0xff] %vm1160, %v1152
        %1170 = vst.msk [vmem:[%s236 + $0x48] sm:$0xff] %vm1160, %v1153
        %1171 = vst.msk [vmem:[%s236 + $0x50] sm:$0xff] %vm1160, %v1154
        %1172 = vst.msk [vmem:[%s236 + $0x58] sm:$0xff] %vm1160, %v1155
        %1173 = vst.msk [vmem:[%s236 + $0x60] sm:$0xff] %vm1160, %v1156
        %1174 = vst.msk [vmem:[%s236 + $0x68] sm:$0xff] %vm1160, %v1157
        %1175 = vst.msk [vmem:[%s236 + $0x70] sm:$0xff] %vm1160, %v1158
        %1176 = vst.msk [vmem:[%s236 + $0x78] sm:$0xff] %vm1160, %v1159
        %v1177 = vld [vmem:[%s241] sm:$0xff]
        %v1178 = vld [vmem:[%s241 + $0x8] sm:$0xff]
        %v1179 = vld [vmem:[%s241 + $0x10] sm:$0xff]
        %v1180 = vld [vmem:[%s241 + $0x18] sm:$0xff]
        %v1181 = vld [vmem:[%s241 + $0x20] sm:$0xff]
        %v1182 = vld [vmem:[%s241 + $0x28] sm:$0xff]
        %v1183 = vld [vmem:[%s241 + $0x30] sm:$0xff]
        %v1184 = vld [vmem:[%s241 + $0x38] sm:$0xff]
        %v1185 = vld [vmem:[%s241 + $0x40] sm:$0xff]
        %v1186 = vld [vmem:[%s241 + $0x48] sm:$0xff]
        %v1187 = vld [vmem:[%s241 + $0x50] sm:$0xff]
        %v1188 = vld [vmem:[%s241 + $0x58] sm:$0xff]
        %v1189 = vld [vmem:[%s241 + $0x60] sm:$0xff]
        %v1190 = vld [vmem:[%s241 + $0x68] sm:$0xff]
        %v1191 = vld [vmem:[%s241 + $0x70] sm:$0xff]
        %v1192 = vld [vmem:[%s241 + $0x78] sm:$0xff]
        %s1193 = scalar_lea.vmem %s1, 1
        %v1194 = vld [vmem:[%s1193] ss:$4 sm:$0x3]
        %1196 = vset.pattern.permute.xlu0 1
        %1197 = vperm.xlu0 %1196, %v1177
        %v1198 = vpop.permute.xlu0 %1197
        %1201 = vset.pattern.permute.xlu0 1
        %1202 = vperm.xlu0 %1201, %v1178
        %v1203 = vpop.permute.xlu0 %1202
        %1206 = vset.pattern.permute.xlu0 1
        %1207 = vperm.xlu0 %1206, %v1179
        %v1208 = vpop.permute.xlu0 %1207
        %1211 = vset.pattern.permute.xlu0 1
        %1212 = vperm.xlu0 %1211, %v1180
        %v1213 = vpop.permute.xlu0 %1212
        %1216 = vset.pattern.permute.xlu0 1
        %1217 = vperm.xlu0 %1216, %v1181
        %v1218 = vpop.permute.xlu0 %1217
        %1221 = vset.pattern.permute.xlu0 1
        %1222 = vperm.xlu0 %1221, %v1182
        %v1223 = vpop.permute.xlu0 %1222
        %1226 = vset.pattern.permute.xlu0 1
        %1227 = vperm.xlu0 %1226, %v1183
        %v1228 = vpop.permute.xlu0 %1227
        %1231 = vset.pattern.permute.xlu0 1
        %1232 = vperm.xlu0 %1231, %v1184
        %v1233 = vpop.permute.xlu0 %1232
        %1236 = vset.pattern.permute.xlu0 1
        %1237 = vperm.xlu0 %1236, %v1185
        %v1238 = vpop.permute.xlu0 %1237
        %1241 = vset.pattern.permute.xlu0 1
        %1242 = vperm.xlu0 %1241, %v1186
        %v1243 = vpop.permute.xlu0 %1242
        %1246 = vset.pattern.permute.xlu0 1
        %1247 = vperm.xlu0 %1246, %v1187
        %v1248 = vpop.permute.xlu0 %1247
        %1251 = vset.pattern.permute.xlu0 1
        %1252 = vperm.xlu0 %1251, %v1188
        %v1253 = vpop.permute.xlu0 %1252
        %1256 = vset.pattern.permute.xlu0 1
        %1257 = vperm.xlu0 %1256, %v1189
        %v1258 = vpop.permute.xlu0 %1257
        %1261 = vset.pattern.permute.xlu0 1
        %1262 = vperm.xlu0 %1261, %v1190
        %v1263 = vpop.permute.xlu0 %1262
        %1266 = vset.pattern.permute.xlu0 1
        %1267 = vperm.xlu0 %1266, %v1191
        %v1268 = vpop.permute.xlu0 %1267
        %1271 = vset.pattern.permute.xlu0 1
        %1272 = vperm.xlu0 %1271, %v1192
        %v1273 = vpop.permute.xlu0 %1272
        %v1276 = vlaneseq
        %v1277 = vshrl.u32 %v1276, 7
        %v1278 = vsub.s32 0, %v1277
        %v1279 = vrot.slane %v1194, %v1278
        %v1280 = vlaneseq
        %v1281 = vshrl.u32 %v1280, 7
        %v1282 = vsub.s32 1, %v1281
        %v1283 = vrot.slane %v1194, %v1282
        %v1286 = vadd.f32 %v1198, %v1279
        %v1287 = vadd.f32 %v1198, %v1283
        %v1288 = vadd.f32 %v1203, %v1279
        %v1289 = vadd.f32 %v1203, %v1283
        %v1290 = vadd.f32 %v1208, %v1279
        %v1291 = vadd.f32 %v1208, %v1283
        %v1292 = vadd.f32 %v1213, %v1279
        %v1293 = vadd.f32 %v1213, %v1283
        %v1294 = vadd.f32 %v1218, %v1279
        %v1295 = vadd.f32 %v1218, %v1283
        %v1296 = vadd.f32 %v1223, %v1279
        %v1297 = vadd.f32 %v1223, %v1283
        %v1298 = vadd.f32 %v1228, %v1279
        %v1299 = vadd.f32 %v1228, %v1283
        %v1300 = vadd.f32 %v1233, %v1279
        %v1301 = vadd.f32 %v1233, %v1283
        %v1302 = vadd.f32 %v1238, %v1279
        %v1303 = vadd.f32 %v1238, %v1283
        %v1304 = vadd.f32 %v1243, %v1279
        %v1305 = vadd.f32 %v1243, %v1283
        %v1306 = vadd.f32 %v1248, %v1279
        %v1307 = vadd.f32 %v1248, %v1283
        %v1308 = vadd.f32 %v1253, %v1279
        %v1309 = vadd.f32 %v1253, %v1283
        %v1310 = vadd.f32 %v1258, %v1279
        %v1311 = vadd.f32 %v1258, %v1283
        %v1312 = vadd.f32 %v1263, %v1279
        %v1313 = vadd.f32 %v1263, %v1283
        %v1314 = vadd.f32 %v1268, %v1279
        %v1315 = vadd.f32 %v1268, %v1283
        %v1316 = vadd.f32 %v1273, %v1279
        %v1317 = vadd.f32 %v1273, %v1283
        %v1318 = vmul.f32 %v1286, 0.2
        %v1319 = vmul.f32 %v1287, 0.2
        %v1320 = vmul.f32 %v1288, 0.2
        %v1321 = vmul.f32 %v1289, 0.2
        %v1322 = vmul.f32 %v1290, 0.2
        %v1323 = vmul.f32 %v1291, 0.2
        %v1324 = vmul.f32 %v1292, 0.2
        %v1325 = vmul.f32 %v1293, 0.2
        %v1326 = vmul.f32 %v1294, 0.2
        %v1327 = vmul.f32 %v1295, 0.2
        %v1328 = vmul.f32 %v1296, 0.2
        %v1329 = vmul.f32 %v1297, 0.2
        %v1330 = vmul.f32 %v1298, 0.2
        %v1331 = vmul.f32 %v1299, 0.2
        %v1332 = vmul.f32 %v1300, 0.2
        %v1333 = vmul.f32 %v1301, 0.2
        %v1334 = vmul.f32 %v1302, 0.2
        %v1335 = vmul.f32 %v1303, 0.2
        %v1336 = vmul.f32 %v1304, 0.2
        %v1337 = vmul.f32 %v1305, 0.2
        %v1338 = vmul.f32 %v1306, 0.2
        %v1339 = vmul.f32 %v1307, 0.2
        %v1340 = vmul.f32 %v1308, 0.2
        %v1341 = vmul.f32 %v1309, 0.2
        %v1342 = vmul.f32 %v1310, 0.2
        %v1343 = vmul.f32 %v1311, 0.2
        %v1344 = vmul.f32 %v1312, 0.2
        %v1345 = vmul.f32 %v1313, 0.2
        %v1346 = vmul.f32 %v1314, 0.2
        %v1347 = vmul.f32 %v1315, 0.2
        %v1348 = vmul.f32 %v1316, 0.2
        %v1349 = vmul.f32 %v1317, 0.2
        %v1350 = vmax.f32 %v1286, %v1318
        %v1351 = vmax.f32 %v1287, %v1319
        %v1352 = vmax.f32 %v1288, %v1320
        %v1353 = vmax.f32 %v1289, %v1321
        %v1354 = vmax.f32 %v1290, %v1322
        %v1355 = vmax.f32 %v1291, %v1323
        %v1356 = vmax.f32 %v1292, %v1324
        %v1357 = vmax.f32 %v1293, %v1325
        %v1358 = vmax.f32 %v1294, %v1326
        %v1359 = vmax.f32 %v1295, %v1327
        %v1360 = vmax.f32 %v1296, %v1328
        %v1361 = vmax.f32 %v1297, %v1329
        %v1362 = vmax.f32 %v1298, %v1330
        %v1363 = vmax.f32 %v1299, %v1331
        %v1364 = vmax.f32 %v1300, %v1332
        %v1365 = vmax.f32 %v1301, %v1333
        %v1366 = vmax.f32 %v1302, %v1334
        %v1367 = vmax.f32 %v1303, %v1335
        %v1368 = vmax.f32 %v1304, %v1336
        %v1369 = vmax.f32 %v1305, %v1337
        %v1370 = vmax.f32 %v1306, %v1338
        %v1371 = vmax.f32 %v1307, %v1339
        %v1372 = vmax.f32 %v1308, %v1340
        %v1373 = vmax.f32 %v1309, %v1341
        %v1374 = vmax.f32 %v1310, %v1342
        %v1375 = vmax.f32 %v1311, %v1343
        %v1376 = vmax.f32 %v1312, %v1344
        %v1377 = vmax.f32 %v1313, %v1345
        %v1378 = vmax.f32 %v1314, %v1346
        %v1379 = vmax.f32 %v1315, %v1347
        %v1380 = vmax.f32 %v1316, %v1348
        %v1381 = vmax.f32 %v1317, %v1349
        %v1382 = vsel %vm324, %v1350, -1e+30
        %v1383 = vsel %vm325, %v1351, -1e+30
        %v1384 = vsel %vm326, %v1352, -1e+30
        %v1385 = vsel %vm327, %v1353, -1e+30
        %v1386 = vsel %vm328, %v1354, -1e+30
        %v1387 = vsel %vm329, %v1355, -1e+30
        %v1388 = vsel %vm330, %v1356, -1e+30
        %v1389 = vsel %vm331, %v1357, -1e+30
        %v1390 = vsel %vm332, %v1358, -1e+30
        %v1391 = vsel %vm333, %v1359, -1e+30
        %v1392 = vsel %vm334, %v1360, -1e+30
        %v1393 = vsel %vm335, %v1361, -1e+30
        %v1394 = vsel %vm336, %v1362, -1e+30
        %v1395 = vsel %vm337, %v1363, -1e+30
        %v1396 = vsel %vm338, %v1364, -1e+30
        %v1397 = vsel %vm339, %v1365, -1e+30
        %v1398 = vsel %vm340, %v1366, -1e+30
        %v1399 = vsel %vm341, %v1367, -1e+30
        %v1400 = vsel %vm342, %v1368, -1e+30
        %v1401 = vsel %vm343, %v1369, -1e+30
        %v1402 = vsel %vm344, %v1370, -1e+30
        %v1403 = vsel %vm345, %v1371, -1e+30
        %v1404 = vsel %vm346, %v1372, -1e+30
        %v1405 = vsel %vm347, %v1373, -1e+30
        %v1406 = vsel %vm348, %v1374, -1e+30
        %v1407 = vsel %vm349, %v1375, -1e+30
        %v1408 = vsel %vm350, %v1376, -1e+30
        %v1409 = vsel %vm351, %v1377, -1e+30
        %v1410 = vsel %vm352, %v1378, -1e+30
        %v1411 = vsel %vm353, %v1379, -1e+30
        %v1412 = vsel %vm354, %v1380, -1e+30
        %v1413 = vsel %vm355, %v1381, -1e+30
        %v1414 = vmax.f32 %v1382, %v1383
        %1415 = vmax.xlane.f32.xlu0 %v1414
        %v1416 = vpop.xlane.xlu0 %1415
        %v1417 = vmax.f32 %v1384, %v1385
        %1418 = vmax.xlane.f32.xlu0 %v1417
        %v1419 = vpop.xlane.xlu0 %1418
        %v1420 = vmax.f32 %v1386, %v1387
        %1421 = vmax.xlane.f32.xlu0 %v1420
        %v1422 = vpop.xlane.xlu0 %1421
        %v1423 = vmax.f32 %v1388, %v1389
        %1424 = vmax.xlane.f32.xlu0 %v1423
        %v1425 = vpop.xlane.xlu0 %1424
        %v1426 = vmax.f32 %v1390, %v1391
        %1427 = vmax.xlane.f32.xlu0 %v1426
        %v1428 = vpop.xlane.xlu0 %1427
        %v1429 = vmax.f32 %v1392, %v1393
        %1430 = vmax.xlane.f32.xlu0 %v1429
        %v1431 = vpop.xlane.xlu0 %1430
        %v1432 = vmax.f32 %v1394, %v1395
        %1433 = vmax.xlane.f32.xlu0 %v1432
        %v1434 = vpop.xlane.xlu0 %1433
        %v1435 = vmax.f32 %v1396, %v1397
        %1436 = vmax.xlane.f32.xlu0 %v1435
        %v1437 = vpop.xlane.xlu0 %1436
        %v1438 = vmax.f32 %v1398, %v1399
        %1439 = vmax.xlane.f32.xlu0 %v1438
        %v1440 = vpop.xlane.xlu0 %1439
        %v1441 = vmax.f32 %v1400, %v1401
        %1442 = vmax.xlane.f32.xlu0 %v1441
        %v1443 = vpop.xlane.xlu0 %1442
        %v1444 = vmax.f32 %v1402, %v1403
        %1445 = vmax.xlane.f32.xlu0 %v1444
        %v1446 = vpop.xlane.xlu0 %1445
        %v1447 = vmax.f32 %v1404, %v1405
        %1448 = vmax.xlane.f32.xlu0 %v1447
        %v1449 = vpop.xlane.xlu0 %1448
        %v1450 = vmax.f32 %v1406, %v1407
        %1451 = vmax.xlane.f32.xlu0 %v1450
        %v1452 = vpop.xlane.xlu0 %1451
        %v1453 = vmax.f32 %v1408, %v1409
        %1454 = vmax.xlane.f32.xlu0 %v1453
        %v1455 = vpop.xlane.xlu0 %1454
        %v1456 = vmax.f32 %v1410, %v1411
        %1457 = vmax.xlane.f32.xlu0 %v1456
        %v1458 = vpop.xlane.xlu0 %1457
        %v1459 = vmax.f32 %v1412, %v1413
        %1460 = vmax.xlane.f32.xlu0 %v1459
        %v1461 = vpop.xlane.xlu0 %1460
        %v1462 = vmax.f32 %v1416, -1e+29
        %v1463 = vmax.f32 %v1419, -1e+29
        %v1464 = vmax.f32 %v1422, -1e+29
        %v1465 = vmax.f32 %v1425, -1e+29
        %v1466 = vmax.f32 %v1428, -1e+29
        %v1467 = vmax.f32 %v1431, -1e+29
        %v1468 = vmax.f32 %v1434, -1e+29
        %v1469 = vmax.f32 %v1437, -1e+29
        %v1470 = vmax.f32 %v1440, -1e+29
        %v1471 = vmax.f32 %v1443, -1e+29
        %v1472 = vmax.f32 %v1446, -1e+29
        %v1473 = vmax.f32 %v1449, -1e+29
        %v1474 = vmax.f32 %v1452, -1e+29
        %v1475 = vmax.f32 %v1455, -1e+29
        %v1476 = vmax.f32 %v1458, -1e+29
        %v1477 = vmax.f32 %v1461, -1e+29
        %v1478 = vsub.f32 %v1382, %v1462
        %v1479 = vsub.f32 %v1383, %v1462
        %v1480 = vsub.f32 %v1384, %v1463
        %v1481 = vsub.f32 %v1385, %v1463
        %v1482 = vsub.f32 %v1386, %v1464
        %v1483 = vsub.f32 %v1387, %v1464
        %v1484 = vsub.f32 %v1388, %v1465
        %v1485 = vsub.f32 %v1389, %v1465
        %v1486 = vsub.f32 %v1390, %v1466
        %v1487 = vsub.f32 %v1391, %v1466
        %v1488 = vsub.f32 %v1392, %v1467
        %v1489 = vsub.f32 %v1393, %v1467
        %v1490 = vsub.f32 %v1394, %v1468
        %v1491 = vsub.f32 %v1395, %v1468
        %v1492 = vsub.f32 %v1396, %v1469
        %v1493 = vsub.f32 %v1397, %v1469
        %v1494 = vsub.f32 %v1398, %v1470
        %v1495 = vsub.f32 %v1399, %v1470
        %v1496 = vsub.f32 %v1400, %v1471
        %v1497 = vsub.f32 %v1401, %v1471
        %v1498 = vsub.f32 %v1402, %v1472
        %v1499 = vsub.f32 %v1403, %v1472
        %v1500 = vsub.f32 %v1404, %v1473
        %v1501 = vsub.f32 %v1405, %v1473
        %v1502 = vsub.f32 %v1406, %v1474
        %v1503 = vsub.f32 %v1407, %v1474
        %v1504 = vsub.f32 %v1408, %v1475
        %v1505 = vsub.f32 %v1409, %v1475
        %v1506 = vsub.f32 %v1410, %v1476
        %v1507 = vsub.f32 %v1411, %v1476
        %v1508 = vsub.f32 %v1412, %v1477
        %v1509 = vsub.f32 %v1413, %v1477
        %v1510 = vmul.f32 %v1478, 1.442695
        %v1511 = vpow.pop %v1510
        %v1512 = vmul.f32 %v1479, 1.442695
        %v1513 = vpow.pop %v1512
        %v1514 = vmul.f32 %v1480, 1.442695
        %v1515 = vpow.pop %v1514
        %v1516 = vmul.f32 %v1481, 1.442695
        %v1517 = vpow.pop %v1516
        %v1518 = vmul.f32 %v1482, 1.442695
        %v1519 = vpow.pop %v1518
        %v1520 = vmul.f32 %v1483, 1.442695
        %v1521 = vpow.pop %v1520
        %v1522 = vmul.f32 %v1484, 1.442695
        %v1523 = vpow.pop %v1522
        %v1524 = vmul.f32 %v1485, 1.442695
        %v1525 = vpow.pop %v1524
        %v1526 = vmul.f32 %v1486, 1.442695
        %v1527 = vpow.pop %v1526
        %v1528 = vmul.f32 %v1487, 1.442695
        %v1529 = vpow.pop %v1528
        %v1530 = vmul.f32 %v1488, 1.442695
        %v1531 = vpow.pop %v1530
        %v1532 = vmul.f32 %v1489, 1.442695
        %v1533 = vpow.pop %v1532
        %v1534 = vmul.f32 %v1490, 1.442695
        %v1535 = vpow.pop %v1534
        %v1536 = vmul.f32 %v1491, 1.442695
        %v1537 = vpow.pop %v1536
        %v1538 = vmul.f32 %v1492, 1.442695
        %v1539 = vpow.pop %v1538
        %v1540 = vmul.f32 %v1493, 1.442695
        %v1541 = vpow.pop %v1540
        %v1542 = vmul.f32 %v1494, 1.442695
        %v1543 = vpow.pop %v1542
        %v1544 = vmul.f32 %v1495, 1.442695
        %v1545 = vpow.pop %v1544
        %v1546 = vmul.f32 %v1496, 1.442695
        %v1547 = vpow.pop %v1546
        %v1548 = vmul.f32 %v1497, 1.442695
        %v1549 = vpow.pop %v1548
        %v1550 = vmul.f32 %v1498, 1.442695
        %v1551 = vpow.pop %v1550
        %v1552 = vmul.f32 %v1499, 1.442695
        %v1553 = vpow.pop %v1552
        %v1554 = vmul.f32 %v1500, 1.442695
        %v1555 = vpow.pop %v1554
        %v1556 = vmul.f32 %v1501, 1.442695
        %v1557 = vpow.pop %v1556
        %v1558 = vmul.f32 %v1502, 1.442695
        %v1559 = vpow.pop %v1558
        %v1560 = vmul.f32 %v1503, 1.442695
        %v1561 = vpow.pop %v1560
        %v1562 = vmul.f32 %v1504, 1.442695
        %v1563 = vpow.pop %v1562
        %v1564 = vmul.f32 %v1505, 1.442695
        %v1565 = vpow.pop %v1564
        %v1566 = vmul.f32 %v1506, 1.442695
        %v1567 = vpow.pop %v1566
        %v1568 = vmul.f32 %v1507, 1.442695
        %v1569 = vpow.pop %v1568
        %v1570 = vmul.f32 %v1508, 1.442695
        %v1571 = vpow.pop %v1570
        %v1572 = vmul.f32 %v1509, 1.442695
        %v1573 = vpow.pop %v1572
        %v1574 = vadd.f32 %v1511, %v1513
        %1575 = vadd.xlane.f32.xlu0 %v1574
        %v1576 = vpop.xlane.xlu0 %1575
        %v1577 = vadd.f32 %v1515, %v1517
        %1578 = vadd.xlane.f32.xlu0 %v1577
        %v1579 = vpop.xlane.xlu0 %1578
        %v1580 = vadd.f32 %v1519, %v1521
        %1581 = vadd.xlane.f32.xlu0 %v1580
        %v1582 = vpop.xlane.xlu0 %1581
        %v1583 = vadd.f32 %v1523, %v1525
        %1584 = vadd.xlane.f32.xlu0 %v1583
        %v1585 = vpop.xlane.xlu0 %1584
        %v1586 = vadd.f32 %v1527, %v1529
        %1587 = vadd.xlane.f32.xlu0 %v1586
        %v1588 = vpop.xlane.xlu0 %1587
        %v1589 = vadd.f32 %v1531, %v1533
        %1590 = vadd.xlane.f32.xlu0 %v1589
        %v1591 = vpop.xlane.xlu0 %1590
        %v1592 = vadd.f32 %v1535, %v1537
        %1593 = vadd.xlane.f32.xlu0 %v1592
        %v1594 = vpop.xlane.xlu0 %1593
        %v1595 = vadd.f32 %v1539, %v1541
        %1596 = vadd.xlane.f32.xlu0 %v1595
        %v1597 = vpop.xlane.xlu0 %1596
        %v1598 = vadd.f32 %v1543, %v1545
        %1599 = vadd.xlane.f32.xlu0 %v1598
        %v1600 = vpop.xlane.xlu0 %1599
        %v1601 = vadd.f32 %v1547, %v1549
        %1602 = vadd.xlane.f32.xlu0 %v1601
        %v1603 = vpop.xlane.xlu0 %1602
        %v1604 = vadd.f32 %v1551, %v1553
        %1605 = vadd.xlane.f32.xlu0 %v1604
        %v1606 = vpop.xlane.xlu0 %1605
        %v1607 = vadd.f32 %v1555, %v1557
        %1608 = vadd.xlane.f32.xlu0 %v1607
        %v1609 = vpop.xlane.xlu0 %1608
        %v1610 = vadd.f32 %v1559, %v1561
        %1611 = vadd.xlane.f32.xlu0 %v1610
        %v1612 = vpop.xlane.xlu0 %1611
        %v1613 = vadd.f32 %v1563, %v1565
        %1614 = vadd.xlane.f32.xlu0 %v1613
        %v1615 = vpop.xlane.xlu0 %1614
        %v1616 = vadd.f32 %v1567, %v1569
        %1617 = vadd.xlane.f32.xlu0 %v1616
        %v1618 = vpop.xlane.xlu0 %1617
        %v1619 = vadd.f32 %v1571, %v1573
        %1620 = vadd.xlane.f32.xlu0 %v1619
        %v1621 = vpop.xlane.xlu0 %1620
        %v1622 = vmax.f32 %v1576, 1e-12
        %v1623 = vmax.f32 %v1579, 1e-12
        %v1624 = vmax.f32 %v1582, 1e-12
        %v1625 = vmax.f32 %v1585, 1e-12
        %v1626 = vmax.f32 %v1588, 1e-12
        %v1627 = vmax.f32 %v1591, 1e-12
        %v1628 = vmax.f32 %v1594, 1e-12
        %v1629 = vmax.f32 %v1597, 1e-12
        %v1630 = vmax.f32 %v1600, 1e-12
        %v1631 = vmax.f32 %v1603, 1e-12
        %v1632 = vmax.f32 %v1606, 1e-12
        %v1633 = vmax.f32 %v1609, 1e-12
        %v1634 = vmax.f32 %v1612, 1e-12
        %v1635 = vmax.f32 %v1615, 1e-12
        %v1636 = vmax.f32 %v1618, 1e-12
        %v1637 = vmax.f32 %v1621, 1e-12
        %v1638 = vrcp.pop %v1622
        %v1639 = vrcp.pop %v1623
        %v1640 = vrcp.pop %v1624
        %v1641 = vrcp.pop %v1625
        %v1642 = vrcp.pop %v1626
        %v1643 = vrcp.pop %v1627
        %v1644 = vrcp.pop %v1628
        %v1645 = vrcp.pop %v1629
        %v1646 = vrcp.pop %v1630
        %v1647 = vrcp.pop %v1631
        %v1648 = vrcp.pop %v1632
        %v1649 = vrcp.pop %v1633
        %v1650 = vrcp.pop %v1634
        %v1651 = vrcp.pop %v1635
        %v1652 = vrcp.pop %v1636
        %v1653 = vrcp.pop %v1637
        %v1654 = vmul.f32 %v1622, %v1638
        %v1655 = vmul.f32 %v1623, %v1639
        %v1656 = vmul.f32 %v1624, %v1640
        %v1657 = vmul.f32 %v1625, %v1641
        %v1658 = vmul.f32 %v1626, %v1642
        %v1659 = vmul.f32 %v1627, %v1643
        %v1660 = vmul.f32 %v1628, %v1644
        %v1661 = vmul.f32 %v1629, %v1645
        %v1662 = vmul.f32 %v1630, %v1646
        %v1663 = vmul.f32 %v1631, %v1647
        %v1664 = vmul.f32 %v1632, %v1648
        %v1665 = vmul.f32 %v1633, %v1649
        %v1666 = vmul.f32 %v1634, %v1650
        %v1667 = vmul.f32 %v1635, %v1651
        %v1668 = vmul.f32 %v1636, %v1652
        %v1669 = vmul.f32 %v1637, %v1653
        %v1670 = vsub.f32 2.0, %v1654
        %v1671 = vsub.f32 2.0, %v1655
        %v1672 = vsub.f32 2.0, %v1656
        %v1673 = vsub.f32 2.0, %v1657
        %v1674 = vsub.f32 2.0, %v1658
        %v1675 = vsub.f32 2.0, %v1659
        %v1676 = vsub.f32 2.0, %v1660
        %v1677 = vsub.f32 2.0, %v1661
        %v1678 = vsub.f32 2.0, %v1662
        %v1679 = vsub.f32 2.0, %v1663
        %v1680 = vsub.f32 2.0, %v1664
        %v1681 = vsub.f32 2.0, %v1665
        %v1682 = vsub.f32 2.0, %v1666
        %v1683 = vsub.f32 2.0, %v1667
        %v1684 = vsub.f32 2.0, %v1668
        %v1685 = vsub.f32 2.0, %v1669
        %v1686 = vmul.f32 %v1638, %v1670
        %v1687 = vmul.f32 %v1639, %v1671
        %v1688 = vmul.f32 %v1640, %v1672
        %v1689 = vmul.f32 %v1641, %v1673
        %v1690 = vmul.f32 %v1642, %v1674
        %v1691 = vmul.f32 %v1643, %v1675
        %v1692 = vmul.f32 %v1644, %v1676
        %v1693 = vmul.f32 %v1645, %v1677
        %v1694 = vmul.f32 %v1646, %v1678
        %v1695 = vmul.f32 %v1647, %v1679
        %v1696 = vmul.f32 %v1648, %v1680
        %v1697 = vmul.f32 %v1649, %v1681
        %v1698 = vmul.f32 %v1650, %v1682
        %v1699 = vmul.f32 %v1651, %v1683
        %v1700 = vmul.f32 %v1652, %v1684
        %v1701 = vmul.f32 %v1653, %v1685
        %v1702 = vpack.c.bf16 %v1515, %v1511
        %v1703 = vpack.c.bf16 %v1517, %v1513
        %v1704 = vpack.c.bf16 %v1523, %v1519
        %v1705 = vpack.c.bf16 %v1525, %v1521
        %v1706 = vpack.c.bf16 %v1531, %v1527
        %v1707 = vpack.c.bf16 %v1533, %v1529
        %v1708 = vpack.c.bf16 %v1539, %v1535
        %v1709 = vpack.c.bf16 %v1541, %v1537
        %v1710 = vpack.c.bf16 %v1547, %v1543
        %v1711 = vpack.c.bf16 %v1549, %v1545
        %v1712 = vpack.c.bf16 %v1555, %v1551
        %v1713 = vpack.c.bf16 %v1557, %v1553
        %v1714 = vpack.c.bf16 %v1563, %v1559
        %v1715 = vpack.c.bf16 %v1565, %v1561
        %v1716 = vpack.c.bf16 %v1571, %v1567
        %v1717 = vpack.c.bf16 %v1573, %v1569
        %1718 = vrot.lane.b32.xlu0 %v993, 96
        %v1719 = vpop.permute.xlu0 %1718
        %1720 = vrot.lane.b32.xlu0 %v994, 96
        %v1721 = vpop.permute.xlu0 %1720
        %1722 = vrot.lane.b32.xlu0 %v995, 96
        %v1723 = vpop.permute.xlu0 %1722
        %1724 = vrot.lane.b32.xlu0 %v996, 96
        %v1725 = vpop.permute.xlu0 %1724
        %1726 = vrot.lane.b32.xlu0 %v997, 96
        %v1727 = vpop.permute.xlu0 %1726
        %1728 = vrot.lane.b32.xlu0 %v998, 96
        %v1729 = vpop.permute.xlu0 %1728
        %1730 = vrot.lane.b32.xlu0 %v999, 96
        %v1731 = vpop.permute.xlu0 %1730
        %1732 = vrot.lane.b32.xlu0 %v1000, 96
        %v1733 = vpop.permute.xlu0 %1732
        %1734 = vrot.lane.b32.xlu0 %v1001, 96
        %v1735 = vpop.permute.xlu0 %1734
        %1736 = vrot.lane.b32.xlu0 %v1002, 96
        %v1737 = vpop.permute.xlu0 %1736
        %1738 = vrot.lane.b32.xlu0 %v1003, 96
        %v1739 = vpop.permute.xlu0 %1738
        %1740 = vrot.lane.b32.xlu0 %v1004, 96
        %v1741 = vpop.permute.xlu0 %1740
        %1742 = vrot.lane.b32.xlu0 %v1005, 96
        %v1743 = vpop.permute.xlu0 %1742
        %1744 = vrot.lane.b32.xlu0 %v1006, 96
        %v1745 = vpop.permute.xlu0 %1744
        %1746 = vrot.lane.b32.xlu0 %v1007, 96
        %v1747 = vpop.permute.xlu0 %1746
        %1748 = vrot.lane.b32.xlu0 %v1008, 96
        %v1749 = vpop.permute.xlu0 %1748
        %1766 = vmatprep.subr.bf16.mxu0 0
        %1767 = vmatpush1.bf16.msra.mxu0 %v1733
        %1768 = vmatprep.subr.bf16.mxu0 0
        %1769 = vmatpush1.bf16.msra.mxu0 %v1731
        %1770 = vmatprep.subr.bf16.mxu0 0
        %1771 = vmatpush1.bf16.msra.mxu0 %v1729
        %1772 = vmatprep.subr.bf16.mxu0 0
        %1773 = vmatpush1.bf16.msra.mxu0 %v1727
        %1774 = vmatprep.subr.bf16.mxu0 0
        %1775 = vmatpush1.bf16.msra.mxu0 %v1725
        %1776 = vmatprep.subr.bf16.mxu0 0
        %1777 = vmatpush1.bf16.msra.mxu0 %v1723
        %1778 = vmatprep.subr.bf16.mxu0 0
        %1779 = vmatpush1.bf16.msra.mxu0 %v1721
        %1780 = vmatprep.subr.bf16.mxu0 0
        %1781 = vmatpush1.bf16.msra.mxu0 %v1719
        %1782 = vmatprep.subr.bf16.mxu0 0
        %1783 = vmatpush2.bf16.msra.mxu0 %v1749
        %1784 = vmatprep.subr.bf16.mxu0 0
        %1785 = vmatpush2.bf16.msra.mxu0 %v1747
        %1786 = vmatprep.subr.bf16.mxu0 0
        %1787 = vmatpush2.bf16.msra.mxu0 %v1745
        %1788 = vmatprep.subr.bf16.mxu0 0
        %1789 = vmatpush2.bf16.msra.mxu0 %v1743
        %1790 = vmatprep.subr.bf16.mxu0 0
        %1791 = vmatpush2.bf16.msra.mxu0 %v1741
        %1792 = vmatprep.subr.bf16.mxu0 0
        %1793 = vmatpush2.bf16.msra.mxu0 %v1739
        %1794 = vmatprep.subr.bf16.mxu0 0
        %1795 = vmatpush2.bf16.msra.mxu0 %v1737
        %1796 = vmatprep.subr.bf16.mxu0 0
        %1797 = vmatpush2.bf16.msra.mxu0 %v1735
        %1798 = vmatprep.mubr.bf16.mxu0 %v1703
        %1799 = vmatmul.mubr.bf16.gmra.mxu0 %v1702
        %v1800 = vpop.f32.mrf.mxu0
        %v1801 = vadd.f32 0.0, %v1800
        %v1802 = vpop.f32.mrf.mxu0
        %v1803 = vpop.f32.mrf.mxu0
        %v1804 = vadd.f32 0.0, %v1803
        %v1805 = vpop.f32.mrf.mxu0
        %1806 = vmatprep.mubr.bf16.mxu0 %v1705
        %1807 = vmatmul.mubr.bf16.gmra.mxu0 %v1704
        %v1808 = vpop.f32.mrf.mxu0
        %v1809 = vadd.f32 0.0, %v1808
        %v1810 = vpop.f32.mrf.mxu0
        %v1811 = vpop.f32.mrf.mxu0
        %v1812 = vadd.f32 0.0, %v1811
        %v1813 = vpop.f32.mrf.mxu0
        %1814 = vmatprep.mubr.bf16.mxu0 %v1707
        %1815 = vmatmul.mubr.bf16.gmra.mxu0 %v1706
        %v1816 = vpop.f32.mrf.mxu0
        %v1817 = vadd.f32 0.0, %v1816
        %v1818 = vpop.f32.mrf.mxu0
        %v1819 = vpop.f32.mrf.mxu0
        %v1820 = vadd.f32 0.0, %v1819
        %v1821 = vpop.f32.mrf.mxu0
        %1822 = vmatprep.mubr.bf16.mxu0 %v1709
        %1823 = vmatmul.mubr.bf16.gmra.mxu0 %v1708
        %v1824 = vpop.f32.mrf.mxu0
        %v1825 = vadd.f32 0.0, %v1824
        %v1826 = vpop.f32.mrf.mxu0
        %v1827 = vpop.f32.mrf.mxu0
        %v1828 = vadd.f32 0.0, %v1827
        %v1829 = vpop.f32.mrf.mxu0
        %1830 = vmatprep.mubr.bf16.mxu0 %v1711
        %1831 = vmatmul.mubr.bf16.gmra.mxu0 %v1710
        %v1832 = vpop.f32.mrf.mxu0
        %v1833 = vadd.f32 0.0, %v1832
        %v1834 = vpop.f32.mrf.mxu0
        %v1835 = vpop.f32.mrf.mxu0
        %v1836 = vadd.f32 0.0, %v1835
        %v1837 = vpop.f32.mrf.mxu0
        %1838 = vmatprep.mubr.bf16.mxu0 %v1713
        %1839 = vmatmul.mubr.bf16.gmra.mxu0 %v1712
        %v1840 = vpop.f32.mrf.mxu0
        %v1841 = vadd.f32 0.0, %v1840
        %v1842 = vpop.f32.mrf.mxu0
        %v1843 = vpop.f32.mrf.mxu0
        %v1844 = vadd.f32 0.0, %v1843
        %v1845 = vpop.f32.mrf.mxu0
        %1846 = vmatprep.mubr.bf16.mxu0 %v1715
        %1847 = vmatmul.mubr.bf16.gmra.mxu0 %v1714
        %v1848 = vpop.f32.mrf.mxu0
        %v1849 = vadd.f32 0.0, %v1848
        %v1850 = vpop.f32.mrf.mxu0
        %v1851 = vpop.f32.mrf.mxu0
        %v1852 = vadd.f32 0.0, %v1851
        %v1853 = vpop.f32.mrf.mxu0
        %1854 = vmatprep.mubr.bf16.mxu0 %v1717
        %1855 = vmatmul.mubr.bf16.gmra.mxu0 %v1716
        %v1856 = vpop.f32.mrf.mxu0
        %v1857 = vadd.f32 0.0, %v1856
        %v1858 = vpop.f32.mrf.mxu0
        %v1859 = vpop.f32.mrf.mxu0
        %v1860 = vadd.f32 0.0, %v1859
        %v1861 = vpop.f32.mrf.mxu0
        %1862 = vdwg.mxu0
        %v1863 = vmul.f32 %v1801, %v1686
        %v1864 = vmul.f32 %v1804, %v1687
        %v1865 = vmul.f32 %v1809, %v1688
        %v1866 = vmul.f32 %v1812, %v1689
        %v1867 = vmul.f32 %v1817, %v1690
        %v1868 = vmul.f32 %v1820, %v1691
        %v1869 = vmul.f32 %v1825, %v1692
        %v1870 = vmul.f32 %v1828, %v1693
        %v1871 = vmul.f32 %v1833, %v1694
        %v1872 = vmul.f32 %v1836, %v1695
        %v1873 = vmul.f32 %v1841, %v1696
        %v1874 = vmul.f32 %v1844, %v1697
        %v1875 = vmul.f32 %v1849, %v1698
        %v1876 = vmul.f32 %v1852, %v1699
        %v1877 = vmul.f32 %v1857, %v1700
        %v1878 = vmul.f32 %v1860, %v1701
        %1879 = vrot.lane.b32.xlu0 %v1142, 96
        %v1880 = vpop.permute.xlu0 %1879
        %v1882 = vadd.f32 %v1863, %v1880
        %v1883 = vadd.f32 %v1864, %v1880
        %v1884 = vadd.f32 %v1865, %v1880
        %v1885 = vadd.f32 %v1866, %v1880
        %v1886 = vadd.f32 %v1867, %v1880
        %v1887 = vadd.f32 %v1868, %v1880
        %v1888 = vadd.f32 %v1869, %v1880
        %v1889 = vadd.f32 %v1870, %v1880
        %v1890 = vadd.f32 %v1871, %v1880
        %v1891 = vadd.f32 %v1872, %v1880
        %v1892 = vadd.f32 %v1873, %v1880
        %v1893 = vadd.f32 %v1874, %v1880
        %v1894 = vadd.f32 %v1875, %v1880
        %v1895 = vadd.f32 %v1876, %v1880
        %v1896 = vadd.f32 %v1877, %v1880
        %v1897 = vadd.f32 %v1878, %v1880
        %1914 = vrot.lane.b32.xlu0 %v1882, 32
        %v1915 = vpop.permute.xlu0 %1914
        %1916 = vrot.lane.b32.xlu0 %v1883, 32
        %v1917 = vpop.permute.xlu0 %1916
        %1918 = vrot.lane.b32.xlu0 %v1884, 32
        %v1919 = vpop.permute.xlu0 %1918
        %1920 = vrot.lane.b32.xlu0 %v1885, 32
        %v1921 = vpop.permute.xlu0 %1920
        %1922 = vrot.lane.b32.xlu0 %v1886, 32
        %v1923 = vpop.permute.xlu0 %1922
        %1924 = vrot.lane.b32.xlu0 %v1887, 32
        %v1925 = vpop.permute.xlu0 %1924
        %1926 = vrot.lane.b32.xlu0 %v1888, 32
        %v1927 = vpop.permute.xlu0 %1926
        %1928 = vrot.lane.b32.xlu0 %v1889, 32
        %v1929 = vpop.permute.xlu0 %1928
        %1930 = vrot.lane.b32.xlu0 %v1890, 32
        %v1931 = vpop.permute.xlu0 %1930
        %1932 = vrot.lane.b32.xlu0 %v1891, 32
        %v1933 = vpop.permute.xlu0 %1932
        %1934 = vrot.lane.b32.xlu0 %v1892, 32
        %v1935 = vpop.permute.xlu0 %1934
        %1936 = vrot.lane.b32.xlu0 %v1893, 32
        %v1937 = vpop.permute.xlu0 %1936
        %1938 = vrot.lane.b32.xlu0 %v1894, 32
        %v1939 = vpop.permute.xlu0 %1938
        %1940 = vrot.lane.b32.xlu0 %v1895, 32
        %v1941 = vpop.permute.xlu0 %1940
        %1942 = vrot.lane.b32.xlu0 %v1896, 32
        %v1943 = vpop.permute.xlu0 %1942
        %1944 = vrot.lane.b32.xlu0 %v1897, 32
        %v1945 = vpop.permute.xlu0 %1944
        %vm1962 = vcmask 523520
        %1963 = vst.msk [vmem:[%s236] sm:$0xff] %vm1962, %v1915
        %1964 = vst.msk [vmem:[%s236 + $0x8] sm:$0xff] %vm1962, %v1917
        %1965 = vst.msk [vmem:[%s236 + $0x10] sm:$0xff] %vm1962, %v1919
        %1966 = vst.msk [vmem:[%s236 + $0x18] sm:$0xff] %vm1962, %v1921
        %1967 = vst.msk [vmem:[%s236 + $0x20] sm:$0xff] %vm1962, %v1923
        %1968 = vst.msk [vmem:[%s236 + $0x28] sm:$0xff] %vm1962, %v1925
        %1969 = vst.msk [vmem:[%s236 + $0x30] sm:$0xff] %vm1962, %v1927
        %1970 = vst.msk [vmem:[%s236 + $0x38] sm:$0xff] %vm1962, %v1929
        %1971 = vst.msk [vmem:[%s236 + $0x40] sm:$0xff] %vm1962, %v1931
        %1972 = vst.msk [vmem:[%s236 + $0x48] sm:$0xff] %vm1962, %v1933
        %1973 = vst.msk [vmem:[%s236 + $0x50] sm:$0xff] %vm1962, %v1935
        %1974 = vst.msk [vmem:[%s236 + $0x58] sm:$0xff] %vm1962, %v1937
        %1975 = vst.msk [vmem:[%s236 + $0x60] sm:$0xff] %vm1962, %v1939
        %1976 = vst.msk [vmem:[%s236 + $0x68] sm:$0xff] %vm1962, %v1941
        %1977 = vst.msk [vmem:[%s236 + $0x70] sm:$0xff] %vm1962, %v1943
        %1978 = vst.msk [vmem:[%s236 + $0x78] sm:$0xff] %vm1962, %v1945
        %v1979 = vld [vmem:[%s241] sm:$0xff]
        %v1980 = vld [vmem:[%s241 + $0x8] sm:$0xff]
        %v1981 = vld [vmem:[%s241 + $0x10] sm:$0xff]
        %v1982 = vld [vmem:[%s241 + $0x18] sm:$0xff]
        %v1983 = vld [vmem:[%s241 + $0x20] sm:$0xff]
        %v1984 = vld [vmem:[%s241 + $0x28] sm:$0xff]
        %v1985 = vld [vmem:[%s241 + $0x30] sm:$0xff]
        %v1986 = vld [vmem:[%s241 + $0x38] sm:$0xff]
        %v1987 = vld [vmem:[%s241 + $0x40] sm:$0xff]
        %v1988 = vld [vmem:[%s241 + $0x48] sm:$0xff]
        %v1989 = vld [vmem:[%s241 + $0x50] sm:$0xff]
        %v1990 = vld [vmem:[%s241 + $0x58] sm:$0xff]
        %v1991 = vld [vmem:[%s241 + $0x60] sm:$0xff]
        %v1992 = vld [vmem:[%s241 + $0x68] sm:$0xff]
        %v1993 = vld [vmem:[%s241 + $0x70] sm:$0xff]
        %v1994 = vld [vmem:[%s241 + $0x78] sm:$0xff]
        %s1995 = scalar_lea.vmem %s1, 2
        %v1996 = vld [vmem:[%s1995] ss:$4 sm:$0x3]
        %1998 = vset.pattern.permute.xlu0 2
        %1999 = vperm.xlu0 %1998, %v1979
        %v2000 = vpop.permute.xlu0 %1999
        %2003 = vset.pattern.permute.xlu0 2
        %2004 = vperm.xlu0 %2003, %v1980
        %v2005 = vpop.permute.xlu0 %2004
        %2008 = vset.pattern.permute.xlu0 2
        %2009 = vperm.xlu0 %2008, %v1981
        %v2010 = vpop.permute.xlu0 %2009
        %2013 = vset.pattern.permute.xlu0 2
        %2014 = vperm.xlu0 %2013, %v1982
        %v2015 = vpop.permute.xlu0 %2014
        %2018 = vset.pattern.permute.xlu0 2
        %2019 = vperm.xlu0 %2018, %v1983
        %v2020 = vpop.permute.xlu0 %2019
        %2023 = vset.pattern.permute.xlu0 2
        %2024 = vperm.xlu0 %2023, %v1984
        %v2025 = vpop.permute.xlu0 %2024
        %2028 = vset.pattern.permute.xlu0 2
        %2029 = vperm.xlu0 %2028, %v1985
        %v2030 = vpop.permute.xlu0 %2029
        %2033 = vset.pattern.permute.xlu0 2
        %2034 = vperm.xlu0 %2033, %v1986
        %v2035 = vpop.permute.xlu0 %2034
        %2038 = vset.pattern.permute.xlu0 2
        %2039 = vperm.xlu0 %2038, %v1987
        %v2040 = vpop.permute.xlu0 %2039
        %2043 = vset.pattern.permute.xlu0 2
        %2044 = vperm.xlu0 %2043, %v1988
        %v2045 = vpop.permute.xlu0 %2044
        %2048 = vset.pattern.permute.xlu0 2
        %2049 = vperm.xlu0 %2048, %v1989
        %v2050 = vpop.permute.xlu0 %2049
        %2053 = vset.pattern.permute.xlu0 2
        %2054 = vperm.xlu0 %2053, %v1990
        %v2055 = vpop.permute.xlu0 %2054
        %2058 = vset.pattern.permute.xlu0 2
        %2059 = vperm.xlu0 %2058, %v1991
        %v2060 = vpop.permute.xlu0 %2059
        %2063 = vset.pattern.permute.xlu0 2
        %2064 = vperm.xlu0 %2063, %v1992
        %v2065 = vpop.permute.xlu0 %2064
        %2068 = vset.pattern.permute.xlu0 2
        %2069 = vperm.xlu0 %2068, %v1993
        %v2070 = vpop.permute.xlu0 %2069
        %2073 = vset.pattern.permute.xlu0 2
        %2074 = vperm.xlu0 %2073, %v1994
        %v2075 = vpop.permute.xlu0 %2074
        %v2078 = vlaneseq
        %v2079 = vshrl.u32 %v2078, 7
        %v2080 = vsub.s32 0, %v2079
        %v2081 = vrot.slane %v1996, %v2080
        %v2082 = vlaneseq
        %v2083 = vshrl.u32 %v2082, 7
        %v2084 = vsub.s32 1, %v2083
        %v2085 = vrot.slane %v1996, %v2084
        %v2088 = vadd.f32 %v2000, %v2081
        %v2089 = vadd.f32 %v2000, %v2085
        %v2090 = vadd.f32 %v2005, %v2081
        %v2091 = vadd.f32 %v2005, %v2085
        %v2092 = vadd.f32 %v2010, %v2081
        %v2093 = vadd.f32 %v2010, %v2085
        %v2094 = vadd.f32 %v2015, %v2081
        %v2095 = vadd.f32 %v2015, %v2085
        %v2096 = vadd.f32 %v2020, %v2081
        %v2097 = vadd.f32 %v2020, %v2085
        %v2098 = vadd.f32 %v2025, %v2081
        %v2099 = vadd.f32 %v2025, %v2085
        %v2100 = vadd.f32 %v2030, %v2081
        %v2101 = vadd.f32 %v2030, %v2085
        %v2102 = vadd.f32 %v2035, %v2081
        %v2103 = vadd.f32 %v2035, %v2085
        %v2104 = vadd.f32 %v2040, %v2081
        %v2105 = vadd.f32 %v2040, %v2085
        %v2106 = vadd.f32 %v2045, %v2081
        %v2107 = vadd.f32 %v2045, %v2085
        %v2108 = vadd.f32 %v2050, %v2081
        %v2109 = vadd.f32 %v2050, %v2085
        %v2110 = vadd.f32 %v2055, %v2081
        %v2111 = vadd.f32 %v2055, %v2085
        %v2112 = vadd.f32 %v2060, %v2081
        %v2113 = vadd.f32 %v2060, %v2085
        %v2114 = vadd.f32 %v2065, %v2081
        %v2115 = vadd.f32 %v2065, %v2085
        %v2116 = vadd.f32 %v2070, %v2081
        %v2117 = vadd.f32 %v2070, %v2085
        %v2118 = vadd.f32 %v2075, %v2081
        %v2119 = vadd.f32 %v2075, %v2085
        %v2120 = vmul.f32 %v2088, 0.2
        %v2121 = vmul.f32 %v2089, 0.2
        %v2122 = vmul.f32 %v2090, 0.2
        %v2123 = vmul.f32 %v2091, 0.2
        %v2124 = vmul.f32 %v2092, 0.2
        %v2125 = vmul.f32 %v2093, 0.2
        %v2126 = vmul.f32 %v2094, 0.2
        %v2127 = vmul.f32 %v2095, 0.2
        %v2128 = vmul.f32 %v2096, 0.2
        %v2129 = vmul.f32 %v2097, 0.2
        %v2130 = vmul.f32 %v2098, 0.2
        %v2131 = vmul.f32 %v2099, 0.2
        %v2132 = vmul.f32 %v2100, 0.2
        %v2133 = vmul.f32 %v2101, 0.2
        %v2134 = vmul.f32 %v2102, 0.2
        %v2135 = vmul.f32 %v2103, 0.2
        %v2136 = vmul.f32 %v2104, 0.2
        %v2137 = vmul.f32 %v2105, 0.2
        %v2138 = vmul.f32 %v2106, 0.2
        %v2139 = vmul.f32 %v2107, 0.2
        %v2140 = vmul.f32 %v2108, 0.2
        %v2141 = vmul.f32 %v2109, 0.2
        %v2142 = vmul.f32 %v2110, 0.2
        %v2143 = vmul.f32 %v2111, 0.2
        %v2144 = vmul.f32 %v2112, 0.2
        %v2145 = vmul.f32 %v2113, 0.2
        %v2146 = vmul.f32 %v2114, 0.2
        %v2147 = vmul.f32 %v2115, 0.2
        %v2148 = vmul.f32 %v2116, 0.2
        %v2149 = vmul.f32 %v2117, 0.2
        %v2150 = vmul.f32 %v2118, 0.2
        %v2151 = vmul.f32 %v2119, 0.2
        %v2152 = vmax.f32 %v2088, %v2120
        %v2153 = vmax.f32 %v2089, %v2121
        %v2154 = vmax.f32 %v2090, %v2122
        %v2155 = vmax.f32 %v2091, %v2123
        %v2156 = vmax.f32 %v2092, %v2124
        %v2157 = vmax.f32 %v2093, %v2125
        %v2158 = vmax.f32 %v2094, %v2126
        %v2159 = vmax.f32 %v2095, %v2127
        %v2160 = vmax.f32 %v2096, %v2128
        %v2161 = vmax.f32 %v2097, %v2129
        %v2162 = vmax.f32 %v2098, %v2130
        %v2163 = vmax.f32 %v2099, %v2131
        %v2164 = vmax.f32 %v2100, %v2132
        %v2165 = vmax.f32 %v2101, %v2133
        %v2166 = vmax.f32 %v2102, %v2134
        %v2167 = vmax.f32 %v2103, %v2135
        %v2168 = vmax.f32 %v2104, %v2136
        %v2169 = vmax.f32 %v2105, %v2137
        %v2170 = vmax.f32 %v2106, %v2138
        %v2171 = vmax.f32 %v2107, %v2139
        %v2172 = vmax.f32 %v2108, %v2140
        %v2173 = vmax.f32 %v2109, %v2141
        %v2174 = vmax.f32 %v2110, %v2142
        %v2175 = vmax.f32 %v2111, %v2143
        %v2176 = vmax.f32 %v2112, %v2144
        %v2177 = vmax.f32 %v2113, %v2145
        %v2178 = vmax.f32 %v2114, %v2146
        %v2179 = vmax.f32 %v2115, %v2147
        %v2180 = vmax.f32 %v2116, %v2148
        %v2181 = vmax.f32 %v2117, %v2149
        %v2182 = vmax.f32 %v2118, %v2150
        %v2183 = vmax.f32 %v2119, %v2151
        %v2184 = vsel %vm324, %v2152, -1e+30
        %v2185 = vsel %vm325, %v2153, -1e+30
        %v2186 = vsel %vm326, %v2154, -1e+30
        %v2187 = vsel %vm327, %v2155, -1e+30
        %v2188 = vsel %vm328, %v2156, -1e+30
        %v2189 = vsel %vm329, %v2157, -1e+30
        %v2190 = vsel %vm330, %v2158, -1e+30
        %v2191 = vsel %vm331, %v2159, -1e+30
        %v2192 = vsel %vm332, %v2160, -1e+30
        %v2193 = vsel %vm333, %v2161, -1e+30
        %v2194 = vsel %vm334, %v2162, -1e+30
        %v2195 = vsel %vm335, %v2163, -1e+30
        %v2196 = vsel %vm336, %v2164, -1e+30
        %v2197 = vsel %vm337, %v2165, -1e+30
        %v2198 = vsel %vm338, %v2166, -1e+30
        %v2199 = vsel %vm339, %v2167, -1e+30
        %v2200 = vsel %vm340, %v2168, -1e+30
        %v2201 = vsel %vm341, %v2169, -1e+30
        %v2202 = vsel %vm342, %v2170, -1e+30
        %v2203 = vsel %vm343, %v2171, -1e+30
        %v2204 = vsel %vm344, %v2172, -1e+30
        %v2205 = vsel %vm345, %v2173, -1e+30
        %v2206 = vsel %vm346, %v2174, -1e+30
        %v2207 = vsel %vm347, %v2175, -1e+30
        %v2208 = vsel %vm348, %v2176, -1e+30
        %v2209 = vsel %vm349, %v2177, -1e+30
        %v2210 = vsel %vm350, %v2178, -1e+30
        %v2211 = vsel %vm351, %v2179, -1e+30
        %v2212 = vsel %vm352, %v2180, -1e+30
        %v2213 = vsel %vm353, %v2181, -1e+30
        %v2214 = vsel %vm354, %v2182, -1e+30
        %v2215 = vsel %vm355, %v2183, -1e+30
        %v2216 = vmax.f32 %v2184, %v2185
        %2217 = vmax.xlane.f32.xlu0 %v2216
        %v2218 = vpop.xlane.xlu0 %2217
        %v2219 = vmax.f32 %v2186, %v2187
        %2220 = vmax.xlane.f32.xlu0 %v2219
        %v2221 = vpop.xlane.xlu0 %2220
        %v2222 = vmax.f32 %v2188, %v2189
        %2223 = vmax.xlane.f32.xlu0 %v2222
        %v2224 = vpop.xlane.xlu0 %2223
        %v2225 = vmax.f32 %v2190, %v2191
        %2226 = vmax.xlane.f32.xlu0 %v2225
        %v2227 = vpop.xlane.xlu0 %2226
        %v2228 = vmax.f32 %v2192, %v2193
        %2229 = vmax.xlane.f32.xlu0 %v2228
        %v2230 = vpop.xlane.xlu0 %2229
        %v2231 = vmax.f32 %v2194, %v2195
        %2232 = vmax.xlane.f32.xlu0 %v2231
        %v2233 = vpop.xlane.xlu0 %2232
        %v2234 = vmax.f32 %v2196, %v2197
        %2235 = vmax.xlane.f32.xlu0 %v2234
        %v2236 = vpop.xlane.xlu0 %2235
        %v2237 = vmax.f32 %v2198, %v2199
        %2238 = vmax.xlane.f32.xlu0 %v2237
        %v2239 = vpop.xlane.xlu0 %2238
        %v2240 = vmax.f32 %v2200, %v2201
        %2241 = vmax.xlane.f32.xlu0 %v2240
        %v2242 = vpop.xlane.xlu0 %2241
        %v2243 = vmax.f32 %v2202, %v2203
        %2244 = vmax.xlane.f32.xlu0 %v2243
        %v2245 = vpop.xlane.xlu0 %2244
        %v2246 = vmax.f32 %v2204, %v2205
        %2247 = vmax.xlane.f32.xlu0 %v2246
        %v2248 = vpop.xlane.xlu0 %2247
        %v2249 = vmax.f32 %v2206, %v2207
        %2250 = vmax.xlane.f32.xlu0 %v2249
        %v2251 = vpop.xlane.xlu0 %2250
        %v2252 = vmax.f32 %v2208, %v2209
        %2253 = vmax.xlane.f32.xlu0 %v2252
        %v2254 = vpop.xlane.xlu0 %2253
        %v2255 = vmax.f32 %v2210, %v2211
        %2256 = vmax.xlane.f32.xlu0 %v2255
        %v2257 = vpop.xlane.xlu0 %2256
        %v2258 = vmax.f32 %v2212, %v2213
        %2259 = vmax.xlane.f32.xlu0 %v2258
        %v2260 = vpop.xlane.xlu0 %2259
        %v2261 = vmax.f32 %v2214, %v2215
        %2262 = vmax.xlane.f32.xlu0 %v2261
        %v2263 = vpop.xlane.xlu0 %2262
        %v2264 = vmax.f32 %v2218, -1e+29
        %v2265 = vmax.f32 %v2221, -1e+29
        %v2266 = vmax.f32 %v2224, -1e+29
        %v2267 = vmax.f32 %v2227, -1e+29
        %v2268 = vmax.f32 %v2230, -1e+29
        %v2269 = vmax.f32 %v2233, -1e+29
        %v2270 = vmax.f32 %v2236, -1e+29
        %v2271 = vmax.f32 %v2239, -1e+29
        %v2272 = vmax.f32 %v2242, -1e+29
        %v2273 = vmax.f32 %v2245, -1e+29
        %v2274 = vmax.f32 %v2248, -1e+29
        %v2275 = vmax.f32 %v2251, -1e+29
        %v2276 = vmax.f32 %v2254, -1e+29
        %v2277 = vmax.f32 %v2257, -1e+29
        %v2278 = vmax.f32 %v2260, -1e+29
        %v2279 = vmax.f32 %v2263, -1e+29
        %v2280 = vsub.f32 %v2184, %v2264
        %v2281 = vsub.f32 %v2185, %v2264
        %v2282 = vsub.f32 %v2186, %v2265
        %v2283 = vsub.f32 %v2187, %v2265
        %v2284 = vsub.f32 %v2188, %v2266
        %v2285 = vsub.f32 %v2189, %v2266
        %v2286 = vsub.f32 %v2190, %v2267
        %v2287 = vsub.f32 %v2191, %v2267
        %v2288 = vsub.f32 %v2192, %v2268
        %v2289 = vsub.f32 %v2193, %v2268
        %v2290 = vsub.f32 %v2194, %v2269
        %v2291 = vsub.f32 %v2195, %v2269
        %v2292 = vsub.f32 %v2196, %v2270
        %v2293 = vsub.f32 %v2197, %v2270
        %v2294 = vsub.f32 %v2198, %v2271
        %v2295 = vsub.f32 %v2199, %v2271
        %v2296 = vsub.f32 %v2200, %v2272
        %v2297 = vsub.f32 %v2201, %v2272
        %v2298 = vsub.f32 %v2202, %v2273
        %v2299 = vsub.f32 %v2203, %v2273
        %v2300 = vsub.f32 %v2204, %v2274
        %v2301 = vsub.f32 %v2205, %v2274
        %v2302 = vsub.f32 %v2206, %v2275
        %v2303 = vsub.f32 %v2207, %v2275
        %v2304 = vsub.f32 %v2208, %v2276
        %v2305 = vsub.f32 %v2209, %v2276
        %v2306 = vsub.f32 %v2210, %v2277
        %v2307 = vsub.f32 %v2211, %v2277
        %v2308 = vsub.f32 %v2212, %v2278
        %v2309 = vsub.f32 %v2213, %v2278
        %v2310 = vsub.f32 %v2214, %v2279
        %v2311 = vsub.f32 %v2215, %v2279
        %v2312 = vmul.f32 %v2280, 1.442695
        %v2313 = vpow.pop %v2312
        %v2314 = vmul.f32 %v2281, 1.442695
        %v2315 = vpow.pop %v2314
        %v2316 = vmul.f32 %v2282, 1.442695
        %v2317 = vpow.pop %v2316
        %v2318 = vmul.f32 %v2283, 1.442695
        %v2319 = vpow.pop %v2318
        %v2320 = vmul.f32 %v2284, 1.442695
        %v2321 = vpow.pop %v2320
        %v2322 = vmul.f32 %v2285, 1.442695
        %v2323 = vpow.pop %v2322
        %v2324 = vmul.f32 %v2286, 1.442695
        %v2325 = vpow.pop %v2324
        %v2326 = vmul.f32 %v2287, 1.442695
        %v2327 = vpow.pop %v2326
        %v2328 = vmul.f32 %v2288, 1.442695
        %v2329 = vpow.pop %v2328
        %v2330 = vmul.f32 %v2289, 1.442695
        %v2331 = vpow.pop %v2330
        %v2332 = vmul.f32 %v2290, 1.442695
        %v2333 = vpow.pop %v2332
        %v2334 = vmul.f32 %v2291, 1.442695
        %v2335 = vpow.pop %v2334
        %v2336 = vmul.f32 %v2292, 1.442695
        %v2337 = vpow.pop %v2336
        %v2338 = vmul.f32 %v2293, 1.442695
        %v2339 = vpow.pop %v2338
        %v2340 = vmul.f32 %v2294, 1.442695
        %v2341 = vpow.pop %v2340
        %v2342 = vmul.f32 %v2295, 1.442695
        %v2343 = vpow.pop %v2342
        %v2344 = vmul.f32 %v2296, 1.442695
        %v2345 = vpow.pop %v2344
        %v2346 = vmul.f32 %v2297, 1.442695
        %v2347 = vpow.pop %v2346
        %v2348 = vmul.f32 %v2298, 1.442695
        %v2349 = vpow.pop %v2348
        %v2350 = vmul.f32 %v2299, 1.442695
        %v2351 = vpow.pop %v2350
        %v2352 = vmul.f32 %v2300, 1.442695
        %v2353 = vpow.pop %v2352
        %v2354 = vmul.f32 %v2301, 1.442695
        %v2355 = vpow.pop %v2354
        %v2356 = vmul.f32 %v2302, 1.442695
        %v2357 = vpow.pop %v2356
        %v2358 = vmul.f32 %v2303, 1.442695
        %v2359 = vpow.pop %v2358
        %v2360 = vmul.f32 %v2304, 1.442695
        %v2361 = vpow.pop %v2360
        %v2362 = vmul.f32 %v2305, 1.442695
        %v2363 = vpow.pop %v2362
        %v2364 = vmul.f32 %v2306, 1.442695
        %v2365 = vpow.pop %v2364
        %v2366 = vmul.f32 %v2307, 1.442695
        %v2367 = vpow.pop %v2366
        %v2368 = vmul.f32 %v2308, 1.442695
        %v2369 = vpow.pop %v2368
        %v2370 = vmul.f32 %v2309, 1.442695
        %v2371 = vpow.pop %v2370
        %v2372 = vmul.f32 %v2310, 1.442695
        %v2373 = vpow.pop %v2372
        %v2374 = vmul.f32 %v2311, 1.442695
        %v2375 = vpow.pop %v2374
        %v2376 = vadd.f32 %v2313, %v2315
        %2377 = vadd.xlane.f32.xlu0 %v2376
        %v2378 = vpop.xlane.xlu0 %2377
        %v2379 = vadd.f32 %v2317, %v2319
        %2380 = vadd.xlane.f32.xlu0 %v2379
        %v2381 = vpop.xlane.xlu0 %2380
        %v2382 = vadd.f32 %v2321, %v2323
        %2383 = vadd.xlane.f32.xlu0 %v2382
        %v2384 = vpop.xlane.xlu0 %2383
        %v2385 = vadd.f32 %v2325, %v2327
        %2386 = vadd.xlane.f32.xlu0 %v2385
        %v2387 = vpop.xlane.xlu0 %2386
        %v2388 = vadd.f32 %v2329, %v2331
        %2389 = vadd.xlane.f32.xlu0 %v2388
        %v2390 = vpop.xlane.xlu0 %2389
        %v2391 = vadd.f32 %v2333, %v2335
        %2392 = vadd.xlane.f32.xlu0 %v2391
        %v2393 = vpop.xlane.xlu0 %2392
        %v2394 = vadd.f32 %v2337, %v2339
        %2395 = vadd.xlane.f32.xlu0 %v2394
        %v2396 = vpop.xlane.xlu0 %2395
        %v2397 = vadd.f32 %v2341, %v2343
        %2398 = vadd.xlane.f32.xlu0 %v2397
        %v2399 = vpop.xlane.xlu0 %2398
        %v2400 = vadd.f32 %v2345, %v2347
        %2401 = vadd.xlane.f32.xlu0 %v2400
        %v2402 = vpop.xlane.xlu0 %2401
        %v2403 = vadd.f32 %v2349, %v2351
        %2404 = vadd.xlane.f32.xlu0 %v2403
        %v2405 = vpop.xlane.xlu0 %2404
        %v2406 = vadd.f32 %v2353, %v2355
        %2407 = vadd.xlane.f32.xlu0 %v2406
        %v2408 = vpop.xlane.xlu0 %2407
        %v2409 = vadd.f32 %v2357, %v2359
        %2410 = vadd.xlane.f32.xlu0 %v2409
        %v2411 = vpop.xlane.xlu0 %2410
        %v2412 = vadd.f32 %v2361, %v2363
        %2413 = vadd.xlane.f32.xlu0 %v2412
        %v2414 = vpop.xlane.xlu0 %2413
        %v2415 = vadd.f32 %v2365, %v2367
        %2416 = vadd.xlane.f32.xlu0 %v2415
        %v2417 = vpop.xlane.xlu0 %2416
        %v2418 = vadd.f32 %v2369, %v2371
        %2419 = vadd.xlane.f32.xlu0 %v2418
        %v2420 = vpop.xlane.xlu0 %2419
        %v2421 = vadd.f32 %v2373, %v2375
        %2422 = vadd.xlane.f32.xlu0 %v2421
        %v2423 = vpop.xlane.xlu0 %2422
        %v2424 = vmax.f32 %v2378, 1e-12
        %v2425 = vmax.f32 %v2381, 1e-12
        %v2426 = vmax.f32 %v2384, 1e-12
        %v2427 = vmax.f32 %v2387, 1e-12
        %v2428 = vmax.f32 %v2390, 1e-12
        %v2429 = vmax.f32 %v2393, 1e-12
        %v2430 = vmax.f32 %v2396, 1e-12
        %v2431 = vmax.f32 %v2399, 1e-12
        %v2432 = vmax.f32 %v2402, 1e-12
        %v2433 = vmax.f32 %v2405, 1e-12
        %v2434 = vmax.f32 %v2408, 1e-12
        %v2435 = vmax.f32 %v2411, 1e-12
        %v2436 = vmax.f32 %v2414, 1e-12
        %v2437 = vmax.f32 %v2417, 1e-12
        %v2438 = vmax.f32 %v2420, 1e-12
        %v2439 = vmax.f32 %v2423, 1e-12
        %v2440 = vrcp.pop %v2424
        %v2441 = vrcp.pop %v2425
        %v2442 = vrcp.pop %v2426
        %v2443 = vrcp.pop %v2427
        %v2444 = vrcp.pop %v2428
        %v2445 = vrcp.pop %v2429
        %v2446 = vrcp.pop %v2430
        %v2447 = vrcp.pop %v2431
        %v2448 = vrcp.pop %v2432
        %v2449 = vrcp.pop %v2433
        %v2450 = vrcp.pop %v2434
        %v2451 = vrcp.pop %v2435
        %v2452 = vrcp.pop %v2436
        %v2453 = vrcp.pop %v2437
        %v2454 = vrcp.pop %v2438
        %v2455 = vrcp.pop %v2439
        %v2456 = vmul.f32 %v2424, %v2440
        %v2457 = vmul.f32 %v2425, %v2441
        %v2458 = vmul.f32 %v2426, %v2442
        %v2459 = vmul.f32 %v2427, %v2443
        %v2460 = vmul.f32 %v2428, %v2444
        %v2461 = vmul.f32 %v2429, %v2445
        %v2462 = vmul.f32 %v2430, %v2446
        %v2463 = vmul.f32 %v2431, %v2447
        %v2464 = vmul.f32 %v2432, %v2448
        %v2465 = vmul.f32 %v2433, %v2449
        %v2466 = vmul.f32 %v2434, %v2450
        %v2467 = vmul.f32 %v2435, %v2451
        %v2468 = vmul.f32 %v2436, %v2452
        %v2469 = vmul.f32 %v2437, %v2453
        %v2470 = vmul.f32 %v2438, %v2454
        %v2471 = vmul.f32 %v2439, %v2455
        %v2472 = vsub.f32 2.0, %v2456
        %v2473 = vsub.f32 2.0, %v2457
        %v2474 = vsub.f32 2.0, %v2458
        %v2475 = vsub.f32 2.0, %v2459
        %v2476 = vsub.f32 2.0, %v2460
        %v2477 = vsub.f32 2.0, %v2461
        %v2478 = vsub.f32 2.0, %v2462
        %v2479 = vsub.f32 2.0, %v2463
        %v2480 = vsub.f32 2.0, %v2464
        %v2481 = vsub.f32 2.0, %v2465
        %v2482 = vsub.f32 2.0, %v2466
        %v2483 = vsub.f32 2.0, %v2467
        %v2484 = vsub.f32 2.0, %v2468
        %v2485 = vsub.f32 2.0, %v2469
        %v2486 = vsub.f32 2.0, %v2470
        %v2487 = vsub.f32 2.0, %v2471
        %v2488 = vmul.f32 %v2440, %v2472
        %v2489 = vmul.f32 %v2441, %v2473
        %v2490 = vmul.f32 %v2442, %v2474
        %v2491 = vmul.f32 %v2443, %v2475
        %v2492 = vmul.f32 %v2444, %v2476
        %v2493 = vmul.f32 %v2445, %v2477
        %v2494 = vmul.f32 %v2446, %v2478
        %v2495 = vmul.f32 %v2447, %v2479
        %v2496 = vmul.f32 %v2448, %v2480
        %v2497 = vmul.f32 %v2449, %v2481
        %v2498 = vmul.f32 %v2450, %v2482
        %v2499 = vmul.f32 %v2451, %v2483
        %v2500 = vmul.f32 %v2452, %v2484
        %v2501 = vmul.f32 %v2453, %v2485
        %v2502 = vmul.f32 %v2454, %v2486
        %v2503 = vmul.f32 %v2455, %v2487
        %v2504 = vpack.c.bf16 %v2317, %v2313
        %v2505 = vpack.c.bf16 %v2319, %v2315
        %v2506 = vpack.c.bf16 %v2325, %v2321
        %v2507 = vpack.c.bf16 %v2327, %v2323
        %v2508 = vpack.c.bf16 %v2333, %v2329
        %v2509 = vpack.c.bf16 %v2335, %v2331
        %v2510 = vpack.c.bf16 %v2341, %v2337
        %v2511 = vpack.c.bf16 %v2343, %v2339
        %v2512 = vpack.c.bf16 %v2349, %v2345
        %v2513 = vpack.c.bf16 %v2351, %v2347
        %v2514 = vpack.c.bf16 %v2357, %v2353
        %v2515 = vpack.c.bf16 %v2359, %v2355
        %v2516 = vpack.c.bf16 %v2365, %v2361
        %v2517 = vpack.c.bf16 %v2367, %v2363
        %v2518 = vpack.c.bf16 %v2373, %v2369
        %v2519 = vpack.c.bf16 %v2375, %v2371
        %2520 = vrot.lane.b32.xlu0 %v993, 64
        %v2521 = vpop.permute.xlu0 %2520
        %2522 = vrot.lane.b32.xlu0 %v994, 64
        %v2523 = vpop.permute.xlu0 %2522
        %2524 = vrot.lane.b32.xlu0 %v995, 64
        %v2525 = vpop.permute.xlu0 %2524
        %2526 = vrot.lane.b32.xlu0 %v996, 64
        %v2527 = vpop.permute.xlu0 %2526
        %2528 = vrot.lane.b32.xlu0 %v997, 64
        %v2529 = vpop.permute.xlu0 %2528
        %2530 = vrot.lane.b32.xlu0 %v998, 64
        %v2531 = vpop.permute.xlu0 %2530
        %2532 = vrot.lane.b32.xlu0 %v999, 64
        %v2533 = vpop.permute.xlu0 %2532
        %2534 = vrot.lane.b32.xlu0 %v1000, 64
        %v2535 = vpop.permute.xlu0 %2534
        %2536 = vrot.lane.b32.xlu0 %v1001, 64
        %v2537 = vpop.permute.xlu0 %2536
        %2538 = vrot.lane.b32.xlu0 %v1002, 64
        %v2539 = vpop.permute.xlu0 %2538
        %2540 = vrot.lane.b32.xlu0 %v1003, 64
        %v2541 = vpop.permute.xlu0 %2540
        %2542 = vrot.lane.b32.xlu0 %v1004, 64
        %v2543 = vpop.permute.xlu0 %2542
        %2544 = vrot.lane.b32.xlu0 %v1005, 64
        %v2545 = vpop.permute.xlu0 %2544
        %2546 = vrot.lane.b32.xlu0 %v1006, 64
        %v2547 = vpop.permute.xlu0 %2546
        %2548 = vrot.lane.b32.xlu0 %v1007, 64
        %v2549 = vpop.permute.xlu0 %2548
        %2550 = vrot.lane.b32.xlu0 %v1008, 64
        %v2551 = vpop.permute.xlu0 %2550
        %2568 = vmatprep.subr.bf16.mxu0 0
        %2569 = vmatpush1.bf16.msra.mxu0 %v2535
        %2570 = vmatprep.subr.bf16.mxu0 0
        %2571 = vmatpush1.bf16.msra.mxu0 %v2533
        %2572 = vmatprep.subr.bf16.mxu0 0
        %2573 = vmatpush1.bf16.msra.mxu0 %v2531
        %2574 = vmatprep.subr.bf16.mxu0 0
        %2575 = vmatpush1.bf16.msra.mxu0 %v2529
        %2576 = vmatprep.subr.bf16.mxu0 0
        %2577 = vmatpush1.bf16.msra.mxu0 %v2527
        %2578 = vmatprep.subr.bf16.mxu0 0
        %2579 = vmatpush1.bf16.msra.mxu0 %v2525
        %2580 = vmatprep.subr.bf16.mxu0 0
        %2581 = vmatpush1.bf16.msra.mxu0 %v2523
        %2582 = vmatprep.subr.bf16.mxu0 0
        %2583 = vmatpush1.bf16.msra.mxu0 %v2521
        %2584 = vmatprep.subr.bf16.mxu0 0
        %2585 = vmatpush2.bf16.msra.mxu0 %v2551
        %2586 = vmatprep.subr.bf16.mxu0 0
        %2587 = vmatpush2.bf16.msra.mxu0 %v2549
        %2588 = vmatprep.subr.bf16.mxu0 0
        %2589 = vmatpush2.bf16.msra.mxu0 %v2547
        %2590 = vmatprep.subr.bf16.mxu0 0
        %2591 = vmatpush2.bf16.msra.mxu0 %v2545
        %2592 = vmatprep.subr.bf16.mxu0 0
        %2593 = vmatpush2.bf16.msra.mxu0 %v2543
        %2594 = vmatprep.subr.bf16.mxu0 0
        %2595 = vmatpush2.bf16.msra.mxu0 %v2541
        %2596 = vmatprep.subr.bf16.mxu0 0
        %2597 = vmatpush2.bf16.msra.mxu0 %v2539
        %2598 = vmatprep.subr.bf16.mxu0 0
        %2599 = vmatpush2.bf16.msra.mxu0 %v2537
        %2600 = vmatprep.mubr.bf16.mxu0 %v2505
        %2601 = vmatmul.mubr.bf16.gmra.mxu0 %v2504
        %v2602 = vpop.f32.mrf.mxu0
        %v2603 = vadd.f32 0.0, %v2602
        %v2604 = vpop.f32.mrf.mxu0
        %v2605 = vpop.f32.mrf.mxu0
        %v2606 = vadd.f32 0.0, %v2605
        %v2607 = vpop.f32.mrf.mxu0
        %2608 = vmatprep.mubr.bf16.mxu0 %v2507
        %2609 = vmatmul.mubr.bf16.gmra.mxu0 %v2506
        %v2610 = vpop.f32.mrf.mxu0
        %v2611 = vadd.f32 0.0, %v2610
        %v2612 = vpop.f32.mrf.mxu0
        %v2613 = vpop.f32.mrf.mxu0
        %v2614 = vadd.f32 0.0, %v2613
        %v2615 = vpop.f32.mrf.mxu0
        %2616 = vmatprep.mubr.bf16.mxu0 %v2509
        %2617 = vmatmul.mubr.bf16.gmra.mxu0 %v2508
        %v2618 = vpop.f32.mrf.mxu0
        %v2619 = vadd.f32 0.0, %v2618
        %v2620 = vpop.f32.mrf.mxu0
        %v2621 = vpop.f32.mrf.mxu0
        %v2622 = vadd.f32 0.0, %v2621
        %v2623 = vpop.f32.mrf.mxu0
        %2624 = vmatprep.mubr.bf16.mxu0 %v2511
        %2625 = vmatmul.mubr.bf16.gmra.mxu0 %v2510
        %v2626 = vpop.f32.mrf.mxu0
        %v2627 = vadd.f32 0.0, %v2626
        %v2628 = vpop.f32.mrf.mxu0
        %v2629 = vpop.f32.mrf.mxu0
        %v2630 = vadd.f32 0.0, %v2629
        %v2631 = vpop.f32.mrf.mxu0
        %2632 = vmatprep.mubr.bf16.mxu0 %v2513
        %2633 = vmatmul.mubr.bf16.gmra.mxu0 %v2512
        %v2634 = vpop.f32.mrf.mxu0
        %v2635 = vadd.f32 0.0, %v2634
        %v2636 = vpop.f32.mrf.mxu0
        %v2637 = vpop.f32.mrf.mxu0
        %v2638 = vadd.f32 0.0, %v2637
        %v2639 = vpop.f32.mrf.mxu0
        %2640 = vmatprep.mubr.bf16.mxu0 %v2515
        %2641 = vmatmul.mubr.bf16.gmra.mxu0 %v2514
        %v2642 = vpop.f32.mrf.mxu0
        %v2643 = vadd.f32 0.0, %v2642
        %v2644 = vpop.f32.mrf.mxu0
        %v2645 = vpop.f32.mrf.mxu0
        %v2646 = vadd.f32 0.0, %v2645
        %v2647 = vpop.f32.mrf.mxu0
        %2648 = vmatprep.mubr.bf16.mxu0 %v2517
        %2649 = vmatmul.mubr.bf16.gmra.mxu0 %v2516
        %v2650 = vpop.f32.mrf.mxu0
        %v2651 = vadd.f32 0.0, %v2650
        %v2652 = vpop.f32.mrf.mxu0
        %v2653 = vpop.f32.mrf.mxu0
        %v2654 = vadd.f32 0.0, %v2653
        %v2655 = vpop.f32.mrf.mxu0
        %2656 = vmatprep.mubr.bf16.mxu0 %v2519
        %2657 = vmatmul.mubr.bf16.gmra.mxu0 %v2518
        %v2658 = vpop.f32.mrf.mxu0
        %v2659 = vadd.f32 0.0, %v2658
        %v2660 = vpop.f32.mrf.mxu0
        %v2661 = vpop.f32.mrf.mxu0
        %v2662 = vadd.f32 0.0, %v2661
        %v2663 = vpop.f32.mrf.mxu0
        %2664 = vdwg.mxu0
        %v2665 = vmul.f32 %v2603, %v2488
        %v2666 = vmul.f32 %v2606, %v2489
        %v2667 = vmul.f32 %v2611, %v2490
        %v2668 = vmul.f32 %v2614, %v2491
        %v2669 = vmul.f32 %v2619, %v2492
        %v2670 = vmul.f32 %v2622, %v2493
        %v2671 = vmul.f32 %v2627, %v2494
        %v2672 = vmul.f32 %v2630, %v2495
        %v2673 = vmul.f32 %v2635, %v2496
        %v2674 = vmul.f32 %v2638, %v2497
        %v2675 = vmul.f32 %v2643, %v2498
        %v2676 = vmul.f32 %v2646, %v2499
        %v2677 = vmul.f32 %v2651, %v2500
        %v2678 = vmul.f32 %v2654, %v2501
        %v2679 = vmul.f32 %v2659, %v2502
        %v2680 = vmul.f32 %v2662, %v2503
        %2681 = vrot.lane.b32.xlu0 %v1142, 64
        %v2682 = vpop.permute.xlu0 %2681
        %v2684 = vadd.f32 %v2665, %v2682
        %v2685 = vadd.f32 %v2666, %v2682
        %v2686 = vadd.f32 %v2667, %v2682
        %v2687 = vadd.f32 %v2668, %v2682
        %v2688 = vadd.f32 %v2669, %v2682
        %v2689 = vadd.f32 %v2670, %v2682
        %v2690 = vadd.f32 %v2671, %v2682
        %v2691 = vadd.f32 %v2672, %v2682
        %v2692 = vadd.f32 %v2673, %v2682
        %v2693 = vadd.f32 %v2674, %v2682
        %v2694 = vadd.f32 %v2675, %v2682
        %v2695 = vadd.f32 %v2676, %v2682
        %v2696 = vadd.f32 %v2677, %v2682
        %v2697 = vadd.f32 %v2678, %v2682
        %v2698 = vadd.f32 %v2679, %v2682
        %v2699 = vadd.f32 %v2680, %v2682
        %2716 = vrot.lane.b32.xlu0 %v2684, 64
        %v2717 = vpop.permute.xlu0 %2716
        %2718 = vrot.lane.b32.xlu0 %v2685, 64
        %v2719 = vpop.permute.xlu0 %2718
        %2720 = vrot.lane.b32.xlu0 %v2686, 64
        %v2721 = vpop.permute.xlu0 %2720
        %2722 = vrot.lane.b32.xlu0 %v2687, 64
        %v2723 = vpop.permute.xlu0 %2722
        %2724 = vrot.lane.b32.xlu0 %v2688, 64
        %v2725 = vpop.permute.xlu0 %2724
        %2726 = vrot.lane.b32.xlu0 %v2689, 64
        %v2727 = vpop.permute.xlu0 %2726
        %2728 = vrot.lane.b32.xlu0 %v2690, 64
        %v2729 = vpop.permute.xlu0 %2728
        %2730 = vrot.lane.b32.xlu0 %v2691, 64
        %v2731 = vpop.permute.xlu0 %2730
        %2732 = vrot.lane.b32.xlu0 %v2692, 64
        %v2733 = vpop.permute.xlu0 %2732
        %2734 = vrot.lane.b32.xlu0 %v2693, 64
        %v2735 = vpop.permute.xlu0 %2734
        %2736 = vrot.lane.b32.xlu0 %v2694, 64
        %v2737 = vpop.permute.xlu0 %2736
        %2738 = vrot.lane.b32.xlu0 %v2695, 64
        %v2739 = vpop.permute.xlu0 %2738
        %2740 = vrot.lane.b32.xlu0 %v2696, 64
        %v2741 = vpop.permute.xlu0 %2740
        %2742 = vrot.lane.b32.xlu0 %v2697, 64
        %v2743 = vpop.permute.xlu0 %2742
        %2744 = vrot.lane.b32.xlu0 %v2698, 64
        %v2745 = vpop.permute.xlu0 %2744
        %2746 = vrot.lane.b32.xlu0 %v2699, 64
        %v2747 = vpop.permute.xlu0 %2746
        %vm2764 = vcmask 785920
        %2765 = vst.msk [vmem:[%s236] sm:$0xff] %vm2764, %v2717
        %2766 = vst.msk [vmem:[%s236 + $0x8] sm:$0xff] %vm2764, %v2719
        %2767 = vst.msk [vmem:[%s236 + $0x10] sm:$0xff] %vm2764, %v2721
        %2768 = vst.msk [vmem:[%s236 + $0x18] sm:$0xff] %vm2764, %v2723
        %2769 = vst.msk [vmem:[%s236 + $0x20] sm:$0xff] %vm2764, %v2725
        %2770 = vst.msk [vmem:[%s236 + $0x28] sm:$0xff] %vm2764, %v2727
        %2771 = vst.msk [vmem:[%s236 + $0x30] sm:$0xff] %vm2764, %v2729
        %2772 = vst.msk [vmem:[%s236 + $0x38] sm:$0xff] %vm2764, %v2731
        %2773 = vst.msk [vmem:[%s236 + $0x40] sm:$0xff] %vm2764, %v2733
        %2774 = vst.msk [vmem:[%s236 + $0x48] sm:$0xff] %vm2764, %v2735
        %2775 = vst.msk [vmem:[%s236 + $0x50] sm:$0xff] %vm2764, %v2737
        %2776 = vst.msk [vmem:[%s236 + $0x58] sm:$0xff] %vm2764, %v2739
        %2777 = vst.msk [vmem:[%s236 + $0x60] sm:$0xff] %vm2764, %v2741
        %2778 = vst.msk [vmem:[%s236 + $0x68] sm:$0xff] %vm2764, %v2743
        %2779 = vst.msk [vmem:[%s236 + $0x70] sm:$0xff] %vm2764, %v2745
        %2780 = vst.msk [vmem:[%s236 + $0x78] sm:$0xff] %vm2764, %v2747
        %v2781 = vld [vmem:[%s241] sm:$0xff]
        %v2782 = vld [vmem:[%s241 + $0x8] sm:$0xff]
        %v2783 = vld [vmem:[%s241 + $0x10] sm:$0xff]
        %v2784 = vld [vmem:[%s241 + $0x18] sm:$0xff]
        %v2785 = vld [vmem:[%s241 + $0x20] sm:$0xff]
        %v2786 = vld [vmem:[%s241 + $0x28] sm:$0xff]
        %v2787 = vld [vmem:[%s241 + $0x30] sm:$0xff]
        %v2788 = vld [vmem:[%s241 + $0x38] sm:$0xff]
        %v2789 = vld [vmem:[%s241 + $0x40] sm:$0xff]
        %v2790 = vld [vmem:[%s241 + $0x48] sm:$0xff]
        %v2791 = vld [vmem:[%s241 + $0x50] sm:$0xff]
        %v2792 = vld [vmem:[%s241 + $0x58] sm:$0xff]
        %v2793 = vld [vmem:[%s241 + $0x60] sm:$0xff]
        %v2794 = vld [vmem:[%s241 + $0x68] sm:$0xff]
        %v2795 = vld [vmem:[%s241 + $0x70] sm:$0xff]
        %v2796 = vld [vmem:[%s241 + $0x78] sm:$0xff]
        %s2797 = scalar_lea.vmem %s1, 3
        %v2798 = vld [vmem:[%s2797] ss:$4 sm:$0x3]
        %2800 = vset.pattern.permute.xlu0 3
        %2801 = vperm.xlu0 %2800, %v2781
        %v2802 = vpop.permute.xlu0 %2801
        %2805 = vset.pattern.permute.xlu0 3
        %2806 = vperm.xlu0 %2805, %v2782
        %v2807 = vpop.permute.xlu0 %2806
        %2810 = vset.pattern.permute.xlu0 3
        %2811 = vperm.xlu0 %2810, %v2783
        %v2812 = vpop.permute.xlu0 %2811
        %2815 = vset.pattern.permute.xlu0 3
        %2816 = vperm.xlu0 %2815, %v2784
        %v2817 = vpop.permute.xlu0 %2816
        %2820 = vset.pattern.permute.xlu0 3
        %2821 = vperm.xlu0 %2820, %v2785
        %v2822 = vpop.permute.xlu0 %2821
        %2825 = vset.pattern.permute.xlu0 3
        %2826 = vperm.xlu0 %2825, %v2786
        %v2827 = vpop.permute.xlu0 %2826
        %2830 = vset.pattern.permute.xlu0 3
        %2831 = vperm.xlu0 %2830, %v2787
        %v2832 = vpop.permute.xlu0 %2831
        %2835 = vset.pattern.permute.xlu0 3
        %2836 = vperm.xlu0 %2835, %v2788
        %v2837 = vpop.permute.xlu0 %2836
        %2840 = vset.pattern.permute.xlu0 3
        %2841 = vperm.xlu0 %2840, %v2789
        %v2842 = vpop.permute.xlu0 %2841
        %2845 = vset.pattern.permute.xlu0 3
        %2846 = vperm.xlu0 %2845, %v2790
        %v2847 = vpop.permute.xlu0 %2846
        %2850 = vset.pattern.permute.xlu0 3
        %2851 = vperm.xlu0 %2850, %v2791
        %v2852 = vpop.permute.xlu0 %2851
        %2855 = vset.pattern.permute.xlu0 3
        %2856 = vperm.xlu0 %2855, %v2792
        %v2857 = vpop.permute.xlu0 %2856
        %2860 = vset.pattern.permute.xlu0 3
        %2861 = vperm.xlu0 %2860, %v2793
        %v2862 = vpop.permute.xlu0 %2861
        %2865 = vset.pattern.permute.xlu0 3
        %2866 = vperm.xlu0 %2865, %v2794
        %v2867 = vpop.permute.xlu0 %2866
        %2870 = vset.pattern.permute.xlu0 3
        %2871 = vperm.xlu0 %2870, %v2795
        %v2872 = vpop.permute.xlu0 %2871
        %2875 = vset.pattern.permute.xlu0 3
        %2876 = vperm.xlu0 %2875, %v2796
        %v2877 = vpop.permute.xlu0 %2876
        %v2880 = vlaneseq
        %v2881 = vshrl.u32 %v2880, 7
        %v2882 = vsub.s32 0, %v2881
        %v2883 = vrot.slane %v2798, %v2882
        %v2884 = vlaneseq
        %v2885 = vshrl.u32 %v2884, 7
        %v2886 = vsub.s32 1, %v2885
        %v2887 = vrot.slane %v2798, %v2886
        %v2890 = vadd.f32 %v2802, %v2883
        %v2891 = vadd.f32 %v2802, %v2887
        %v2892 = vadd.f32 %v2807, %v2883
        %v2893 = vadd.f32 %v2807, %v2887
        %v2894 = vadd.f32 %v2812, %v2883
        %v2895 = vadd.f32 %v2812, %v2887
        %v2896 = vadd.f32 %v2817, %v2883
        %v2897 = vadd.f32 %v2817, %v2887
        %v2898 = vadd.f32 %v2822, %v2883
        %v2899 = vadd.f32 %v2822, %v2887
        %v2900 = vadd.f32 %v2827, %v2883
        %v2901 = vadd.f32 %v2827, %v2887
        %v2902 = vadd.f32 %v2832, %v2883
        %v2903 = vadd.f32 %v2832, %v2887
        %v2904 = vadd.f32 %v2837, %v2883
        %v2905 = vadd.f32 %v2837, %v2887
        %v2906 = vadd.f32 %v2842, %v2883
        %v2907 = vadd.f32 %v2842, %v2887
        %v2908 = vadd.f32 %v2847, %v2883
        %v2909 = vadd.f32 %v2847, %v2887
        %v2910 = vadd.f32 %v2852, %v2883
        %v2911 = vadd.f32 %v2852, %v2887
        %v2912 = vadd.f32 %v2857, %v2883
        %v2913 = vadd.f32 %v2857, %v2887
        %v2914 = vadd.f32 %v2862, %v2883
        %v2915 = vadd.f32 %v2862, %v2887
        %v2916 = vadd.f32 %v2867, %v2883
        %v2917 = vadd.f32 %v2867, %v2887
        %v2918 = vadd.f32 %v2872, %v2883
        %v2919 = vadd.f32 %v2872, %v2887
        %v2920 = vadd.f32 %v2877, %v2883
        %v2921 = vadd.f32 %v2877, %v2887
        %v2922 = vmul.f32 %v2890, 0.2
        %v2923 = vmul.f32 %v2891, 0.2
        %v2924 = vmul.f32 %v2892, 0.2
        %v2925 = vmul.f32 %v2893, 0.2
        %v2926 = vmul.f32 %v2894, 0.2
        %v2927 = vmul.f32 %v2895, 0.2
        %v2928 = vmul.f32 %v2896, 0.2
        %v2929 = vmul.f32 %v2897, 0.2
        %v2930 = vmul.f32 %v2898, 0.2
        %v2931 = vmul.f32 %v2899, 0.2
        %v2932 = vmul.f32 %v2900, 0.2
        %v2933 = vmul.f32 %v2901, 0.2
        %v2934 = vmul.f32 %v2902, 0.2
        %v2935 = vmul.f32 %v2903, 0.2
        %v2936 = vmul.f32 %v2904, 0.2
        %v2937 = vmul.f32 %v2905, 0.2
        %v2938 = vmul.f32 %v2906, 0.2
        %v2939 = vmul.f32 %v2907, 0.2
        %v2940 = vmul.f32 %v2908, 0.2
        %v2941 = vmul.f32 %v2909, 0.2
        %v2942 = vmul.f32 %v2910, 0.2
        %v2943 = vmul.f32 %v2911, 0.2
        %v2944 = vmul.f32 %v2912, 0.2
        %v2945 = vmul.f32 %v2913, 0.2
        %v2946 = vmul.f32 %v2914, 0.2
        %v2947 = vmul.f32 %v2915, 0.2
        %v2948 = vmul.f32 %v2916, 0.2
        %v2949 = vmul.f32 %v2917, 0.2
        %v2950 = vmul.f32 %v2918, 0.2
        %v2951 = vmul.f32 %v2919, 0.2
        %v2952 = vmul.f32 %v2920, 0.2
        %v2953 = vmul.f32 %v2921, 0.2
        %v2954 = vmax.f32 %v2890, %v2922
        %v2955 = vmax.f32 %v2891, %v2923
        %v2956 = vmax.f32 %v2892, %v2924
        %v2957 = vmax.f32 %v2893, %v2925
        %v2958 = vmax.f32 %v2894, %v2926
        %v2959 = vmax.f32 %v2895, %v2927
        %v2960 = vmax.f32 %v2896, %v2928
        %v2961 = vmax.f32 %v2897, %v2929
        %v2962 = vmax.f32 %v2898, %v2930
        %v2963 = vmax.f32 %v2899, %v2931
        %v2964 = vmax.f32 %v2900, %v2932
        %v2965 = vmax.f32 %v2901, %v2933
        %v2966 = vmax.f32 %v2902, %v2934
        %v2967 = vmax.f32 %v2903, %v2935
        %v2968 = vmax.f32 %v2904, %v2936
        %v2969 = vmax.f32 %v2905, %v2937
        %v2970 = vmax.f32 %v2906, %v2938
        %v2971 = vmax.f32 %v2907, %v2939
        %v2972 = vmax.f32 %v2908, %v2940
        %v2973 = vmax.f32 %v2909, %v2941
        %v2974 = vmax.f32 %v2910, %v2942
        %v2975 = vmax.f32 %v2911, %v2943
        %v2976 = vmax.f32 %v2912, %v2944
        %v2977 = vmax.f32 %v2913, %v2945
        %v2978 = vmax.f32 %v2914, %v2946
        %v2979 = vmax.f32 %v2915, %v2947
        %v2980 = vmax.f32 %v2916, %v2948
        %v2981 = vmax.f32 %v2917, %v2949
        %v2982 = vmax.f32 %v2918, %v2950
        %v2983 = vmax.f32 %v2919, %v2951
        %v2984 = vmax.f32 %v2920, %v2952
        %v2985 = vmax.f32 %v2921, %v2953
        %v2986 = vsel %vm324, %v2954, -1e+30
        %v2987 = vsel %vm325, %v2955, -1e+30
        %v2988 = vsel %vm326, %v2956, -1e+30
        %v2989 = vsel %vm327, %v2957, -1e+30
        %v2990 = vsel %vm328, %v2958, -1e+30
        %v2991 = vsel %vm329, %v2959, -1e+30
        %v2992 = vsel %vm330, %v2960, -1e+30
        %v2993 = vsel %vm331, %v2961, -1e+30
        %v2994 = vsel %vm332, %v2962, -1e+30
        %v2995 = vsel %vm333, %v2963, -1e+30
        %v2996 = vsel %vm334, %v2964, -1e+30
        %v2997 = vsel %vm335, %v2965, -1e+30
        %v2998 = vsel %vm336, %v2966, -1e+30
        %v2999 = vsel %vm337, %v2967, -1e+30
        %v3000 = vsel %vm338, %v2968, -1e+30
        %v3001 = vsel %vm339, %v2969, -1e+30
        %v3002 = vsel %vm340, %v2970, -1e+30
        %v3003 = vsel %vm341, %v2971, -1e+30
        %v3004 = vsel %vm342, %v2972, -1e+30
        %v3005 = vsel %vm343, %v2973, -1e+30
        %v3006 = vsel %vm344, %v2974, -1e+30
        %v3007 = vsel %vm345, %v2975, -1e+30
        %v3008 = vsel %vm346, %v2976, -1e+30
        %v3009 = vsel %vm347, %v2977, -1e+30
        %v3010 = vsel %vm348, %v2978, -1e+30
        %v3011 = vsel %vm349, %v2979, -1e+30
        %v3012 = vsel %vm350, %v2980, -1e+30
        %v3013 = vsel %vm351, %v2981, -1e+30
        %v3014 = vsel %vm352, %v2982, -1e+30
        %v3015 = vsel %vm353, %v2983, -1e+30
        %v3016 = vsel %vm354, %v2984, -1e+30
        %v3017 = vsel %vm355, %v2985, -1e+30
        %v3018 = vmax.f32 %v2986, %v2987
        %3019 = vmax.xlane.f32.xlu0 %v3018
        %v3020 = vpop.xlane.xlu0 %3019
        %v3021 = vmax.f32 %v2988, %v2989
        %3022 = vmax.xlane.f32.xlu0 %v3021
        %v3023 = vpop.xlane.xlu0 %3022
        %v3024 = vmax.f32 %v2990, %v2991
        %3025 = vmax.xlane.f32.xlu0 %v3024
        %v3026 = vpop.xlane.xlu0 %3025
        %v3027 = vmax.f32 %v2992, %v2993
        %3028 = vmax.xlane.f32.xlu0 %v3027
        %v3029 = vpop.xlane.xlu0 %3028
        %v3030 = vmax.f32 %v2994, %v2995
        %3031 = vmax.xlane.f32.xlu0 %v3030
        %v3032 = vpop.xlane.xlu0 %3031
        %v3033 = vmax.f32 %v2996, %v2997
        %3034 = vmax.xlane.f32.xlu0 %v3033
        %v3035 = vpop.xlane.xlu0 %3034
        %v3036 = vmax.f32 %v2998, %v2999
        %3037 = vmax.xlane.f32.xlu0 %v3036
        %v3038 = vpop.xlane.xlu0 %3037
        %v3039 = vmax.f32 %v3000, %v3001
        %3040 = vmax.xlane.f32.xlu0 %v3039
        %v3041 = vpop.xlane.xlu0 %3040
        %v3042 = vmax.f32 %v3002, %v3003
        %3043 = vmax.xlane.f32.xlu0 %v3042
        %v3044 = vpop.xlane.xlu0 %3043
        %v3045 = vmax.f32 %v3004, %v3005
        %3046 = vmax.xlane.f32.xlu0 %v3045
        %v3047 = vpop.xlane.xlu0 %3046
        %v3048 = vmax.f32 %v3006, %v3007
        %3049 = vmax.xlane.f32.xlu0 %v3048
        %v3050 = vpop.xlane.xlu0 %3049
        %v3051 = vmax.f32 %v3008, %v3009
        %3052 = vmax.xlane.f32.xlu0 %v3051
        %v3053 = vpop.xlane.xlu0 %3052
        %v3054 = vmax.f32 %v3010, %v3011
        %3055 = vmax.xlane.f32.xlu0 %v3054
        %v3056 = vpop.xlane.xlu0 %3055
        %v3057 = vmax.f32 %v3012, %v3013
        %3058 = vmax.xlane.f32.xlu0 %v3057
        %v3059 = vpop.xlane.xlu0 %3058
        %v3060 = vmax.f32 %v3014, %v3015
        %3061 = vmax.xlane.f32.xlu0 %v3060
        %v3062 = vpop.xlane.xlu0 %3061
        %v3063 = vmax.f32 %v3016, %v3017
        %3064 = vmax.xlane.f32.xlu0 %v3063
        %v3065 = vpop.xlane.xlu0 %3064
        %v3066 = vmax.f32 %v3020, -1e+29
        %v3067 = vmax.f32 %v3023, -1e+29
        %v3068 = vmax.f32 %v3026, -1e+29
        %v3069 = vmax.f32 %v3029, -1e+29
        %v3070 = vmax.f32 %v3032, -1e+29
        %v3071 = vmax.f32 %v3035, -1e+29
        %v3072 = vmax.f32 %v3038, -1e+29
        %v3073 = vmax.f32 %v3041, -1e+29
        %v3074 = vmax.f32 %v3044, -1e+29
        %v3075 = vmax.f32 %v3047, -1e+29
        %v3076 = vmax.f32 %v3050, -1e+29
        %v3077 = vmax.f32 %v3053, -1e+29
        %v3078 = vmax.f32 %v3056, -1e+29
        %v3079 = vmax.f32 %v3059, -1e+29
        %v3080 = vmax.f32 %v3062, -1e+29
        %v3081 = vmax.f32 %v3065, -1e+29
        %v3082 = vsub.f32 %v2986, %v3066
        %v3083 = vsub.f32 %v2987, %v3066
        %v3084 = vsub.f32 %v2988, %v3067
        %v3085 = vsub.f32 %v2989, %v3067
        %v3086 = vsub.f32 %v2990, %v3068
        %v3087 = vsub.f32 %v2991, %v3068
        %v3088 = vsub.f32 %v2992, %v3069
        %v3089 = vsub.f32 %v2993, %v3069
        %v3090 = vsub.f32 %v2994, %v3070
        %v3091 = vsub.f32 %v2995, %v3070
        %v3092 = vsub.f32 %v2996, %v3071
        %v3093 = vsub.f32 %v2997, %v3071
        %v3094 = vsub.f32 %v2998, %v3072
        %v3095 = vsub.f32 %v2999, %v3072
        %v3096 = vsub.f32 %v3000, %v3073
        %v3097 = vsub.f32 %v3001, %v3073
        %v3098 = vsub.f32 %v3002, %v3074
        %v3099 = vsub.f32 %v3003, %v3074
        %v3100 = vsub.f32 %v3004, %v3075
        %v3101 = vsub.f32 %v3005, %v3075
        %v3102 = vsub.f32 %v3006, %v3076
        %v3103 = vsub.f32 %v3007, %v3076
        %v3104 = vsub.f32 %v3008, %v3077
        %v3105 = vsub.f32 %v3009, %v3077
        %v3106 = vsub.f32 %v3010, %v3078
        %v3107 = vsub.f32 %v3011, %v3078
        %v3108 = vsub.f32 %v3012, %v3079
        %v3109 = vsub.f32 %v3013, %v3079
        %v3110 = vsub.f32 %v3014, %v3080
        %v3111 = vsub.f32 %v3015, %v3080
        %v3112 = vsub.f32 %v3016, %v3081
        %v3113 = vsub.f32 %v3017, %v3081
        %v3114 = vmul.f32 %v3082, 1.442695
        %v3115 = vpow.pop %v3114
        %v3116 = vmul.f32 %v3083, 1.442695
        %v3117 = vpow.pop %v3116
        %v3118 = vmul.f32 %v3084, 1.442695
        %v3119 = vpow.pop %v3118
        %v3120 = vmul.f32 %v3085, 1.442695
        %v3121 = vpow.pop %v3120
        %v3122 = vmul.f32 %v3086, 1.442695
        %v3123 = vpow.pop %v3122
        %v3124 = vmul.f32 %v3087, 1.442695
        %v3125 = vpow.pop %v3124
        %v3126 = vmul.f32 %v3088, 1.442695
        %v3127 = vpow.pop %v3126
        %v3128 = vmul.f32 %v3089, 1.442695
        %v3129 = vpow.pop %v3128
        %v3130 = vmul.f32 %v3090, 1.442695
        %v3131 = vpow.pop %v3130
        %v3132 = vmul.f32 %v3091, 1.442695
        %v3133 = vpow.pop %v3132
        %v3134 = vmul.f32 %v3092, 1.442695
        %v3135 = vpow.pop %v3134
        %v3136 = vmul.f32 %v3093, 1.442695
        %v3137 = vpow.pop %v3136
        %v3138 = vmul.f32 %v3094, 1.442695
        %v3139 = vpow.pop %v3138
        %v3140 = vmul.f32 %v3095, 1.442695
        %v3141 = vpow.pop %v3140
        %v3142 = vmul.f32 %v3096, 1.442695
        %v3143 = vpow.pop %v3142
        %v3144 = vmul.f32 %v3097, 1.442695
        %v3145 = vpow.pop %v3144
        %v3146 = vmul.f32 %v3098, 1.442695
        %v3147 = vpow.pop %v3146
        %v3148 = vmul.f32 %v3099, 1.442695
        %v3149 = vpow.pop %v3148
        %v3150 = vmul.f32 %v3100, 1.442695
        %v3151 = vpow.pop %v3150
        %v3152 = vmul.f32 %v3101, 1.442695
        %v3153 = vpow.pop %v3152
        %v3154 = vmul.f32 %v3102, 1.442695
        %v3155 = vpow.pop %v3154
        %v3156 = vmul.f32 %v3103, 1.442695
        %v3157 = vpow.pop %v3156
        %v3158 = vmul.f32 %v3104, 1.442695
        %v3159 = vpow.pop %v3158
        %v3160 = vmul.f32 %v3105, 1.442695
        %v3161 = vpow.pop %v3160
        %v3162 = vmul.f32 %v3106, 1.442695
        %v3163 = vpow.pop %v3162
        %v3164 = vmul.f32 %v3107, 1.442695
        %v3165 = vpow.pop %v3164
        %v3166 = vmul.f32 %v3108, 1.442695
        %v3167 = vpow.pop %v3166
        %v3168 = vmul.f32 %v3109, 1.442695
        %v3169 = vpow.pop %v3168
        %v3170 = vmul.f32 %v3110, 1.442695
        %v3171 = vpow.pop %v3170
        %v3172 = vmul.f32 %v3111, 1.442695
        %v3173 = vpow.pop %v3172
        %v3174 = vmul.f32 %v3112, 1.442695
        %v3175 = vpow.pop %v3174
        %v3176 = vmul.f32 %v3113, 1.442695
        %v3177 = vpow.pop %v3176
        %v3178 = vadd.f32 %v3115, %v3117
        %3179 = vadd.xlane.f32.xlu0 %v3178
        %v3180 = vpop.xlane.xlu0 %3179
        %v3181 = vadd.f32 %v3119, %v3121
        %3182 = vadd.xlane.f32.xlu0 %v3181
        %v3183 = vpop.xlane.xlu0 %3182
        %v3184 = vadd.f32 %v3123, %v3125
        %3185 = vadd.xlane.f32.xlu0 %v3184
        %v3186 = vpop.xlane.xlu0 %3185
        %v3187 = vadd.f32 %v3127, %v3129
        %3188 = vadd.xlane.f32.xlu0 %v3187
        %v3189 = vpop.xlane.xlu0 %3188
        %v3190 = vadd.f32 %v3131, %v3133
        %3191 = vadd.xlane.f32.xlu0 %v3190
        %v3192 = vpop.xlane.xlu0 %3191
        %v3193 = vadd.f32 %v3135, %v3137
        %3194 = vadd.xlane.f32.xlu0 %v3193
        %v3195 = vpop.xlane.xlu0 %3194
        %v3196 = vadd.f32 %v3139, %v3141
        %3197 = vadd.xlane.f32.xlu0 %v3196
        %v3198 = vpop.xlane.xlu0 %3197
        %v3199 = vadd.f32 %v3143, %v3145
        %3200 = vadd.xlane.f32.xlu0 %v3199
        %v3201 = vpop.xlane.xlu0 %3200
        %v3202 = vadd.f32 %v3147, %v3149
        %3203 = vadd.xlane.f32.xlu0 %v3202
        %v3204 = vpop.xlane.xlu0 %3203
        %v3205 = vadd.f32 %v3151, %v3153
        %3206 = vadd.xlane.f32.xlu0 %v3205
        %v3207 = vpop.xlane.xlu0 %3206
        %v3208 = vadd.f32 %v3155, %v3157
        %3209 = vadd.xlane.f32.xlu0 %v3208
        %v3210 = vpop.xlane.xlu0 %3209
        %v3211 = vadd.f32 %v3159, %v3161
        %3212 = vadd.xlane.f32.xlu0 %v3211
        %v3213 = vpop.xlane.xlu0 %3212
        %v3214 = vadd.f32 %v3163, %v3165
        %3215 = vadd.xlane.f32.xlu0 %v3214
        %v3216 = vpop.xlane.xlu0 %3215
        %v3217 = vadd.f32 %v3167, %v3169
        %3218 = vadd.xlane.f32.xlu0 %v3217
        %v3219 = vpop.xlane.xlu0 %3218
        %v3220 = vadd.f32 %v3171, %v3173
        %3221 = vadd.xlane.f32.xlu0 %v3220
        %v3222 = vpop.xlane.xlu0 %3221
        %v3223 = vadd.f32 %v3175, %v3177
        %3224 = vadd.xlane.f32.xlu0 %v3223
        %v3225 = vpop.xlane.xlu0 %3224
        %v3226 = vmax.f32 %v3180, 1e-12
        %v3227 = vmax.f32 %v3183, 1e-12
        %v3228 = vmax.f32 %v3186, 1e-12
        %v3229 = vmax.f32 %v3189, 1e-12
        %v3230 = vmax.f32 %v3192, 1e-12
        %v3231 = vmax.f32 %v3195, 1e-12
        %v3232 = vmax.f32 %v3198, 1e-12
        %v3233 = vmax.f32 %v3201, 1e-12
        %v3234 = vmax.f32 %v3204, 1e-12
        %v3235 = vmax.f32 %v3207, 1e-12
        %v3236 = vmax.f32 %v3210, 1e-12
        %v3237 = vmax.f32 %v3213, 1e-12
        %v3238 = vmax.f32 %v3216, 1e-12
        %v3239 = vmax.f32 %v3219, 1e-12
        %v3240 = vmax.f32 %v3222, 1e-12
        %v3241 = vmax.f32 %v3225, 1e-12
        %v3242 = vrcp.pop %v3226
        %v3243 = vrcp.pop %v3227
        %v3244 = vrcp.pop %v3228
        %v3245 = vrcp.pop %v3229
        %v3246 = vrcp.pop %v3230
        %v3247 = vrcp.pop %v3231
        %v3248 = vrcp.pop %v3232
        %v3249 = vrcp.pop %v3233
        %v3250 = vrcp.pop %v3234
        %v3251 = vrcp.pop %v3235
        %v3252 = vrcp.pop %v3236
        %v3253 = vrcp.pop %v3237
        %v3254 = vrcp.pop %v3238
        %v3255 = vrcp.pop %v3239
        %v3256 = vrcp.pop %v3240
        %v3257 = vrcp.pop %v3241
        %v3258 = vmul.f32 %v3226, %v3242
        %v3259 = vmul.f32 %v3227, %v3243
        %v3260 = vmul.f32 %v3228, %v3244
        %v3261 = vmul.f32 %v3229, %v3245
        %v3262 = vmul.f32 %v3230, %v3246
        %v3263 = vmul.f32 %v3231, %v3247
        %v3264 = vmul.f32 %v3232, %v3248
        %v3265 = vmul.f32 %v3233, %v3249
        %v3266 = vmul.f32 %v3234, %v3250
        %v3267 = vmul.f32 %v3235, %v3251
        %v3268 = vmul.f32 %v3236, %v3252
        %v3269 = vmul.f32 %v3237, %v3253
        %v3270 = vmul.f32 %v3238, %v3254
        %v3271 = vmul.f32 %v3239, %v3255
        %v3272 = vmul.f32 %v3240, %v3256
        %v3273 = vmul.f32 %v3241, %v3257
        %v3274 = vsub.f32 2.0, %v3258
        %v3275 = vsub.f32 2.0, %v3259
        %v3276 = vsub.f32 2.0, %v3260
        %v3277 = vsub.f32 2.0, %v3261
        %v3278 = vsub.f32 2.0, %v3262
        %v3279 = vsub.f32 2.0, %v3263
        %v3280 = vsub.f32 2.0, %v3264
        %v3281 = vsub.f32 2.0, %v3265
        %v3282 = vsub.f32 2.0, %v3266
        %v3283 = vsub.f32 2.0, %v3267
        %v3284 = vsub.f32 2.0, %v3268
        %v3285 = vsub.f32 2.0, %v3269
        %v3286 = vsub.f32 2.0, %v3270
        %v3287 = vsub.f32 2.0, %v3271
        %v3288 = vsub.f32 2.0, %v3272
        %v3289 = vsub.f32 2.0, %v3273
        %v3290 = vmul.f32 %v3242, %v3274
        %v3291 = vmul.f32 %v3243, %v3275
        %v3292 = vmul.f32 %v3244, %v3276
        %v3293 = vmul.f32 %v3245, %v3277
        %v3294 = vmul.f32 %v3246, %v3278
        %v3295 = vmul.f32 %v3247, %v3279
        %v3296 = vmul.f32 %v3248, %v3280
        %v3297 = vmul.f32 %v3249, %v3281
        %v3298 = vmul.f32 %v3250, %v3282
        %v3299 = vmul.f32 %v3251, %v3283
        %v3300 = vmul.f32 %v3252, %v3284
        %v3301 = vmul.f32 %v3253, %v3285
        %v3302 = vmul.f32 %v3254, %v3286
        %v3303 = vmul.f32 %v3255, %v3287
        %v3304 = vmul.f32 %v3256, %v3288
        %v3305 = vmul.f32 %v3257, %v3289
        %v3306 = vpack.c.bf16 %v3119, %v3115
        %v3307 = vpack.c.bf16 %v3121, %v3117
        %v3308 = vpack.c.bf16 %v3127, %v3123
        %v3309 = vpack.c.bf16 %v3129, %v3125
        %v3310 = vpack.c.bf16 %v3135, %v3131
        %v3311 = vpack.c.bf16 %v3137, %v3133
        %v3312 = vpack.c.bf16 %v3143, %v3139
        %v3313 = vpack.c.bf16 %v3145, %v3141
        %v3314 = vpack.c.bf16 %v3151, %v3147
        %v3315 = vpack.c.bf16 %v3153, %v3149
        %v3316 = vpack.c.bf16 %v3159, %v3155
        %v3317 = vpack.c.bf16 %v3161, %v3157
        %v3318 = vpack.c.bf16 %v3167, %v3163
        %v3319 = vpack.c.bf16 %v3169, %v3165
        %v3320 = vpack.c.bf16 %v3175, %v3171
        %v3321 = vpack.c.bf16 %v3177, %v3173
        %3322 = vrot.lane.b32.xlu0 %v993, 32
        %v3323 = vpop.permute.xlu0 %3322
        %3324 = vrot.lane.b32.xlu0 %v994, 32
        %v3325 = vpop.permute.xlu0 %3324
        %3326 = vrot.lane.b32.xlu0 %v995, 32
        %v3327 = vpop.permute.xlu0 %3326
        %3328 = vrot.lane.b32.xlu0 %v996, 32
        %v3329 = vpop.permute.xlu0 %3328
        %3330 = vrot.lane.b32.xlu0 %v997, 32
        %v3331 = vpop.permute.xlu0 %3330
        %3332 = vrot.lane.b32.xlu0 %v998, 32
        %v3333 = vpop.permute.xlu0 %3332
        %3334 = vrot.lane.b32.xlu0 %v999, 32
        %v3335 = vpop.permute.xlu0 %3334
        %3336 = vrot.lane.b32.xlu0 %v1000, 32
        %v3337 = vpop.permute.xlu0 %3336
        %3338 = vrot.lane.b32.xlu0 %v1001, 32
        %v3339 = vpop.permute.xlu0 %3338
        %3340 = vrot.lane.b32.xlu0 %v1002, 32
        %v3341 = vpop.permute.xlu0 %3340
        %3342 = vrot.lane.b32.xlu0 %v1003, 32
        %v3343 = vpop.permute.xlu0 %3342
        %3344 = vrot.lane.b32.xlu0 %v1004, 32
        %v3345 = vpop.permute.xlu0 %3344
        %3346 = vrot.lane.b32.xlu0 %v1005, 32
        %v3347 = vpop.permute.xlu0 %3346
        %3348 = vrot.lane.b32.xlu0 %v1006, 32
        %v3349 = vpop.permute.xlu0 %3348
        %3350 = vrot.lane.b32.xlu0 %v1007, 32
        %v3351 = vpop.permute.xlu0 %3350
        %3352 = vrot.lane.b32.xlu0 %v1008, 32
        %v3353 = vpop.permute.xlu0 %3352
        %3370 = vmatprep.subr.bf16.mxu0 0
        %3371 = vmatpush1.bf16.msra.mxu0 %v3337
        %3372 = vmatprep.subr.bf16.mxu0 0
        %3373 = vmatpush1.bf16.msra.mxu0 %v3335
        %3374 = vmatprep.subr.bf16.mxu0 0
        %3375 = vmatpush1.bf16.msra.mxu0 %v3333
        %3376 = vmatprep.subr.bf16.mxu0 0
        %3377 = vmatpush1.bf16.msra.mxu0 %v3331
        %3378 = vmatprep.subr.bf16.mxu0 0
        %3379 = vmatpush1.bf16.msra.mxu0 %v3329
        %3380 = vmatprep.subr.bf16.mxu0 0
        %3381 = vmatpush1.bf16.msra.mxu0 %v3327
        %3382 = vmatprep.subr.bf16.mxu0 0
        %3383 = vmatpush1.bf16.msra.mxu0 %v3325
        %3384 = vmatprep.subr.bf16.mxu0 0
        %3385 = vmatpush1.bf16.msra.mxu0 %v3323
        %3386 = vmatprep.subr.bf16.mxu0 0
        %3387 = vmatpush2.bf16.msra.mxu0 %v3353
        %3388 = vmatprep.subr.bf16.mxu0 0
        %3389 = vmatpush2.bf16.msra.mxu0 %v3351
        %3390 = vmatprep.subr.bf16.mxu0 0
        %3391 = vmatpush2.bf16.msra.mxu0 %v3349
        %3392 = vmatprep.subr.bf16.mxu0 0
        %3393 = vmatpush2.bf16.msra.mxu0 %v3347
        %3394 = vmatprep.subr.bf16.mxu0 0
        %3395 = vmatpush2.bf16.msra.mxu0 %v3345
        %3396 = vmatprep.subr.bf16.mxu0 0
        %3397 = vmatpush2.bf16.msra.mxu0 %v3343
        %3398 = vmatprep.subr.bf16.mxu0 0
        %3399 = vmatpush2.bf16.msra.mxu0 %v3341
        %3400 = vmatprep.subr.bf16.mxu0 0
        %3401 = vmatpush2.bf16.msra.mxu0 %v3339
        %3402 = vmatprep.mubr.bf16.mxu0 %v3307
        %3403 = vmatmul.mubr.bf16.gmra.mxu0 %v3306
        %v3404 = vpop.f32.mrf.mxu0
        %v3405 = vadd.f32 0.0, %v3404
        %v3406 = vpop.f32.mrf.mxu0
        %v3407 = vpop.f32.mrf.mxu0
        %v3408 = vadd.f32 0.0, %v3407
        %v3409 = vpop.f32.mrf.mxu0
        %3410 = vmatprep.mubr.bf16.mxu0 %v3309
        %3411 = vmatmul.mubr.bf16.gmra.mxu0 %v3308
        %v3412 = vpop.f32.mrf.mxu0
        %v3413 = vadd.f32 0.0, %v3412
        %v3414 = vpop.f32.mrf.mxu0
        %v3415 = vpop.f32.mrf.mxu0
        %v3416 = vadd.f32 0.0, %v3415
        %v3417 = vpop.f32.mrf.mxu0
        %3418 = vmatprep.mubr.bf16.mxu0 %v3311
        %3419 = vmatmul.mubr.bf16.gmra.mxu0 %v3310
        %v3420 = vpop.f32.mrf.mxu0
        %v3421 = vadd.f32 0.0, %v3420
        %v3422 = vpop.f32.mrf.mxu0
        %v3423 = vpop.f32.mrf.mxu0
        %v3424 = vadd.f32 0.0, %v3423
        %v3425 = vpop.f32.mrf.mxu0
        %3426 = vmatprep.mubr.bf16.mxu0 %v3313
        %3427 = vmatmul.mubr.bf16.gmra.mxu0 %v3312
        %v3428 = vpop.f32.mrf.mxu0
        %v3429 = vadd.f32 0.0, %v3428
        %v3430 = vpop.f32.mrf.mxu0
        %v3431 = vpop.f32.mrf.mxu0
        %v3432 = vadd.f32 0.0, %v3431
        %v3433 = vpop.f32.mrf.mxu0
        %3434 = vmatprep.mubr.bf16.mxu0 %v3315
        %3435 = vmatmul.mubr.bf16.gmra.mxu0 %v3314
        %v3436 = vpop.f32.mrf.mxu0
        %v3437 = vadd.f32 0.0, %v3436
        %v3438 = vpop.f32.mrf.mxu0
        %v3439 = vpop.f32.mrf.mxu0
        %v3440 = vadd.f32 0.0, %v3439
        %v3441 = vpop.f32.mrf.mxu0
        %3442 = vmatprep.mubr.bf16.mxu0 %v3317
        %3443 = vmatmul.mubr.bf16.gmra.mxu0 %v3316
        %v3444 = vpop.f32.mrf.mxu0
        %v3445 = vadd.f32 0.0, %v3444
        %v3446 = vpop.f32.mrf.mxu0
        %v3447 = vpop.f32.mrf.mxu0
        %v3448 = vadd.f32 0.0, %v3447
        %v3449 = vpop.f32.mrf.mxu0
        %3450 = vmatprep.mubr.bf16.mxu0 %v3319
        %3451 = vmatmul.mubr.bf16.gmra.mxu0 %v3318
        %v3452 = vpop.f32.mrf.mxu0
        %v3453 = vadd.f32 0.0, %v3452
        %v3454 = vpop.f32.mrf.mxu0
        %v3455 = vpop.f32.mrf.mxu0
        %v3456 = vadd.f32 0.0, %v3455
        %v3457 = vpop.f32.mrf.mxu0
        %3458 = vmatprep.mubr.bf16.mxu0 %v3321
        %3459 = vmatmul.mubr.bf16.gmra.mxu0 %v3320
        %v3460 = vpop.f32.mrf.mxu0
        %v3461 = vadd.f32 0.0, %v3460
        %v3462 = vpop.f32.mrf.mxu0
        %v3463 = vpop.f32.mrf.mxu0
        %v3464 = vadd.f32 0.0, %v3463
        %v3465 = vpop.f32.mrf.mxu0
        %3466 = vdwg.mxu0
        %v3467 = vmul.f32 %v3405, %v3290
        %v3468 = vmul.f32 %v3408, %v3291
        %v3469 = vmul.f32 %v3413, %v3292
        %v3470 = vmul.f32 %v3416, %v3293
        %v3471 = vmul.f32 %v3421, %v3294
        %v3472 = vmul.f32 %v3424, %v3295
        %v3473 = vmul.f32 %v3429, %v3296
        %v3474 = vmul.f32 %v3432, %v3297
        %v3475 = vmul.f32 %v3437, %v3298
        %v3476 = vmul.f32 %v3440, %v3299
        %v3477 = vmul.f32 %v3445, %v3300
        %v3478 = vmul.f32 %v3448, %v3301
        %v3479 = vmul.f32 %v3453, %v3302
        %v3480 = vmul.f32 %v3456, %v3303
        %v3481 = vmul.f32 %v3461, %v3304
        %v3482 = vmul.f32 %v3464, %v3305
        %3483 = vrot.lane.b32.xlu0 %v1142, 32
        %v3484 = vpop.permute.xlu0 %3483
        %v3486 = vadd.f32 %v3467, %v3484
        %v3487 = vadd.f32 %v3468, %v3484
        %v3488 = vadd.f32 %v3469, %v3484
        %v3489 = vadd.f32 %v3470, %v3484
        %v3490 = vadd.f32 %v3471, %v3484
        %v3491 = vadd.f32 %v3472, %v3484
        %v3492 = vadd.f32 %v3473, %v3484
        %v3493 = vadd.f32 %v3474, %v3484
        %v3494 = vadd.f32 %v3475, %v3484
        %v3495 = vadd.f32 %v3476, %v3484
        %v3496 = vadd.f32 %v3477, %v3484
        %v3497 = vadd.f32 %v3478, %v3484
        %v3498 = vadd.f32 %v3479, %v3484
        %v3499 = vadd.f32 %v3480, %v3484
        %v3500 = vadd.f32 %v3481, %v3484
        %v3501 = vadd.f32 %v3482, %v3484
        %3518 = vrot.lane.b32.xlu0 %v3486, 96
        %v3519 = vpop.permute.xlu0 %3518
        %3520 = vrot.lane.b32.xlu0 %v3487, 96
        %v3521 = vpop.permute.xlu0 %3520
        %3522 = vrot.lane.b32.xlu0 %v3488, 96
        %v3523 = vpop.permute.xlu0 %3522
        %3524 = vrot.lane.b32.xlu0 %v3489, 96
        %v3525 = vpop.permute.xlu0 %3524
        %3526 = vrot.lane.b32.xlu0 %v3490, 96
        %v3527 = vpop.permute.xlu0 %3526
        %3528 = vrot.lane.b32.xlu0 %v3491, 96
        %v3529 = vpop.permute.xlu0 %3528
        %3530 = vrot.lane.b32.xlu0 %v3492, 96
        %v3531 = vpop.permute.xlu0 %3530
        %3532 = vrot.lane.b32.xlu0 %v3493, 96
        %v3533 = vpop.permute.xlu0 %3532
        %3534 = vrot.lane.b32.xlu0 %v3494, 96
        %v3535 = vpop.permute.xlu0 %3534
        %3536 = vrot.lane.b32.xlu0 %v3495, 96
        %v3537 = vpop.permute.xlu0 %3536
        %3538 = vrot.lane.b32.xlu0 %v3496, 96
        %v3539 = vpop.permute.xlu0 %3538
        %3540 = vrot.lane.b32.xlu0 %v3497, 96
        %v3541 = vpop.permute.xlu0 %3540
        %3542 = vrot.lane.b32.xlu0 %v3498, 96
        %v3543 = vpop.permute.xlu0 %3542
        %3544 = vrot.lane.b32.xlu0 %v3499, 96
        %v3545 = vpop.permute.xlu0 %3544
        %3546 = vrot.lane.b32.xlu0 %v3500, 96
        %v3547 = vpop.permute.xlu0 %3546
        %3548 = vrot.lane.b32.xlu0 %v3501, 96
        %v3549 = vpop.permute.xlu0 %3548
        %vm3566 = vcmask 1048320
        %3567 = vst.msk [vmem:[%s236] sm:$0xff] %vm3566, %v3519
        %3568 = vst.msk [vmem:[%s236 + $0x8] sm:$0xff] %vm3566, %v3521
        %3569 = vst.msk [vmem:[%s236 + $0x10] sm:$0xff] %vm3566, %v3523
        %3570 = vst.msk [vmem:[%s236 + $0x18] sm:$0xff] %vm3566, %v3525
        %3571 = vst.msk [vmem:[%s236 + $0x20] sm:$0xff] %vm3566, %v3527
        %3572 = vst.msk [vmem:[%s236 + $0x28] sm:$0xff] %vm3566, %v3529
        %3573 = vst.msk [vmem:[%s236 + $0x30] sm:$0xff] %vm3566, %v3531
        %3574 = vst.msk [vmem:[%s236 + $0x38] sm:$0xff] %vm3566, %v3533
        %3575 = vst.msk [vmem:[%s236 + $0x40] sm:$0xff] %vm3566, %v3535
        %3576 = vst.msk [vmem:[%s236 + $0x48] sm:$0xff] %vm3566, %v3537
        %3577 = vst.msk [vmem:[%s236 + $0x50] sm:$0xff] %vm3566, %v3539
        %3578 = vst.msk [vmem:[%s236 + $0x58] sm:$0xff] %vm3566, %v3541
        %3579 = vst.msk [vmem:[%s236 + $0x60] sm:$0xff] %vm3566, %v3543
        %3580 = vst.msk [vmem:[%s236 + $0x68] sm:$0xff] %vm3566, %v3545
        %3581 = vst.msk [vmem:[%s236 + $0x70] sm:$0xff] %vm3566, %v3547
        %3582 = vst.msk [vmem:[%s236 + $0x78] sm:$0xff] %vm3566, %v3549
        %s3583 = sand.u32 %s142, 1
        %s3584 = scalar_lea.sflag [#allocation3], %s3583
        %s3585 = sand.u32 %s142, 1
        %s3586 = smul.addr %s3585, 128
        %s3587 = scalar_lea.vmem [#allocation2], %s3586
        // Predicated region
        $region41: #{tpu_custom_call.1} parent=39 // pred_check
          %p3588 = pneg %p152
        $region42: #{tpu_custom_call.1} parent=39 // pred_check_branch
          %3590 = sbr.rel (%p3588) target = $region44
        $region43: #{tpu_custom_call.1} parent=39 // pred_region
          %s3591 = smul.u32 16, %s19
          %s3593 = ssub.s32 2048, 2048
          %3594 = vsyncadd %s3584, %s3593
          %s3595 = smul.addr %s3591, 128
          %s3596 = scalar_lea.hbm %s5, %s3595
          %s3597 = sshll.u32 %s3587, 4
          %s3598 = int_to_ptr.vmem [resolvable:$true] %s3597
          %3603 = dma.vmem_to_hbm [thread:$0]  %s3598, 2048, %s3596, %s3584, 128, 128, 8
        $region44: #{tpu_custom_call.1} parent=39 // pred_fallthru
          _
      $region40: #{tpu_custom_call.1} parent=5 // pred_fallthru
        _
      %p3604 = scmp.le.s32.totalorder 2, %s14
      // Predicated region
      $region45: #{tpu_custom_call.1} parent=5 // pred_check
        %p3605 = pneg %p3604
      $region46: #{tpu_custom_call.1} parent=5 // pred_check_branch
        %3607 = sbr.rel (%p3605) target = $region48
      $region47: #{tpu_custom_call.1} parent=5 // pred_region
        %s3608 = ssub.s32 %s14, 2
        // Predicated region
        $region49: #{tpu_custom_call.1} parent=47 // pred_check
          %p3609 = pneg %p158
        $region50: #{tpu_custom_call.1} parent=47 // pred_check_branch
          %3611 = sbr.rel (%p3609) target = $region52
        $region51: #{tpu_custom_call.1} parent=47 // pred_region
          %s3612 = sand.u32 %s143, 1
          %s3613 = scalar_lea.sflag [#allocation3], %s3612
          %s3614 = sand.u32 %s143, 1
          %s3615 = smul.addr %s3614, 128
          %s3616 = scalar_lea.vmem [#allocation2], %s3615
          %3617 = dma.done %s3613, 2048
        $region52: #{tpu_custom_call.1} parent=47 // pred_fallthru
          _
      $region48: #{tpu_custom_call.1} parent=5 // pred_fallthru
        _
    $region6: #{tpu_custom_call.1} parent=1 // loop_footer
      %s18 = sadd.s32 1, %s14
    $region7: #{tpu_custom_call.1} parent=1 // loop_footer_branch
      %13 = sbr.rel target = $region3
    $region8: #{tpu_custom_call.1} parent=1 // loop_exit
      _
    %3618 = vsyncpa [#allocation3], 1
    %s3619 = scalar_lea.sflag [#allocation3], 1
    %3620 = vsyncpa %s3619, 1

</llo_original>
